<compile_context>
chip_gen: v7x
topology: tpu7x:2x2x1
jax: 0.10.0
libtpu: 0.0.40
codegen_flags: <defaults>
</compile_context>

<pallas_src>
import functools
import math

import jax
import jax.numpy as jnp
from jax.experimental import pallas as pl
from jax.experimental.pallas import tpu as pltpu


_TM = 256                               # row tile for every kernel
_VMEM_LIMIT = 32 * 1024 * 1024          # safe scoped-VMEM cap on v5e/v6e/v7x
_LRN_SIZE, _LRN_ALPHA, _LRN_BETA, _LRN_K = 5, 1e-4, 0.75, 1.0
_HALF = _LRN_SIZE // 2


def _round_up(x, m):
    return ((x + m - 1) // m) * m


def _pair(v):
    return (v, v) if isinstance(v, int) else tuple(v)


# ----------------------------------------------------------------------------
# Pallas kernels
# ----------------------------------------------------------------------------
def _conv_lrn_kernel(*refs, offsets, use_halo):
    """Fused im2col-free conv block.

    Accumulates the kh*kw shifted-tap matmuls (bf16 -> f32 on the MXU), then
    applies bias + LocalResponseNorm(size=5, PyTorch defaults) + ReLU.  The
    weights/bias carry 2 zero columns on each side of the channel axis so the
    LRN channel window gets its zero boundary for free inside the tile.
    """
    if use_halo:
        x0_ref, x1_ref, w_ref, b_ref, o_ref = refs
        x = jnp.concatenate([x0_ref[...], x1_ref[...]], axis=0)
    else:
        x0_ref, w_ref, b_ref, o_ref = refs
        x = x0_ref[...]
    tm, c = o_ref.shape                       # acc carries c + 4 channels
    acc = None
    for t, d in enumerate(offsets):
        a = x[d:d + tm, :]
        part = jnp.dot(a, w_ref[t], preferred_element_type=jnp.float32)
        acc = part if acc is None else acc + part
    acc = acc + b_ref[...]                    # (tm, c + 4), zero edge columns

    # LRN window sum over channels (zero-padded boundary) + ReLU epilogue.
    sq = acc * acc
    s = sq[:, 0:c]
    for t in range(1, _LRN_SIZE):
        s = s + sq[:, t:t + c]
    div = jnp.exp(_LRN_BETA * jnp.log(s * (_LRN_ALPHA / _LRN_SIZE) + _LRN_K))
    center = acc[:, _HALF:_HALF + c]
    o_ref[...] = jnp.maximum(center * pl.reciprocal(div, approx=True),
                             0.0).astype(o_ref.dtype)


def _pool_kernel(x0_ref, x1_ref, o_ref, *, offsets, op, inv_count):
    """Shifted-tap window reduction (stride-1 map); max or mean."""
    x = jnp.concatenate([x0_ref[...], x1_ref[...]], axis=0)
    tm = o_ref.shape[0]
    r = None
    if op == "avg":
        for d in offsets:
            v = x[d:d + tm, :].astype(jnp.float32)
            r = v if r is None else r + v
        o_ref[...] = (r * inv_count).astype(o_ref.dtype)
    else:
        for d in offsets:
            v = x[d:d + tm, :]
            r = v if r is None else jnp.maximum(r, v)
        o_ref[...] = r.astype(o_ref.dtype)


def _mm_kernel(a_ref, w_ref, b_ref, o_ref, *, relu):
    acc = jnp.dot(a_ref[...], w_ref[...], preferred_element_type=jnp.float32)
    acc = acc + b_ref[...]
    if relu:
        acc = jnp.maximum(acc, 0.0)
    o_ref[...] = acc.astype(o_ref.dtype)


def _softmax_kernel(x_ref, o_ref):
    x = x_ref[...]
    m = jnp.max(x, axis=-1, keepdims=True)
    e = jnp.exp(x - m)
    o_ref[...] = e / jnp.sum(e, axis=-1, keepdims=True)


# ----------------------------------------------------------------------------
# Wrappers (pallas_call setup)
# ----------------------------------------------------------------------------
@functools.partial(jax.jit, static_argnames=("stride", "padding"))
def conv2d_lrn(x, w, b, *, stride, padding):
    """ConvBlock forward: conv + LRN(5) + ReLU, fused in one Pallas kernel.

    x: (B, H, W, Cin) any float dtype, w: (kh, kw, Cin, Cout) f32, b: (Cout,).
    Any stride is supported by computing the stride-1 map and subsampling.
    """
    B, H, W, cin = x.shape
    kh, kw, _, cout = w.shape
    sh, sw = stride
    ph, pw = padding
    Hp, Wp = H + 2 * ph, W + 2 * pw
    Hs, Ws = Hp - kh + 1, Wp - kw + 1
    offsets = tuple(i * Wp + j for i in range(kh) for j in range(kw))
    assert offsets[-1] <= _TM, "tap offset exceeds row tile"
    use_halo = offsets[-1] > 0
    cin_p = _round_up(cin, 8)

    xb = x.astype(jnp.bfloat16)
    if ph or pw:
        xb = jnp.pad(xb, ((0, 0), (ph, ph), (pw, pw), (0, 0)))
    if cin_p != cin:
        xb = jnp.pad(xb, ((0, 0), (0, 0), (0, 0), (0, cin_p - cin)))
    M = B * Hp * Wp
    Mp = _round_up(M, _TM)
    tail = Mp - M + (_TM if use_halo else 0)
    xf = jnp.pad(xb.reshape(M, cin_p), ((0, tail), (0, 0)))

    # weights: (taps, cin_p, cout + 4); zero edge columns feed the LRN window.
    wf = w.astype(jnp.bfloat16).reshape(kh * kw, cin, cout)
    wf = jnp.pad(wf, ((0, 0), (0, cin_p - cin), (_HALF, _HALF)))
    bf = jnp.pad(b.astype(jnp.float32).reshape(1, cout),
                 ((0, 0), (_HALF, _HALF)))

    in_specs = [pl.BlockSpec((_TM, cin_p), lambda m: (m, 0))]
    args = [xf]
    if use_halo:
        in_specs.append(pl.BlockSpec((_TM, cin_p), lambda m: (m + 1, 0)))
        args.append(xf)
    in_specs += [
        pl.BlockSpec((kh * kw, cin_p, cout + 2 * _HALF), lambda m: (0, 0, 0)),
        pl.BlockSpec((1, cout + 2 * _HALF), lambda m: (0, 0)),
    ]
    args += [wf, bf]

    out = pl.pallas_call(
        functools.partial(_conv_lrn_kernel, offsets=offsets,
                          use_halo=use_halo),
        out_shape=jax.ShapeDtypeStruct((Mp, cout), jnp.bfloat16),
        grid=(Mp // _TM,),
        in_specs=in_specs,
        out_specs=pl.BlockSpec((_TM, cout), lambda m: (m, 0)),
        compiler_params=pltpu.CompilerParams(
            dimension_semantics=("parallel",),
            vmem_limit_bytes=_VMEM_LIMIT),
    )(*args)
    # valid stride-1 region + stride subsampling, one fused XLA slice.
    return out[:M].reshape(B, Hp, Wp, cout)[:, 0:Hs:sh, 0:Ws:sw, :]


@functools.partial(jax.jit, static_argnames=("k", "stride", "padding", "op"))
def pool2d(x, *, k, stride, padding, op):
    """Max/avg pooling via the same shifted-tap Pallas reduction."""
    B, H, W, C = x.shape
    pad_val = 0.0 if op == "avg" else -1e30   # PyTorch: avg pads 0, max -inf
    Hp, Wp = H + 2 * padding, W + 2 * padding
    Hs, Ws = Hp - k + 1, Wp - k + 1
    offsets = tuple(i * Wp + j for i in range(k) for j in range(k))
    assert offsets[-1] <= _TM
    xp = x
    if padding:
        xp = jnp.pad(xp, ((0, 0), (padding, padding), (padding, padding),
                          (0, 0)), constant_values=pad_val)
    M = B * Hp * Wp
    Mp = _round_up(M, _TM)
    xf = jnp.pad(xp.reshape(M, C), ((0, Mp - M + _TM), (0, 0)))
    out = pl.pallas_call(
        functools.partial(_pool_kernel, offsets=offsets, op=op,
                          inv_count=1.0 / (k * k)),
        out_shape=jax.ShapeDtypeStruct((Mp, C), x.dtype),
        grid=(Mp // _TM,),
        in_specs=[pl.BlockSpec((_TM, C), lambda m: (m, 0)),
                  pl.BlockSpec((_TM, C), lambda m: (m + 1, 0))],
        out_specs=pl.BlockSpec((_TM, C), lambda m: (m, 0)),
        compiler_params=pltpu.CompilerParams(
            dimension_semantics=("parallel",),
            vmem_limit_bytes=_VMEM_LIMIT),
    )(xf, xf)
    return out[:M].reshape(B, Hp, Wp, C)[:, 0:Hs:stride, 0:Ws:stride, :]


@functools.partial(jax.jit, static_argnames=("relu",))
def matmul_bias(a, w, b, relu=False):
    """(M,K) @ (K,N) + bias[N] on the MXU (bf16 operands, f32 accumulate)."""
    M, K = a.shape
    _, N = w.shape
    Kp = _round_up(K, 128)
    Mp = _round_up(M, _TM)
    a_p = jnp.pad(a.astype(jnp.bfloat16), ((0, Mp - M), (0, Kp - K)))
    w_p = jnp.pad(w.astype(jnp.bfloat16), ((0, Kp - K), (0, 0)))
    b_p = b.astype(jnp.float32).reshape(1, N)
    out = pl.pallas_call(
        functools.partial(_mm_kernel, relu=relu),
        out_shape=jax.ShapeDtypeStruct((Mp, N), jnp.float32),
        grid=(Mp // _TM,),
        in_specs=[pl.BlockSpec((_TM, Kp), lambda m: (m, 0)),
                  pl.BlockSpec((Kp, N), lambda m: (0, 0)),
                  pl.BlockSpec((1, N), lambda m: (0, 0))],
        out_specs=pl.BlockSpec((_TM, N), lambda m: (m, 0)),
        compiler_params=pltpu.CompilerParams(
            dimension_semantics=("parallel",),
            vmem_limit_bytes=_VMEM_LIMIT),
    )(a_p, w_p, b_p)
    return out[:M]


@jax.jit
def softmax_last(x2d):
    M, N = x2d.shape
    Mp = _round_up(M, _TM)
    xp = jnp.pad(x2d.astype(jnp.float32), ((0, Mp - M), (0, 0)))
    out = pl.pallas_call(
        _softmax_kernel,
        out_shape=jax.ShapeDtypeStruct((Mp, N), jnp.float32),
        grid=(Mp // _TM,),
        in_specs=[pl.BlockSpec((_TM, N), lambda i: (i, 0))],
        out_specs=pl.BlockSpec((_TM, N), lambda i: (i, 0)),
        compiler_params=pltpu.CompilerParams(
            dimension_semantics=("parallel",),
            vmem_limit_bytes=_VMEM_LIMIT),
    )(xp)
    return out[:M]


# ----------------------------------------------------------------------------
# Deterministic parameter generation
# ----------------------------------------------------------------------------
class ParamGen:
    def __init__(self, seed):
        self._key = jax.random.PRNGKey(seed)

    def _next(self):
        self._key, k = jax.random.split(self._key)
        return k

    def conv(self, kh, kw, cin, cout):
        fan_in = kh * kw * cin
        w = jax.random.normal(self._next(), (kh, kw, cin, cout),
                              jnp.float32) * math.sqrt(2.0 / fan_in)
        b = jnp.zeros((cout,), jnp.float32)
        return w, b

    def linear(self, cin, cout):
        w = jax.random.normal(self._next(), (cin, cout),
                              jnp.float32) * math.sqrt(1.0 / cin)
        b = jnp.zeros((cout,), jnp.float32)
        return w, b


# ----------------------------------------------------------------------------
# Network building blocks
# ----------------------------------------------------------------------------
def conv_block(gen, x, cout, ksize, stride=1, padding=0):
    # ConvBlock: Conv2d(bias) -> 'local' norm -> ReLU.
    # TODO(synk): exact ConvBlock source unavailable; LocalResponseNorm(size=5)
    # assumed for type_norm='local'.
    kh, kw = _pair(ksize)
    sh, sw = _pair(stride)
    ph, pw = _pair(padding)
    cin = x.shape[-1]
    w, b = gen.conv(kh, kw, cin, cout)
    return conv2d_lrn(x, w, b, stride=(sh, sw), padding=(ph, pw))


def max_pool(x, k, stride, padding):
    return pool2d(x, k=k, stride=stride, padding=padding, op="max")


def avg_pool(x, k, stride, padding):
    # PyTorch AvgPool2d default count_include_pad=True: zero pad, divide k*k.
    return pool2d(x, k=k, stride=stride, padding=padding, op="avg")


def global_avg_pool(x):
    # nn.AdaptiveAvgPool2d((1, 1)): tiny tensor, plain jnp.mean is the right tool.
    return jnp.mean(x.astype(jnp.float32), axis=(1, 2), keepdims=True)


def inception_a(gen, x, chs):
    c1, c5r, c5, c3r, c3a, c3b, cp = chs
    b1 = conv_block(gen, x, c1, 1)
    b2 = conv_block(gen, x, c5r, 1)
    b2 = conv_block(gen, b2, c5, 5, padding=2)
    b3 = conv_block(gen, x, c3r, 1)
    b3 = conv_block(gen, b3, c3a, 3, padding=1)
    b3 = conv_block(gen, b3, c3b, 3, padding=1)
    bp = avg_pool(x, 3, 1, 1)
    bp = conv_block(gen, bp, cp, 1)
    return jnp.concatenate([b1, b2, b3, bp], axis=-1)


def inception_b(gen, x, chs):
    c1, c7r, c7, c7dr, c7d, cp = chs
    b1 = conv_block(gen, x, c1, 1)
    b2 = conv_block(gen, x, c7r, 1)
    b2 = conv_block(gen, b2, c7r, (1, 7), padding=(0, 3))
    b2 = conv_block(gen, b2, c7, (7, 1), padding=(3, 0))
    b3 = conv_block(gen, x, c7dr, 1)
    b3 = conv_block(gen, b3, c7dr, (7, 1), padding=(3, 0))
    b3 = conv_block(gen, b3, c7dr, (1, 7), padding=(0, 3))
    b3 = conv_block(gen, b3, c7dr, (7, 1), padding=(3, 0))
    b3 = conv_block(gen, b3, c7d, (1, 7), padding=(0, 3))
    bp = avg_pool(x, 3, 1, 1)
    bp = conv_block(gen, bp, cp, 1)
    return jnp.concatenate([b1, b2, b3, bp], axis=-1)


def inception_c(gen, x, chs):
    c1, c3r, c3, cdr, cd3, cd, cp = chs
    b1 = conv_block(gen, x, c1, 1)
    b2 = conv_block(gen, x, c3r, 1)
    b2a = conv_block(gen, b2, c3, (1, 3), padding=(0, 1))
    b2b = conv_block(gen, b2, c3, (3, 1), padding=(1, 0))
    b3 = conv_block(gen, x, cdr, 1)
    b3 = conv_block(gen, b3, cd3, 3, padding=1)
    b3a = conv_block(gen, b3, cd, (1, 3), padding=(0, 1))
    b3b = conv_block(gen, b3, cd, (3, 1), padding=(1, 0))
    bp = avg_pool(x, 3, 1, 1)
    bp = conv_block(gen, bp, cp, 1)
    return jnp.concatenate([b1, b2a, b2b, b3a, b3b, bp], axis=-1)


def inception_reduction(gen, x, chs):
    # TODO(synk): _InceptionReduction source unavailable; standard grid-reduction
    # layout consistent with the channel list (input + chs[1] + chs[3] out).
    r1, o1, r2, o2 = chs
    b1 = conv_block(gen, x, r1, 1)
    b1 = conv_block(gen, b1, r1, 3, padding=1)
    b1 = conv_block(gen, b1, o1, 3, stride=2, padding=0)
    b2 = conv_block(gen, x, r2, 1)
    b2 = conv_block(gen, b2, o2, 3, stride=2, padding=0)
    bp = max_pool(x, 3, 2, 0)
    return jnp.concatenate([b1, b2, bp], axis=-1)


def inception_aux(gen, x, num_classes):
    # TODO(synk): _InceptionAUX source unavailable; InceptionV3-style aux head
    # (global avg pool -> 1x1 ConvBlock(128) -> FC) used; dropout = identity.
    y = global_avg_pool(x)
    y = conv_block(gen, y, 128, 1)
    B = y.shape[0]
    y = y.reshape(B, -1)
    w, b = gen.linear(y.shape[-1], num_classes)
    return matmul_bias(y, w, b)


# ----------------------------------------------------------------------------
# Full forward pass
# ----------------------------------------------------------------------------
def inception_v3_forward(x_nchw, num_classes, seed=0):
    gen = ParamGen(seed)
    x = jnp.transpose(x_nchw, (0, 2, 3, 1))           # NCHW -> NHWC

    # block_1
    out = conv_block(gen, x, 32, 3, stride=2, padding=0)
    out = conv_block(gen, out, 32, 3, stride=1, padding=0)
    out = conv_block(gen, out, 64, 3, stride=1, padding=1)
    out = max_pool(out, 3, 2, 0)
    # block_2
    out = conv_block(gen, out, 80, 3, stride=1, padding=0)
    out = conv_block(gen, out, 192, 3, stride=2, padding=0)
    out = conv_block(gen, out, 288, 3, stride=1, padding=1)
    out = max_pool(out, 3, 2, 1)

    # inception_3a/3b/3c
    for _ in range(3):
        out = inception_a(gen, out, [64, 48, 64, 64, 96, 96, 64])
    out = inception_reduction(gen, out, [64, 178, 64, 302])

    # inception_4a..4e
    out = inception_b(gen, out, [192, 128, 192, 128, 192, 192])
    for _ in range(3):
        out = inception_b(gen, out, [192, 160, 192, 160, 192, 192])
    out = inception_b(gen, out, [192, 192, 192, 192, 192, 192])

    aux = inception_aux(gen, out, num_classes)

    out = inception_reduction(gen, out, [192, 194, 192, 318])
    out = inception_c(gen, out, [320, 384, 384, 448, 384, 384, 192])
    out = inception_c(gen, out, [320, 384, 384, 448, 384, 384, 192])

    out = global_avg_pool(out)                        # (B, 1, 1, 2048)
    # TODO(synk): nn.Dropout treated as inference-mode identity.
    out_nchw = jnp.transpose(out, (0, 3, 1, 2))       # (B, 2048, 1, 1)
    B, C, Hh, Ww = out_nchw.shape
    # The reference forward applies nn.LazyLinear directly to the NCHW tensor
    # (no flatten): in_features == last dim (== 1); output (B, C, 1, classes),
    # then softmax over the last axis.  Reproduced faithfully here.
    w_fc, b_fc = gen.linear(Ww, num_classes)
    logits = matmul_bias(out_nchw.reshape(B * C * Hh, Ww), w_fc, b_fc)
    probs = softmax_last(logits).reshape(B, C, Hh, num_classes)
    return probs, aux


if __name__ == "__main__":
    num_classes = 10
    key = jax.random.PRNGKey(0)
    # 123x123 is the smallest input surviving every stride-2 stage of the net.
    x = jax.random.normal(key, (2, 3, 123, 123), jnp.float32)
    out, aux = inception_v3_forward(x, num_classes, seed=0)
    out = jax.block_until_ready(out)
    aux = jax.block_until_ready(aux)
    assert out.shape == (2, 2048, 1, num_classes), out.shape
    assert aux.shape == (2, num_classes), aux.shape
    assert bool(jnp.all(jnp.isfinite(out))) and bool(jnp.all(jnp.isfinite(aux)))
    print("KERNEL_OK")
</pallas_src>

<mosaic_0001>
module attributes {stable_mosaic.version = 11 : i64} {
  func.func @_conv_lrn_kernel(%arg0: i32, %arg1: memref<256x8xbf16, #tpu.memory_space<vmem>>, %arg2: memref<256x8xbf16, #tpu.memory_space<vmem>>, %arg3: memref<9x8x36xbf16, #tpu.memory_space<vmem>>, %arg4: memref<1x36xf32, #tpu.memory_space<vmem>>, %arg5: memref<256x32xbf16, #tpu.memory_space<vmem>>) attributes {dimension_semantics = [#tpu.dimension_semantics<parallel>], iteration_bounds = array<i64: 119>, scalar_prefetch = 0 : i64, scratch_operands = 0 : i64, tpu.core_type = #tpu.core_type<tc>, window_params = [{transform_indices = @transform_0, window_bounds = array<i64: 256, 8>}, {transform_indices = @transform_1, window_bounds = array<i64: 256, 8>}, {pipeline_mode = #tpu.pipeline_mode<synchronous>, transform_indices = @transform_2, window_bounds = array<i64: 9, 8, 36>}, {pipeline_mode = #tpu.pipeline_mode<synchronous>, transform_indices = @transform_3, window_bounds = array<i64: 1, 36>}, {transform_indices = @transform_4, window_bounds = array<i64: 256, 32>}]} {
    %c0 = arith.constant 0 : index
    %c0_0 = arith.constant 0 : index
    %0 = vector.load %arg1[%c0, %c0_0] : memref<256x8xbf16, #tpu.memory_space<vmem>>, vector<256x8xbf16>
    %c0_1 = arith.constant 0 : index
    %c0_2 = arith.constant 0 : index
    %1 = vector.load %arg2[%c0_1, %c0_2] : memref<256x8xbf16, #tpu.memory_space<vmem>>, vector<256x8xbf16>
    %2 = tpu.concatenate %0, %1 in 0 : vector<256x8xbf16>, vector<256x8xbf16> -> vector<512x8xbf16>
    %3 = vector.extract_strided_slice %2 {offsets = [0, 0], sizes = [256, 8], strides = [1, 1]} : vector<512x8xbf16> to vector<256x8xbf16>
    %c0_3 = arith.constant 0 : index
    %c0_4 = arith.constant 0 : index
    %c0_5 = arith.constant 0 : index
    %4 = vector.load %arg3[%c0_3, %c0_4, %c0_5] : memref<9x8x36xbf16, #tpu.memory_space<vmem>>, vector<1x8x36xbf16>
    %5 = vector.shape_cast %4 : vector<1x8x36xbf16> to vector<8x36xbf16>
    %cst = arith.constant dense<0.000000e+00> : vector<256x36xf32>
    %6 = tpu.matmul %3, %5, %cst {dimension_numbers = #tpu.dot_dimension_numbers<[1], [0], [0], [1], [0, 0, 1, 1], [], []>} : vector<256x8xbf16>, vector<8x36xbf16>, vector<256x36xf32> -> vector<256x36xf32>
    %7 = vector.extract_strided_slice %2 {offsets = [1, 0], sizes = [256, 8], strides = [1, 1]} : vector<512x8xbf16> to vector<256x8xbf16>
    %c1 = arith.constant 1 : index
    %c0_6 = arith.constant 0 : index
    %c0_7 = arith.constant 0 : index
    %8 = vector.load %arg3[%c1, %c0_6, %c0_7] : memref<9x8x36xbf16, #tpu.memory_space<vmem>>, vector<1x8x36xbf16>
    %9 = vector.shape_cast %8 : vector<1x8x36xbf16> to vector<8x36xbf16>
    %cst_8 = arith.constant dense<0.000000e+00> : vector<256x36xf32>
    %10 = tpu.matmul %7, %9, %cst_8 {dimension_numbers = #tpu.dot_dimension_numbers<[1], [0], [0], [1], [0, 0, 1, 1], [], []>} : vector<256x8xbf16>, vector<8x36xbf16>, vector<256x36xf32> -> vector<256x36xf32>
    %11 = arith.addf %6, %10 : vector<256x36xf32>
    %12 = vector.extract_strided_slice %2 {offsets = [2, 0], sizes = [256, 8], strides = [1, 1]} : vector<512x8xbf16> to vector<256x8xbf16>
    %c2 = arith.constant 2 : index
    %c0_9 = arith.constant 0 : index
    %c0_10 = arith.constant 0 : index
    %13 = vector.load %arg3[%c2, %c0_9, %c0_10] : memref<9x8x36xbf16, #tpu.memory_space<vmem>>, vector<1x8x36xbf16>
    %14 = vector.shape_cast %13 : vector<1x8x36xbf16> to vector<8x36xbf16>
    %cst_11 = arith.constant dense<0.000000e+00> : vector<256x36xf32>
    %15 = tpu.matmul %12, %14, %cst_11 {dimension_numbers = #tpu.dot_dimension_numbers<[1], [0], [0], [1], [0, 0, 1, 1], [], []>} : vector<256x8xbf16>, vector<8x36xbf16>, vector<256x36xf32> -> vector<256x36xf32>
    %16 = arith.addf %11, %15 : vector<256x36xf32>
    %17 = vector.extract_strided_slice %2 {offsets = [123, 0], sizes = [256, 8], strides = [1, 1]} : vector<512x8xbf16> to vector<256x8xbf16>
    %c3 = arith.constant 3 : index
    %c0_12 = arith.constant 0 : index
    %c0_13 = arith.constant 0 : index
    %18 = vector.load %arg3[%c3, %c0_12, %c0_13] : memref<9x8x36xbf16, #tpu.memory_space<vmem>>, vector<1x8x36xbf16>
    %19 = vector.shape_cast %18 : vector<1x8x36xbf16> to vector<8x36xbf16>
    %cst_14 = arith.constant dense<0.000000e+00> : vector<256x36xf32>
    %20 = tpu.matmul %17, %19, %cst_14 {dimension_numbers = #tpu.dot_dimension_numbers<[1], [0], [0], [1], [0, 0, 1, 1], [], []>} : vector<256x8xbf16>, vector<8x36xbf16>, vector<256x36xf32> -> vector<256x36xf32>
    %21 = arith.addf %16, %20 : vector<256x36xf32>
    %22 = vector.extract_strided_slice %2 {offsets = [124, 0], sizes = [256, 8], strides = [1, 1]} : vector<512x8xbf16> to vector<256x8xbf16>
    %c4 = arith.constant 4 : index
    %c0_15 = arith.constant 0 : index
    %c0_16 = arith.constant 0 : index
    %23 = vector.load %arg3[%c4, %c0_15, %c0_16] : memref<9x8x36xbf16, #tpu.memory_space<vmem>>, vector<1x8x36xbf16>
    %24 = vector.shape_cast %23 : vector<1x8x36xbf16> to vector<8x36xbf16>
    %cst_17 = arith.constant dense<0.000000e+00> : vector<256x36xf32>
    %25 = tpu.matmul %22, %24, %cst_17 {dimension_numbers = #tpu.dot_dimension_numbers<[1], [0], [0], [1], [0, 0, 1, 1], [], []>} : vector<256x8xbf16>, vector<8x36xbf16>, vector<256x36xf32> -> vector<256x36xf32>
    %26 = arith.addf %21, %25 : vector<256x36xf32>
    %27 = vector.extract_strided_slice %2 {offsets = [125, 0], sizes = [256, 8], strides = [1, 1]} : vector<512x8xbf16> to vector<256x8xbf16>
    %c5 = arith.constant 5 : index
    %c0_18 = arith.constant 0 : index
    %c0_19 = arith.constant 0 : index
    %28 = vector.load %arg3[%c5, %c0_18, %c0_19] : memref<9x8x36xbf16, #tpu.memory_space<vmem>>, vector<1x8x36xbf16>
    %29 = vector.shape_cast %28 : vector<1x8x36xbf16> to vector<8x36xbf16>
    %cst_20 = arith.constant dense<0.000000e+00> : vector<256x36xf32>
    %30 = tpu.matmul %27, %29, %cst_20 {dimension_numbers = #tpu.dot_dimension_numbers<[1], [0], [0], [1], [0, 0, 1, 1], [], []>} : vector<256x8xbf16>, vector<8x36xbf16>, vector<256x36xf32> -> vector<256x36xf32>
    %31 = arith.addf %26, %30 : vector<256x36xf32>
    %32 = vector.extract_strided_slice %2 {offsets = [246, 0], sizes = [256, 8], strides = [1, 1]} : vector<512x8xbf16> to vector<256x8xbf16>
    %c6 = arith.constant 6 : index
    %c0_21 = arith.constant 0 : index
    %c0_22 = arith.constant 0 : index
    %33 = vector.load %arg3[%c6, %c0_21, %c0_22] : memref<9x8x36xbf16, #tpu.memory_space<vmem>>, vector<1x8x36xbf16>
    %34 = vector.shape_cast %33 : vector<1x8x36xbf16> to vector<8x36xbf16>
    %cst_23 = arith.constant dense<0.000000e+00> : vector<256x36xf32>
    %35 = tpu.matmul %32, %34, %cst_23 {dimension_numbers = #tpu.dot_dimension_numbers<[1], [0], [0], [1], [0, 0, 1, 1], [], []>} : vector<256x8xbf16>, vector<8x36xbf16>, vector<256x36xf32> -> vector<256x36xf32>
    %36 = arith.addf %31, %35 : vector<256x36xf32>
    %37 = vector.extract_strided_slice %2 {offsets = [247, 0], sizes = [256, 8], strides = [1, 1]} : vector<512x8xbf16> to vector<256x8xbf16>
    %c7 = arith.constant 7 : index
    %c0_24 = arith.constant 0 : index
    %c0_25 = arith.constant 0 : index
    %38 = vector.load %arg3[%c7, %c0_24, %c0_25] : memref<9x8x36xbf16, #tpu.memory_space<vmem>>, vector<1x8x36xbf16>
    %39 = vector.shape_cast %38 : vector<1x8x36xbf16> to vector<8x36xbf16>
    %cst_26 = arith.constant dense<0.000000e+00> : vector<256x36xf32>
    %40 = tpu.matmul %37, %39, %cst_26 {dimension_numbers = #tpu.dot_dimension_numbers<[1], [0], [0], [1], [0, 0, 1, 1], [], []>} : vector<256x8xbf16>, vector<8x36xbf16>, vector<256x36xf32> -> vector<256x36xf32>
    %41 = arith.addf %36, %40 : vector<256x36xf32>
    %42 = vector.extract_strided_slice %2 {offsets = [248, 0], sizes = [256, 8], strides = [1, 1]} : vector<512x8xbf16> to vector<256x8xbf16>
    %c8 = arith.constant 8 : index
    %c0_27 = arith.constant 0 : index
    %c0_28 = arith.constant 0 : index
    %43 = vector.load %arg3[%c8, %c0_27, %c0_28] : memref<9x8x36xbf16, #tpu.memory_space<vmem>>, vector<1x8x36xbf16>
    %44 = vector.shape_cast %43 : vector<1x8x36xbf16> to vector<8x36xbf16>
    %cst_29 = arith.constant dense<0.000000e+00> : vector<256x36xf32>
    %45 = tpu.matmul %42, %44, %cst_29 {dimension_numbers = #tpu.dot_dimension_numbers<[1], [0], [0], [1], [0, 0, 1, 1], [], []>} : vector<256x8xbf16>, vector<8x36xbf16>, vector<256x36xf32> -> vector<256x36xf32>
    %46 = arith.addf %41, %45 : vector<256x36xf32>
    %c0_30 = arith.constant 0 : index
    %c0_31 = arith.constant 0 : index
    %47 = vector.load %arg4[%c0_30, %c0_31] : memref<1x36xf32, #tpu.memory_space<vmem>>, vector<1x36xf32>
    %48 = vector.broadcast %47 : vector<1x36xf32> to vector<256x36xf32>
    %49 = arith.addf %46, %48 : vector<256x36xf32>
    %50 = arith.mulf %49, %49 : vector<256x36xf32>
    %51 = vector.extract_strided_slice %50 {offsets = [0, 0], sizes = [256, 32], strides = [1, 1]} : vector<256x36xf32> to vector<256x32xf32>
    %52 = vector.extract_strided_slice %50 {offsets = [0, 1], sizes = [256, 32], strides = [1, 1]} : vector<256x36xf32> to vector<256x32xf32>
    %53 = arith.addf %51, %52 : vector<256x32xf32>
    %54 = vector.extract_strided_slice %50 {offsets = [0, 2], sizes = [256, 32], strides = [1, 1]} : vector<256x36xf32> to vector<256x32xf32>
    %55 = arith.addf %53, %54 : vector<256x32xf32>
    %56 = vector.extract_strided_slice %50 {offsets = [0, 3], sizes = [256, 32], strides = [1, 1]} : vector<256x36xf32> to vector<256x32xf32>
    %57 = arith.addf %55, %56 : vector<256x32xf32>
    %58 = vector.extract_strided_slice %50 {offsets = [0, 4], sizes = [256, 32], strides = [1, 1]} : vector<256x36xf32> to vector<256x32xf32>
    %59 = arith.addf %57, %58 : vector<256x32xf32>
    %cst_32 = arith.constant 2.000000e-05 : f32
    %60 = vector.broadcast %cst_32 : f32 to vector<256x32xf32>
    %61 = arith.mulf %59, %60 : vector<256x32xf32>
    %cst_33 = arith.constant 1.000000e+00 : f32
    %62 = vector.broadcast %cst_33 : f32 to vector<256x32xf32>
    %63 = arith.addf %61, %62 : vector<256x32xf32>
    %64 = math.log %63 : vector<256x32xf32>
    %cst_34 = arith.constant 7.500000e-01 : f32
    %65 = vector.broadcast %cst_34 : f32 to vector<256x32xf32>
    %66 = arith.mulf %65, %64 : vector<256x32xf32>
    %67 = math.exp %66 : vector<256x32xf32>
    %68 = vector.extract_strided_slice %49 {offsets = [0, 2], sizes = [256, 32], strides = [1, 1]} : vector<256x36xf32> to vector<256x32xf32>
    %69 = tpu.reciprocal %67 {approx = true} : vector<256x32xf32> -> vector<256x32xf32>
    %70 = arith.mulf %68, %69 : vector<256x32xf32>
    %cst_35 = arith.constant 0.000000e+00 : f32
    %71 = vector.broadcast %cst_35 : f32 to vector<256x32xf32>
    %72 = arith.maximumf %70, %71 : vector<256x32xf32>
    %73 = arith.truncf %72 : vector<256x32xf32> to vector<256x32xbf16>
    %c0_36 = arith.constant 0 : index
    %c0_37 = arith.constant 0 : index
    %74 = vector.load %arg5[%c0_36, %c0_37] : memref<256x32xbf16, #tpu.memory_space<vmem>>, vector<256x32xbf16>
    tpu.vector_store %arg5[%c0_36, %c0_37], %73 {strides = array<i32>} : memref<256x32xbf16, #tpu.memory_space<vmem>>, vector<256x32xbf16>,
    return
  }
  func.func @transform_0(%arg0: i32) -> (i32, i32) {
    %c0_i32 = arith.constant 0 : i32
    %c0_i32_0 = arith.constant 0 : i32
    return %arg0, %c0_i32 : i32, i32
  }
  func.func @transform_1(%arg0: i32) -> (i32, i32) {
    %c1_i32 = arith.constant 1 : i32
    %0 = arith.addi %arg0, %c1_i32 : i32
    %c0_i32 = arith.constant 0 : i32
    %c0_i32_0 = arith.constant 0 : i32
    return %0, %c0_i32 : i32, i32
  }
  func.func @transform_2(%arg0: i32) -> (i32, i32, i32) {
    %c0_i32 = arith.constant 0 : i32
    %c0_i32_0 = arith.constant 0 : i32
    %c0_i32_1 = arith.constant 0 : i32
    %c0_i32_2 = arith.constant 0 : i32
    return %c0_i32, %c0_i32_0, %c0_i32_1 : i32, i32, i32
  }
  func.func @transform_3(%arg0: i32) -> (i32, i32) {
    %c0_i32 = arith.constant 0 : i32
    %c0_i32_0 = arith.constant 0 : i32
    %c0_i32_1 = arith.constant 0 : i32
    return %c0_i32, %c0_i32_0 : i32, i32
  }
  func.func @transform_4(%arg0: i32) -> (i32, i32) {
    %c0_i32 = arith.constant 0 : i32
    %c0_i32_0 = arith.constant 0 : i32
    return %arg0, %c0_i32 : i32, i32
  }
}

</mosaic_0001>

<llo_original>
// kernel: conv2d_lrn.1
$region0: #{conv2d_lrn.1}
  #allocation0 [shape = 'u32[]', space=smem, size = 0x4, offset = 0x4, fixed_abs, tag = 'smem constant byte address 0x4 - core index']
  #allocation1 [shape = 'u32[144,128]{1,0:T(1,128)}', space=vmem, size = 0x12000, scoped, tag = 'internal scratch']
  %s0 = inlined_call_operand.vmem [shape: bf16[30720,8], index: 0, kind: input, shape index: {}, may-alias: {0,1}]
  %s1 = inlined_call_operand.vmem [shape: bf16[30720,8], index: 1, kind: input, shape index: {}, may-alias: {0,1}]
  %s2 = inlined_call_operand.vmem [shape: bf16[9,8,36], index: 2, kind: input, shape index: {}]
  %s3 = inlined_call_operand.vmem [shape: f32[1,36], index: 3, kind: input, shape index: {}]
  %s4 = inlined_call_operand.vmem [shape: bf16[30464,32], index: 4, kind: output, shape index: {}]
  %s5 = sld [smem:[#allocation0]]
  $region49: #{conv2d_lrn.1} parent=0
    _
  %s7 = ssub.s32 1, %s5
  %s8 = scalar_select 0, %s7, %s5
  loop: start=0, step=1, limit=121
  $region2: #{conv2d_lrn.1} parent=0 // loop_pre_header
    _
  $region3: #{conv2d_lrn.1} parent=0 // loop_header
    %s10 = sphi 0, %s14
    %p11 = scmp.ge.s32.totalorder %s10, 121
    %s20 = sphi 0, %s22
    %s23 = sphi 0, %s20
    %s24 = sphi 0, %s23
    %s40 = sphi 0, %s24
    %s48 = sphi 0, %s50
    %s51 = sphi 0, %s48
    %s52 = sphi 0, %s51
    %s68 = sphi 0, %s52
    %s72 = sphi 0, %s72
    %s74 = sphi 0, %s72
    %s75 = sphi 0, %s74
    %s89 = sphi 0, %s75
    %s93 = sphi 0, %s93
    %s95 = sphi 0, %s93
    %s96 = sphi 0, %s95
    %s110 = sphi 0, %s96
    %s116 = sphi 0, %s118
    %s119 = sphi 0, %s116
    %s120 = sphi 0, %s119
    %s136 = sphi 0, %s120
  $region4: #{conv2d_lrn.1} parent=0 // loop_header_branch
    %13 = sbr.rel (%p11) target = $region8
  $region5: #{conv2d_lrn.1} parent=0 // loop_body
    %s15 = ssub.s32 %s10, 1
    %s16 = ssub.s32 %s10, 2
    %s17 = sadd.s32 %s10, 1
    %s18 = ssub.s32 %s10, %s17
    %p19 = scmp.eq.s32.totalorder %s18, 0
    %s21 = sadd.s32 %s20, 1
    %s22 = scalar_select %p19, %s20, %s21
    %p25 = pneg %p19
    %p26 = scmp.eq.s32.totalorder %s10, 118
    %p27 = por %p25, %p26
    %p28 = scmp.ne.s32.totalorder %s20, %s23
    %p29 = scmp.eq.s32.totalorder %s10, 0
    %p30 = por %p28, %p29
    %p31 = scmp.ne.s32.totalorder %s20, %s23
    %p32 = scmp.eq.s32.totalorder %s15, 118
    %p33 = por %p31, %p32
    %p34 = scmp.ne.s32.totalorder %s23, %s24
    %p35 = scmp.eq.s32.totalorder %s15, 0
    %p36 = por %p34, %p35
    %p37 = scmp.ne.s32.totalorder %s23, %s24
    %p38 = scmp.eq.s32.totalorder %s16, 118
    %p39 = por %p37, %p38
    %p41 = scmp.ne.s32.totalorder %s24, %s40
    %p42 = scmp.eq.s32.totalorder %s16, 0
    %p43 = por %p41, %p42
    %s44 = sadd.s32 %s10, 1
    %s45 = sadd.s32 %s17, 1
    %s46 = ssub.s32 %s44, %s45
    %p47 = scmp.eq.s32.totalorder %s46, 0
    %s49 = sadd.s32 %s48, 1
    %s50 = scalar_select %p47, %s48, %s49
    %p53 = pneg %p47
    %p54 = scmp.eq.s32.totalorder %s10, 118
    %p55 = por %p53, %p54
    %p56 = scmp.ne.s32.totalorder %s48, %s51
    %p57 = scmp.eq.s32.totalorder %s10, 0
    %p58 = por %p56, %p57
    %p59 = scmp.ne.s32.totalorder %s48, %s51
    %p60 = scmp.eq.s32.totalorder %s15, 118
    %p61 = por %p59, %p60
    %p62 = scmp.ne.s32.totalorder %s51, %s52
    %p63 = scmp.eq.s32.totalorder %s15, 0
    %p64 = por %p62, %p63
    %p65 = scmp.ne.s32.totalorder %s51, %s52
    %p66 = scmp.eq.s32.totalorder %s16, 118
    %p67 = por %p65, %p66
    %p69 = scmp.ne.s32.totalorder %s52, %s68
    %p70 = scmp.eq.s32.totalorder %s16, 0
    %p71 = por %p69, %p70
    %s73 = sadd.s32 %s72, 1
    %p76 = scmp.eq.s32.totalorder %s10, 118
    %p77 = scmp.ne.s32.totalorder %s72, %s74
    %p78 = scmp.eq.s32.totalorder %s10, 0
    %p79 = por %p77, %p78
    %p80 = scmp.ne.s32.totalorder %s72, %s74
    %p81 = scmp.eq.s32.totalorder %s15, 118
    %p82 = por %p80, %p81
    %p83 = scmp.ne.s32.totalorder %s74, %s75
    %p84 = scmp.eq.s32.totalorder %s15, 0
    %p85 = por %p83, %p84
    %p86 = scmp.ne.s32.totalorder %s74, %s75
    %p87 = scmp.eq.s32.totalorder %s16, 118
    %p88 = por %p86, %p87
    %p90 = scmp.ne.s32.totalorder %s75, %s89
    %p91 = scmp.eq.s32.totalorder %s16, 0
    %p92 = por %p90, %p91
    %s94 = sadd.s32 %s93, 1
    %p97 = scmp.eq.s32.totalorder %s10, 118
    %p98 = scmp.ne.s32.totalorder %s93, %s95
    %p99 = scmp.eq.s32.totalorder %s10, 0
    %p100 = por %p98, %p99
    %p101 = scmp.ne.s32.totalorder %s93, %s95
    %p102 = scmp.eq.s32.totalorder %s15, 118
    %p103 = por %p101, %p102
    %p104 = scmp.ne.s32.totalorder %s95, %s96
    %p105 = scmp.eq.s32.totalorder %s15, 0
    %p106 = por %p104, %p105
    %p107 = scmp.ne.s32.totalorder %s95, %s96
    %p108 = scmp.eq.s32.totalorder %s16, 118
    %p109 = por %p107, %p108
    %p111 = scmp.ne.s32.totalorder %s96, %s110
    %p112 = scmp.eq.s32.totalorder %s16, 0
    %p113 = por %p111, %p112
    %s114 = ssub.s32 %s10, %s17
    %p115 = scmp.eq.s32.totalorder %s114, 0
    %s117 = sadd.s32 %s116, 1
    %s118 = scalar_select %p115, %s116, %s117
    %p121 = pneg %p115
    %p122 = scmp.eq.s32.totalorder %s10, 118
    %p123 = por %p121, %p122
    %p124 = scmp.ne.s32.totalorder %s116, %s119
    %p125 = scmp.eq.s32.totalorder %s10, 0
    %p126 = por %p124, %p125
    %p127 = scmp.ne.s32.totalorder %s116, %s119
    %p128 = scmp.eq.s32.totalorder %s15, 118
    %p129 = por %p127, %p128
    %p130 = scmp.ne.s32.totalorder %s119, %s120
    %p131 = scmp.eq.s32.totalorder %s15, 0
    %p132 = por %p130, %p131
    %p133 = scmp.ne.s32.totalorder %s119, %s120
    %p134 = scmp.eq.s32.totalorder %s16, 118
    %p135 = por %p133, %p134
    %p137 = scmp.ne.s32.totalorder %s120, %s136
    %p138 = scmp.eq.s32.totalorder %s16, 0
    %p139 = por %p137, %p138
    %p140 = scmp.le.s32.totalorder 1, %s10
    %p141 = scmp.lt.s32.totalorder %s10, 120
    %p142 = pnand %p140, %p141
    %p143 = pneg %p142
    // Predicated region
    $region9: #{conv2d_lrn.1} parent=5 // pred_check
      _
    $region10: #{conv2d_lrn.1} parent=5 // pred_check_branch
      %145 = sbr.rel (%p142) target = $region12
    $region11: #{conv2d_lrn.1} parent=5 // pred_region
      %s146 = ssub.s32 %s10, 1
      // Predicated region
      $region13: #{conv2d_lrn.1} parent=11 // pred_check
        %p147 = pneg %p85
      $region14: #{conv2d_lrn.1} parent=11 // pred_check_branch
        %149 = sbr.rel (%p147) target = $region16
      $region15: #{conv2d_lrn.1} parent=11 // pred_region
        _
      $region16: #{conv2d_lrn.1} parent=11 // pred_fallthru
        _
      // Predicated region
      $region17: #{conv2d_lrn.1} parent=11 // pred_check
        %p150 = pneg %p106
      $region18: #{conv2d_lrn.1} parent=11 // pred_check_branch
        %152 = sbr.rel (%p150) target = $region20
      $region19: #{conv2d_lrn.1} parent=11 // pred_region
        _
      $region20: #{conv2d_lrn.1} parent=11 // pred_fallthru
        _
    $region12: #{conv2d_lrn.1} parent=5 // pred_fallthru
      _
    %p153 = scmp.lt.s32.totalorder %s10, 119
    // Predicated region
    $region21: #{conv2d_lrn.1} parent=5 // pred_check
      %p154 = pneg %p153
    $region22: #{conv2d_lrn.1} parent=5 // pred_check_branch
      %156 = sbr.rel (%p154) target = $region24
    $region23: #{conv2d_lrn.1} parent=5 // pred_region
      // Predicated region
      $region25: #{conv2d_lrn.1} parent=23 // pred_check
        %p157 = pneg %p30
      $region26: #{conv2d_lrn.1} parent=23 // pred_check_branch
        %159 = sbr.rel (%p157) target = $region28
      $region27: #{conv2d_lrn.1} parent=23 // pred_region
        %s160 = smul.u32 32, %s10
        %p161 = scmp.lt.s32.totalorder %s160, 3839
        %s162 = scalar_select %p161, %s160, 3839
        %s163 = smul.addr %s162, 4
        %s164 = scalar_lea.vmem %s0, %s163
        %s165 = smul.u32 32, %s10
      $region28: #{conv2d_lrn.1} parent=23 // pred_fallthru
        _
      // Predicated region
      $region29: #{conv2d_lrn.1} parent=23 // pred_check
        %p166 = pneg %p58
      $region30: #{conv2d_lrn.1} parent=23 // pred_check_branch
        %168 = sbr.rel (%p166) target = $region32
      $region31: #{conv2d_lrn.1} parent=23 // pred_region
        %s169 = sadd.s32 %s10, 1
        %s170 = smul.u32 32, %s169
        %p171 = scmp.lt.s32.totalorder %s170, 3839
        %s172 = scalar_select %p171, %s170, 3839
        %s173 = smul.addr %s172, 4
        %s174 = scalar_lea.vmem %s1, %s173
        %s175 = sadd.s32 %s10, 1
        %s176 = smul.u32 32, %s175
      $region32: #{conv2d_lrn.1} parent=23 // pred_fallthru
        _
    $region24: #{conv2d_lrn.1} parent=5 // pred_fallthru
      _
    %p177 = scmp.le.s32.totalorder 1, %s10
    %p178 = scmp.lt.s32.totalorder %s10, 120
    %p179 = pnand %p177, %p178
    %p180 = pneg %p179
    // Predicated region
    $region33: #{conv2d_lrn.1} parent=5 // pred_check
      _
    $region34: #{conv2d_lrn.1} parent=5 // pred_check_branch
      %182 = sbr.rel (%p179) target = $region36
    $region35: #{conv2d_lrn.1} parent=5 // pred_region
      %s183 = ssub.s32 %s10, 1
      %s184 = smul.u32 32, %s15
      %p185 = scmp.lt.s32.totalorder %s184, 3839
      %s186 = scalar_select %p185, %s184, 3839
      %s187 = smul.addr %s186, 4
      %s188 = scalar_lea.vmem %s0, %s187
      %p189 = pneg %p36
      %p190 = pneg %p33
      %s191 = sadd.s32 %s15, 1
      %s192 = smul.u32 32, %s191
      %p193 = scmp.lt.s32.totalorder %s192, 3839
      %s194 = scalar_select %p193, %s192, 3839
      %s195 = smul.addr %s194, 4
      %s196 = scalar_lea.vmem %s1, %s195
      %p197 = pneg %p64
      %p198 = pneg %p61
      %p199 = pneg %p85
      %p200 = pneg %p82
      %p201 = pneg %p106
      %p202 = pneg %p103
      %p203 = pneg %p132
      %p204 = pneg %p129
      %s205 = smul.u32 32, %s15
      %p206 = scmp.lt.s32.totalorder %s205, 3807
      %s207 = scalar_select %p206, %s205, 3807
      %s208 = smul.addr %s207, 4
      %s209 = scalar_lea.vmem %s4, %s208
      %s210 = smul.u32 32, %s15
      %p211 = scmp.lt.s32.totalorder %s210, 3839
      %s212 = scalar_select %p211, %s210, 3839
      %s213 = smul.addr %s212, 4
      %s214 = scalar_lea.vmem %s0, %s213
      %s215 = smul.u32 32, %s15
      %s216 = sadd.s32 %s15, 1
      %s217 = smul.u32 32, %s216
      %p218 = scmp.lt.s32.totalorder %s217, 3839
      %s219 = scalar_select %p218, %s217, 3839
      %s220 = smul.addr %s219, 4
      %s221 = scalar_lea.vmem %s1, %s220
      %s222 = sadd.s32 %s15, 1
      %s223 = smul.u32 32, %s222
      %s224 = smul.u32 32, %s15
      %p225 = scmp.lt.s32.totalorder %s224, 3807
      %s226 = scalar_select %p225, %s224, 3807
      %s227 = smul.addr %s226, 4
      %s228 = scalar_lea.vmem %s4, %s227
      %s229 = smul.u32 32, %s15
      %v231 = vld [vmem:[%s214] sm:$0xf]
      %v232 = vld [vmem:[%s214 + $0x4] sm:$0xf]
      %v233 = vld [vmem:[%s214 + $0x8] sm:$0xf]
      %v234 = vld [vmem:[%s214 + $0xc] sm:$0xf]
      %v235 = vld [vmem:[%s214 + $0x10] sm:$0xf]
      %v236 = vld [vmem:[%s214 + $0x14] sm:$0xf]
      %v237 = vld [vmem:[%s214 + $0x18] sm:$0xf]
      %v238 = vld [vmem:[%s214 + $0x1c] sm:$0xf]
      %v239 = vld [vmem:[%s214 + $0x20] sm:$0xf]
      %v240 = vld [vmem:[%s214 + $0x24] sm:$0xf]
      %v241 = vld [vmem:[%s214 + $0x28] sm:$0xf]
      %v242 = vld [vmem:[%s214 + $0x2c] sm:$0xf]
      %v243 = vld [vmem:[%s214 + $0x30] sm:$0xf]
      %v244 = vld [vmem:[%s214 + $0x34] sm:$0xf]
      %v245 = vld [vmem:[%s214 + $0x38] sm:$0xf]
      %v246 = vld [vmem:[%s214 + $0x3c] sm:$0xf]
      %v247 = vld [vmem:[%s214 + $0x40] sm:$0xf]
      %v248 = vld [vmem:[%s214 + $0x44] sm:$0xf]
      %v249 = vld [vmem:[%s214 + $0x48] sm:$0xf]
      %v250 = vld [vmem:[%s214 + $0x4c] sm:$0xf]
      %v251 = vld [vmem:[%s214 + $0x50] sm:$0xf]
      %v252 = vld [vmem:[%s214 + $0x54] sm:$0xf]
      %v253 = vld [vmem:[%s214 + $0x58] sm:$0xf]
      %v254 = vld [vmem:[%s214 + $0x5c] sm:$0xf]
      %v255 = vld [vmem:[%s214 + $0x60] sm:$0xf]
      %v256 = vld [vmem:[%s214 + $0x64] sm:$0xf]
      %v257 = vld [vmem:[%s214 + $0x68] sm:$0xf]
      %v258 = vld [vmem:[%s214 + $0x6c] sm:$0xf]
      %v259 = vld [vmem:[%s214 + $0x70] sm:$0xf]
      %v260 = vld [vmem:[%s214 + $0x74] sm:$0xf]
      %v261 = vld [vmem:[%s214 + $0x78] sm:$0xf]
      %v262 = vld [vmem:[%s214 + $0x7c] sm:$0xf]
      %v263 = vld [vmem:[%s221] sm:$0xf]
      %v264 = vld [vmem:[%s221 + $0x4] sm:$0xf]
      %v265 = vld [vmem:[%s221 + $0x8] sm:$0xf]
      %v266 = vld [vmem:[%s221 + $0xc] sm:$0xf]
      %v267 = vld [vmem:[%s221 + $0x10] sm:$0xf]
      %v268 = vld [vmem:[%s221 + $0x14] sm:$0xf]
      %v269 = vld [vmem:[%s221 + $0x18] sm:$0xf]
      %v270 = vld [vmem:[%s221 + $0x1c] sm:$0xf]
      %v271 = vld [vmem:[%s221 + $0x20] sm:$0xf]
      %v272 = vld [vmem:[%s221 + $0x24] sm:$0xf]
      %v273 = vld [vmem:[%s221 + $0x28] sm:$0xf]
      %v274 = vld [vmem:[%s221 + $0x2c] sm:$0xf]
      %v275 = vld [vmem:[%s221 + $0x30] sm:$0xf]
      %v276 = vld [vmem:[%s221 + $0x34] sm:$0xf]
      %v277 = vld [vmem:[%s221 + $0x38] sm:$0xf]
      %v278 = vld [vmem:[%s221 + $0x3c] sm:$0xf]
      %v279 = vld [vmem:[%s221 + $0x40] sm:$0xf]
      %v280 = vld [vmem:[%s221 + $0x44] sm:$0xf]
      %v281 = vld [vmem:[%s221 + $0x48] sm:$0xf]
      %v282 = vld [vmem:[%s221 + $0x4c] sm:$0xf]
      %v283 = vld [vmem:[%s221 + $0x50] sm:$0xf]
      %v284 = vld [vmem:[%s221 + $0x54] sm:$0xf]
      %v285 = vld [vmem:[%s221 + $0x58] sm:$0xf]
      %v286 = vld [vmem:[%s221 + $0x5c] sm:$0xf]
      %v287 = vld [vmem:[%s221 + $0x60] sm:$0xf]
      %v288 = vld [vmem:[%s221 + $0x64] sm:$0xf]
      %v289 = vld [vmem:[%s221 + $0x68] sm:$0xf]
      %v290 = vld [vmem:[%s221 + $0x6c] sm:$0xf]
      %v291 = vld [vmem:[%s221 + $0x70] sm:$0xf]
      %v292 = vld [vmem:[%s221 + $0x74] sm:$0xf]
      %v293 = vld [vmem:[%s221 + $0x78] sm:$0xf]
      %v294 = vld [vmem:[%s221 + $0x7c] sm:$0xf]
      %v327 = vunpack.c.l.b16 %v231
      %v328 = vunpack.c.l.b16 %v232
      %v329 = vunpack.c.l.b16 %v233
      %v330 = vunpack.c.l.b16 %v234
      %v331 = vunpack.c.l.b16 %v235
      %v332 = vunpack.c.l.b16 %v236
      %v333 = vunpack.c.l.b16 %v237
      %v334 = vunpack.c.l.b16 %v238
      %v335 = vunpack.c.l.b16 %v239
      %v336 = vunpack.c.l.b16 %v240
      %v337 = vunpack.c.l.b16 %v241
      %v338 = vunpack.c.l.b16 %v242
      %v339 = vunpack.c.l.b16 %v243
      %v340 = vunpack.c.l.b16 %v244
      %v341 = vunpack.c.l.b16 %v245
      %v342 = vunpack.c.l.b16 %v246
      %v343 = vunpack.c.l.b16 %v247
      %v344 = vunpack.c.l.b16 %v248
      %v345 = vunpack.c.l.b16 %v249
      %v346 = vunpack.c.l.b16 %v250
      %v347 = vunpack.c.l.b16 %v251
      %v348 = vunpack.c.l.b16 %v252
      %v349 = vunpack.c.l.b16 %v253
      %v350 = vunpack.c.l.b16 %v254
      %v351 = vunpack.c.l.b16 %v255
      %v352 = vunpack.c.l.b16 %v256
      %v353 = vunpack.c.l.b16 %v257
      %v354 = vunpack.c.l.b16 %v258
      %v355 = vunpack.c.l.b16 %v259
      %v356 = vunpack.c.l.b16 %v260
      %v357 = vunpack.c.l.b16 %v261
      %v358 = vunpack.c.l.b16 %v262
      %v359 = vpack.c.b16 %v328, %v327
      %v360 = vpack.c.b16 %v330, %v329
      %v361 = vpack.c.b16 %v332, %v331
      %v362 = vpack.c.b16 %v334, %v333
      %v363 = vpack.c.b16 %v336, %v335
      %v364 = vpack.c.b16 %v338, %v337
      %v365 = vpack.c.b16 %v340, %v339
      %v366 = vpack.c.b16 %v342, %v341
      %v367 = vpack.c.b16 %v344, %v343
      %v368 = vpack.c.b16 %v346, %v345
      %v369 = vpack.c.b16 %v348, %v347
      %v370 = vpack.c.b16 %v350, %v349
      %v371 = vpack.c.b16 %v352, %v351
      %v372 = vpack.c.b16 %v354, %v353
      %v373 = vpack.c.b16 %v356, %v355
      %v374 = vpack.c.b16 %v358, %v357
      %v407 = vunpack.c.l.b16 %v263
      %v408 = vunpack.c.l.b16 %v264
      %v409 = vunpack.c.l.b16 %v265
      %v410 = vunpack.c.l.b16 %v266
      %v411 = vunpack.c.l.b16 %v267
      %v412 = vunpack.c.l.b16 %v268
      %v413 = vunpack.c.l.b16 %v269
      %v414 = vunpack.c.l.b16 %v270
      %v415 = vunpack.c.l.b16 %v271
      %v416 = vunpack.c.l.b16 %v272
      %v417 = vunpack.c.l.b16 %v273
      %v418 = vunpack.c.l.b16 %v274
      %v419 = vunpack.c.l.b16 %v275
      %v420 = vunpack.c.l.b16 %v276
      %v421 = vunpack.c.l.b16 %v277
      %v422 = vunpack.c.l.b16 %v278
      %v423 = vunpack.c.l.b16 %v279
      %v424 = vunpack.c.l.b16 %v280
      %v425 = vunpack.c.l.b16 %v281
      %v426 = vunpack.c.l.b16 %v282
      %v427 = vunpack.c.l.b16 %v283
      %v428 = vunpack.c.l.b16 %v284
      %v429 = vunpack.c.l.b16 %v285
      %v430 = vunpack.c.l.b16 %v286
      %v431 = vunpack.c.l.b16 %v287
      %v432 = vunpack.c.l.b16 %v288
      %v433 = vunpack.c.l.b16 %v289
      %v434 = vunpack.c.l.b16 %v290
      %v435 = vunpack.c.l.b16 %v291
      %v436 = vunpack.c.l.b16 %v292
      %v437 = vunpack.c.l.b16 %v293
      %v438 = vunpack.c.l.b16 %v294
      %v439 = vpack.c.b16 %v408, %v407
      %v440 = vpack.c.b16 %v410, %v409
      %v441 = vpack.c.b16 %v412, %v411
      %v442 = vpack.c.b16 %v414, %v413
      %v443 = vpack.c.b16 %v416, %v415
      %v444 = vpack.c.b16 %v418, %v417
      %v445 = vpack.c.b16 %v420, %v419
      %v446 = vpack.c.b16 %v422, %v421
      %v447 = vpack.c.b16 %v424, %v423
      %v448 = vpack.c.b16 %v426, %v425
      %v449 = vpack.c.b16 %v428, %v427
      %v450 = vpack.c.b16 %v430, %v429
      %v451 = vpack.c.b16 %v432, %v431
      %v452 = vpack.c.b16 %v434, %v433
      %v453 = vpack.c.b16 %v436, %v435
      %v454 = vpack.c.b16 %v438, %v437
      %v455 = vld [vmem:[%s2] sm:$0xf]
      %s456 = scalar_lea.vmem %s2, 4
      %v457 = vld [vmem:[%s456] sm:$0xf]
      %vm458 = vsmask.f32 7424
      %v460 = vshrl.u32 %v359, 16
      %v462 = vshll.u32 %v359, 16
      %v464 = vrot.slane %v462, 1
      %v465 = vor.u32 %v460, %v464
      %v467 = vshll.u32 %v360, 16
      %v469 = vrot.slane %v467, 1
      %v470 = vsel %vm458, %v465, %v469
      %v471 = vshrl.u32 %v360, 16
      %v473 = vor.u32 %v471, %v469
      %v475 = vshll.u32 %v361, 16
      %v477 = vrot.slane %v475, 1
      %v478 = vsel %vm458, %v473, %v477
      %v479 = vshrl.u32 %v361, 16
      %v481 = vor.u32 %v479, %v477
      %v483 = vshll.u32 %v362, 16
      %v485 = vrot.slane %v483, 1
      %v486 = vsel %vm458, %v481, %v485
      %v487 = vshrl.u32 %v362, 16
      %v489 = vor.u32 %v487, %v485
      %v491 = vshll.u32 %v363, 16
      %v493 = vrot.slane %v491, 1
      %v494 = vsel %vm458, %v489, %v493
      %v495 = vshrl.u32 %v363, 16
      %v497 = vor.u32 %v495, %v493
      %v499 = vshll.u32 %v364, 16
      %v501 = vrot.slane %v499, 1
      %v502 = vsel %vm458, %v497, %v501
      %v503 = vshrl.u32 %v364, 16
      %v505 = vor.u32 %v503, %v501
      %v507 = vshll.u32 %v365, 16
      %v509 = vrot.slane %v507, 1
      %v510 = vsel %vm458, %v505, %v509
      %v511 = vshrl.u32 %v365, 16
      %v513 = vor.u32 %v511, %v509
      %v515 = vshll.u32 %v366, 16
      %v517 = vrot.slane %v515, 1
      %v518 = vsel %vm458, %v513, %v517
      %v519 = vshrl.u32 %v366, 16
      %v521 = vor.u32 %v519, %v517
      %v523 = vshll.u32 %v367, 16
      %v525 = vrot.slane %v523, 1
      %v526 = vsel %vm458, %v521, %v525
      %v527 = vshrl.u32 %v367, 16
      %v529 = vor.u32 %v527, %v525
      %v531 = vshll.u32 %v368, 16
      %v533 = vrot.slane %v531, 1
      %v534 = vsel %vm458, %v529, %v533
      %v535 = vshrl.u32 %v368, 16
      %v537 = vor.u32 %v535, %v533
      %v539 = vshll.u32 %v369, 16
      %v541 = vrot.slane %v539, 1
      %v542 = vsel %vm458, %v537, %v541
      %v543 = vshrl.u32 %v369, 16
      %v545 = vor.u32 %v543, %v541
      %v547 = vshll.u32 %v370, 16
      %v549 = vrot.slane %v547, 1
      %v550 = vsel %vm458, %v545, %v549
      %v551 = vshrl.u32 %v370, 16
      %v553 = vor.u32 %v551, %v549
      %v555 = vshll.u32 %v371, 16
      %v557 = vrot.slane %v555, 1
      %v558 = vsel %vm458, %v553, %v557
      %v559 = vshrl.u32 %v371, 16
      %v561 = vor.u32 %v559, %v557
      %v563 = vshll.u32 %v372, 16
      %v565 = vrot.slane %v563, 1
      %v566 = vsel %vm458, %v561, %v565
      %v567 = vshrl.u32 %v372, 16
      %v569 = vor.u32 %v567, %v565
      %v571 = vshll.u32 %v373, 16
      %v573 = vrot.slane %v571, 1
      %v574 = vsel %vm458, %v569, %v573
      %v575 = vshrl.u32 %v373, 16
      %v577 = vor.u32 %v575, %v573
      %v579 = vshll.u32 %v374, 16
      %v581 = vrot.slane %v579, 1
      %v582 = vsel %vm458, %v577, %v581
      %v583 = vshrl.u32 %v374, 16
      %v585 = vor.u32 %v583, %v581
      %v587 = vshll.u32 %v439, 16
      %v589 = vrot.slane %v587, 1
      %v590 = vsel %vm458, %v585, %v589
      %vm591 = vcmask 64512
      %v593 = vsel %vm591, %v470, 0
      %v596 = vsel %vm591, %v478, 0
      %v599 = vsel %vm591, %v486, 0
      %v602 = vsel %vm591, %v494, 0
      %v605 = vsel %vm591, %v502, 0
      %v608 = vsel %vm591, %v510, 0
      %v611 = vsel %vm591, %v518, 0
      %v614 = vsel %vm591, %v526, 0
      %v617 = vsel %vm591, %v534, 0
      %v620 = vsel %vm591, %v542, 0
      %v623 = vsel %vm591, %v550, 0
      %v626 = vsel %vm591, %v558, 0
      %v629 = vsel %vm591, %v566, 0
      %v632 = vsel %vm591, %v574, 0
      %v635 = vsel %vm591, %v582, 0
      %v638 = vsel %vm591, %v590, 0
      %vm640 = vcmask 1043456
      %v642 = vsel %vm640, %v457, 0
      %644 = vmatprep.subr.bf16.mxu0 0
      %645 = vmatpush1.bf16.msra.mxu0 %v642
      %646 = vmatprep.subr.bf16.mxu0 0
      %647 = vmatpush1.bf16.msra.mxu0 0
      %648 = vmatprep.subr.bf16.mxu0 0
      %649 = vmatpush1.bf16.msra.mxu0 0
      %650 = vmatprep.subr.bf16.mxu0 0
      %651 = vmatpush1.bf16.msra.mxu0 0
      %652 = vmatprep.subr.bf16.mxu0 0
      %653 = vmatpush1.bf16.msra.mxu0 0
      %654 = vmatprep.subr.bf16.mxu0 0
      %655 = vmatpush1.bf16.msra.mxu0 0
      %656 = vmatprep.subr.bf16.mxu0 0
      %657 = vmatpush1.bf16.msra.mxu0 0
      %658 = vmatprep.subr.bf16.mxu0 0
      %659 = vmatpush1.bf16.msra.mxu0 0
      %660 = vmatprep.subr.bf16.mxu0 0
      %661 = vmatpush1.bf16.msra.mxu0 0
      %662 = vmatprep.subr.bf16.mxu0 0
      %663 = vmatpush1.bf16.msra.mxu0 0
      %664 = vmatprep.subr.bf16.mxu0 0
      %665 = vmatpush1.bf16.msra.mxu0 0
      %666 = vmatprep.subr.bf16.mxu0 0
      %667 = vmatpush1.bf16.msra.mxu0 0
      %668 = vmatprep.subr.bf16.mxu0 0
      %669 = vmatpush1.bf16.msra.mxu0 0
      %670 = vmatprep.subr.bf16.mxu0 0
      %671 = vmatpush1.bf16.msra.mxu0 0
      %672 = vmatprep.subr.bf16.mxu0 0
      %673 = vmatpush1.bf16.msra.mxu0 0
      %674 = vmatprep.subr.bf16.mxu0 0
      %675 = vmatpush1.bf16.msra.mxu0 0
      %676 = vmatprep.mubr.bf16.mxu0 0
      %677 = vmatmul.mubr.bf16.gmra.mrb[0].mxu0 %v593
      %v678 = vpop.f32.mrb[0].mxu0
      %v679 = vadd.f32 0.0, %v678
      %v680 = vpop.f32.mrb[0].mxu0
      %v681 = vpop.f32.mrb[0].mxu0
      %v682 = vadd.f32 0.0, %v681
      %v683 = vpop.f32.mrb[0].mxu0
      %684 = vmatprep.mubr.bf16.mxu0 0
      %685 = vmatmul.mubr.bf16.gmra.mrb[0].mxu0 %v596
      %v686 = vpop.f32.mrb[0].mxu0
      %v687 = vadd.f32 0.0, %v686
      %v688 = vpop.f32.mrb[0].mxu0
      %v689 = vpop.f32.mrb[0].mxu0
      %v690 = vadd.f32 0.0, %v689
      %v691 = vpop.f32.mrb[0].mxu0
      %692 = vmatprep.mubr.bf16.mxu0 0
      %693 = vmatmul.mubr.bf16.gmra.mrb[0].mxu0 %v599
      %v694 = vpop.f32.mrb[0].mxu0
      %v695 = vadd.f32 0.0, %v694
      %v696 = vpop.f32.mrb[0].mxu0
      %v697 = vpop.f32.mrb[0].mxu0
      %v698 = vadd.f32 0.0, %v697
      %v699 = vpop.f32.mrb[0].mxu0
      %700 = vmatprep.mubr.bf16.mxu0 0
      %701 = vmatmul.mubr.bf16.gmra.mrb[0].mxu0 %v602
      %v702 = vpop.f32.mrb[0].mxu0
      %v703 = vadd.f32 0.0, %v702
      %v704 = vpop.f32.mrb[0].mxu0
      %v705 = vpop.f32.mrb[0].mxu0
      %v706 = vadd.f32 0.0, %v705
      %v707 = vpop.f32.mrb[0].mxu0
      %708 = vmatprep.mubr.bf16.mxu0 0
      %709 = vmatmul.mubr.bf16.gmra.mrb[0].mxu0 %v605
      %v710 = vpop.f32.mrb[0].mxu0
      %v711 = vadd.f32 0.0, %v710
      %v712 = vpop.f32.mrb[0].mxu0
      %v713 = vpop.f32.mrb[0].mxu0
      %v714 = vadd.f32 0.0, %v713
      %v715 = vpop.f32.mrb[0].mxu0
      %716 = vmatprep.mubr.bf16.mxu0 0
      %717 = vmatmul.mubr.bf16.gmra.mrb[0].mxu0 %v608
      %v718 = vpop.f32.mrb[0].mxu0
      %v719 = vadd.f32 0.0, %v718
      %v720 = vpop.f32.mrb[0].mxu0
      %v721 = vpop.f32.mrb[0].mxu0
      %v722 = vadd.f32 0.0, %v721
      %v723 = vpop.f32.mrb[0].mxu0
      %724 = vmatprep.mubr.bf16.mxu0 0
      %725 = vmatmul.mubr.bf16.gmra.mrb[0].mxu0 %v611
      %v726 = vpop.f32.mrb[0].mxu0
      %v727 = vadd.f32 0.0, %v726
      %v728 = vpop.f32.mrb[0].mxu0
      %v729 = vpop.f32.mrb[0].mxu0
      %v730 = vadd.f32 0.0, %v729
      %v731 = vpop.f32.mrb[0].mxu0
      %732 = vmatprep.mubr.bf16.mxu0 0
      %733 = vmatmul.mubr.bf16.gmra.mrb[0].mxu0 %v614
      %v734 = vpop.f32.mrb[0].mxu0
      %v735 = vadd.f32 0.0, %v734
      %v736 = vpop.f32.mrb[0].mxu0
      %v737 = vpop.f32.mrb[0].mxu0
      %v738 = vadd.f32 0.0, %v737
      %v739 = vpop.f32.mrb[0].mxu0
      %740 = vmatprep.mubr.bf16.mxu0 0
      %741 = vmatmul.mubr.bf16.gmra.mrb[0].mxu0 %v617
      %v742 = vpop.f32.mrb[0].mxu0
      %v743 = vadd.f32 0.0, %v742
      %v744 = vpop.f32.mrb[0].mxu0
      %v745 = vpop.f32.mrb[0].mxu0
      %v746 = vadd.f32 0.0, %v745
      %v747 = vpop.f32.mrb[0].mxu0
      %748 = vmatprep.mubr.bf16.mxu0 0
      %749 = vmatmul.mubr.bf16.gmra.mrb[0].mxu0 %v620
      %v750 = vpop.f32.mrb[0].mxu0
      %v751 = vadd.f32 0.0, %v750
      %v752 = vpop.f32.mrb[0].mxu0
      %v753 = vpop.f32.mrb[0].mxu0
      %v754 = vadd.f32 0.0, %v753
      %v755 = vpop.f32.mrb[0].mxu0
      %756 = vmatprep.mubr.bf16.mxu0 0
      %757 = vmatmul.mubr.bf16.gmra.mrb[0].mxu0 %v623
      %v758 = vpop.f32.mrb[0].mxu0
      %v759 = vadd.f32 0.0, %v758
      %v760 = vpop.f32.mrb[0].mxu0
      %v761 = vpop.f32.mrb[0].mxu0
      %v762 = vadd.f32 0.0, %v761
      %v763 = vpop.f32.mrb[0].mxu0
      %764 = vmatprep.mubr.bf16.mxu0 0
      %765 = vmatmul.mubr.bf16.gmra.mrb[0].mxu0 %v626
      %v766 = vpop.f32.mrb[0].mxu0
      %v767 = vadd.f32 0.0, %v766
      %v768 = vpop.f32.mrb[0].mxu0
      %v769 = vpop.f32.mrb[0].mxu0
      %v770 = vadd.f32 0.0, %v769
      %v771 = vpop.f32.mrb[0].mxu0
      %772 = vmatprep.mubr.bf16.mxu0 0
      %773 = vmatmul.mubr.bf16.gmra.mrb[0].mxu0 %v629
      %v774 = vpop.f32.mrb[0].mxu0
      %v775 = vadd.f32 0.0, %v774
      %v776 = vpop.f32.mrb[0].mxu0
      %v777 = vpop.f32.mrb[0].mxu0
      %v778 = vadd.f32 0.0, %v777
      %v779 = vpop.f32.mrb[0].mxu0
      %780 = vmatprep.mubr.bf16.mxu0 0
      %781 = vmatmul.mubr.bf16.gmra.mrb[0].mxu0 %v632
      %v782 = vpop.f32.mrb[0].mxu0
      %v783 = vadd.f32 0.0, %v782
      %v784 = vpop.f32.mrb[0].mxu0
      %v785 = vpop.f32.mrb[0].mxu0
      %v786 = vadd.f32 0.0, %v785
      %v787 = vpop.f32.mrb[0].mxu0
      %788 = vmatprep.mubr.bf16.mxu0 0
      %789 = vmatmul.mubr.bf16.gmra.mrb[0].mxu0 %v635
      %v790 = vpop.f32.mrb[0].mxu0
      %v791 = vadd.f32 0.0, %v790
      %v792 = vpop.f32.mrb[0].mxu0
      %v793 = vpop.f32.mrb[0].mxu0
      %v794 = vadd.f32 0.0, %v793
      %v795 = vpop.f32.mrb[0].mxu0
      %796 = vmatprep.mubr.bf16.mxu0 0
      %797 = vmatmul.mubr.bf16.gmra.mrb[0].mxu0 %v638
      %v798 = vpop.f32.mrb[0].mxu0
      %v799 = vadd.f32 0.0, %v798
      %v800 = vpop.f32.mrb[0].mxu0
      %v801 = vpop.f32.mrb[0].mxu0
      %v802 = vadd.f32 0.0, %v801
      %v803 = vpop.f32.mrb[0].mxu0
      %804 = vdwg.mxu0
      %v805 = vsel %vm591, %v359, 0
      %v807 = vsel %vm591, %v360, 0
      %v809 = vsel %vm591, %v361, 0
      %v811 = vsel %vm591, %v362, 0
      %v813 = vsel %vm591, %v363, 0
      %v815 = vsel %vm591, %v364, 0
      %v817 = vsel %vm591, %v365, 0
      %v819 = vsel %vm591, %v366, 0
      %v821 = vsel %vm591, %v367, 0
      %v823 = vsel %vm591, %v368, 0
      %v825 = vsel %vm591, %v369, 0
      %v827 = vsel %vm591, %v370, 0
      %v829 = vsel %vm591, %v371, 0
      %v831 = vsel %vm591, %v372, 0
      %v833 = vsel %vm591, %v373, 0
      %v835 = vsel %vm591, %v374, 0
      %v838 = vsel %vm640, %v455, 0
      %840 = vmatprep.subr.bf16.mxu0 0
      %841 = vmatpush1.bf16.msra.mxu0 %v838
      %842 = vmatprep.subr.bf16.mxu0 0
      %843 = vmatpush1.bf16.msra.mxu0 0
      %844 = vmatprep.subr.bf16.mxu0 0
      %845 = vmatpush1.bf16.msra.mxu0 0
      %846 = vmatprep.subr.bf16.mxu0 0
      %847 = vmatpush1.bf16.msra.mxu0 0
      %848 = vmatprep.subr.bf16.mxu0 0
      %849 = vmatpush1.bf16.msra.mxu0 0
      %850 = vmatprep.subr.bf16.mxu0 0
      %851 = vmatpush1.bf16.msra.mxu0 0
      %852 = vmatprep.subr.bf16.mxu0 0
      %853 = vmatpush1.bf16.msra.mxu0 0
      %854 = vmatprep.subr.bf16.mxu0 0
      %855 = vmatpush1.bf16.msra.mxu0 0
      %856 = vmatprep.subr.bf16.mxu0 0
      %857 = vmatpush1.bf16.msra.mxu0 0
      %858 = vmatprep.subr.bf16.mxu0 0
      %859 = vmatpush1.bf16.msra.mxu0 0
      %860 = vmatprep.subr.bf16.mxu0 0
      %861 = vmatpush1.bf16.msra.mxu0 0
      %862 = vmatprep.subr.bf16.mxu0 0
      %863 = vmatpush1.bf16.msra.mxu0 0
      %864 = vmatprep.subr.bf16.mxu0 0
      %865 = vmatpush1.bf16.msra.mxu0 0
      %866 = vmatprep.subr.bf16.mxu0 0
      %867 = vmatpush1.bf16.msra.mxu0 0
      %868 = vmatprep.subr.bf16.mxu0 0
      %869 = vmatpush1.bf16.msra.mxu0 0
      %870 = vmatprep.subr.bf16.mxu0 0
      %871 = vmatpush1.bf16.msra.mxu0 0
      %872 = vmatprep.mubr.bf16.mxu0 0
      %873 = vmatmul.mubr.bf16.gmra.mrb[0].mxu0 %v805
      %v874 = vpop.f32.mrb[0].mxu0
      %v875 = vadd.f32 %v679, %v874
      %v876 = vpop.f32.mrb[0].mxu0
      %v877 = vpop.f32.mrb[0].mxu0
      %v878 = vadd.f32 %v682, %v877
      %v879 = vpop.f32.mrb[0].mxu0
      %880 = vmatprep.mubr.bf16.mxu0 0
      %881 = vmatmul.mubr.bf16.gmra.mrb[0].mxu0 %v807
      %v882 = vpop.f32.mrb[0].mxu0
      %v883 = vadd.f32 %v687, %v882
      %v884 = vpop.f32.mrb[0].mxu0
      %v885 = vpop.f32.mrb[0].mxu0
      %v886 = vadd.f32 %v690, %v885
      %v887 = vpop.f32.mrb[0].mxu0
      %888 = vmatprep.mubr.bf16.mxu0 0
      %889 = vmatmul.mubr.bf16.gmra.mrb[0].mxu0 %v809
      %v890 = vpop.f32.mrb[0].mxu0
      %v891 = vadd.f32 %v695, %v890
      %v892 = vpop.f32.mrb[0].mxu0
      %v893 = vpop.f32.mrb[0].mxu0
      %v894 = vadd.f32 %v698, %v893
      %v895 = vpop.f32.mrb[0].mxu0
      %896 = vmatprep.mubr.bf16.mxu0 0
      %897 = vmatmul.mubr.bf16.gmra.mrb[0].mxu0 %v811
      %v898 = vpop.f32.mrb[0].mxu0
      %v899 = vadd.f32 %v703, %v898
      %v900 = vpop.f32.mrb[0].mxu0
      %v901 = vpop.f32.mrb[0].mxu0
      %v902 = vadd.f32 %v706, %v901
      %v903 = vpop.f32.mrb[0].mxu0
      %904 = vmatprep.mubr.bf16.mxu0 0
      %905 = vmatmul.mubr.bf16.gmra.mrb[0].mxu0 %v813
      %v906 = vpop.f32.mrb[0].mxu0
      %v907 = vadd.f32 %v711, %v906
      %v908 = vpop.f32.mrb[0].mxu0
      %v909 = vpop.f32.mrb[0].mxu0
      %v910 = vadd.f32 %v714, %v909
      %v911 = vpop.f32.mrb[0].mxu0
      %912 = vmatprep.mubr.bf16.mxu0 0
      %913 = vmatmul.mubr.bf16.gmra.mrb[0].mxu0 %v815
      %v914 = vpop.f32.mrb[0].mxu0
      %v915 = vadd.f32 %v719, %v914
      %v916 = vpop.f32.mrb[0].mxu0
      %v917 = vpop.f32.mrb[0].mxu0
      %v918 = vadd.f32 %v722, %v917
      %v919 = vpop.f32.mrb[0].mxu0
      %920 = vmatprep.mubr.bf16.mxu0 0
      %921 = vmatmul.mubr.bf16.gmra.mrb[0].mxu0 %v817
      %v922 = vpop.f32.mrb[0].mxu0
      %v923 = vadd.f32 %v727, %v922
      %v924 = vpop.f32.mrb[0].mxu0
      %v925 = vpop.f32.mrb[0].mxu0
      %v926 = vadd.f32 %v730, %v925
      %v927 = vpop.f32.mrb[0].mxu0
      %928 = vmatprep.mubr.bf16.mxu0 0
      %929 = vmatmul.mubr.bf16.gmra.mrb[0].mxu0 %v819
      %v930 = vpop.f32.mrb[0].mxu0
      %v931 = vadd.f32 %v735, %v930
      %v932 = vpop.f32.mrb[0].mxu0
      %v933 = vpop.f32.mrb[0].mxu0
      %v934 = vadd.f32 %v738, %v933
      %v935 = vpop.f32.mrb[0].mxu0
      %936 = vmatprep.mubr.bf16.mxu0 0
      %937 = vmatmul.mubr.bf16.gmra.mrb[0].mxu0 %v821
      %v938 = vpop.f32.mrb[0].mxu0
      %v939 = vadd.f32 %v743, %v938
      %v940 = vpop.f32.mrb[0].mxu0
      %v941 = vpop.f32.mrb[0].mxu0
      %v942 = vadd.f32 %v746, %v941
      %v943 = vpop.f32.mrb[0].mxu0
      %944 = vmatprep.mubr.bf16.mxu0 0
      %945 = vmatmul.mubr.bf16.gmra.mrb[0].mxu0 %v823
      %v946 = vpop.f32.mrb[0].mxu0
      %v947 = vadd.f32 %v751, %v946
      %v948 = vpop.f32.mrb[0].mxu0
      %v949 = vpop.f32.mrb[0].mxu0
      %v950 = vadd.f32 %v754, %v949
      %v951 = vpop.f32.mrb[0].mxu0
      %952 = vmatprep.mubr.bf16.mxu0 0
      %953 = vmatmul.mubr.bf16.gmra.mrb[0].mxu0 %v825
      %v954 = vpop.f32.mrb[0].mxu0
      %v955 = vadd.f32 %v759, %v954
      %v956 = vpop.f32.mrb[0].mxu0
      %v957 = vpop.f32.mrb[0].mxu0
      %v958 = vadd.f32 %v762, %v957
      %v959 = vpop.f32.mrb[0].mxu0
      %960 = vmatprep.mubr.bf16.mxu0 0
      %961 = vmatmul.mubr.bf16.gmra.mrb[0].mxu0 %v827
      %v962 = vpop.f32.mrb[0].mxu0
      %v963 = vadd.f32 %v767, %v962
      %v964 = vpop.f32.mrb[0].mxu0
      %v965 = vpop.f32.mrb[0].mxu0
      %v966 = vadd.f32 %v770, %v965
      %v967 = vpop.f32.mrb[0].mxu0
      %968 = vmatprep.mubr.bf16.mxu0 0
      %969 = vmatmul.mubr.bf16.gmra.mrb[0].mxu0 %v829
      %v970 = vpop.f32.mrb[0].mxu0
      %v971 = vadd.f32 %v775, %v970
      %v972 = vpop.f32.mrb[0].mxu0
      %v973 = vpop.f32.mrb[0].mxu0
      %v974 = vadd.f32 %v778, %v973
      %v975 = vpop.f32.mrb[0].mxu0
      %976 = vmatprep.mubr.bf16.mxu0 0
      %977 = vmatmul.mubr.bf16.gmra.mrb[0].mxu0 %v831
      %v978 = vpop.f32.mrb[0].mxu0
      %v979 = vadd.f32 %v783, %v978
      %v980 = vpop.f32.mrb[0].mxu0
      %v981 = vpop.f32.mrb[0].mxu0
      %v982 = vadd.f32 %v786, %v981
      %v983 = vpop.f32.mrb[0].mxu0
      %984 = vmatprep.mubr.bf16.mxu0 0
      %985 = vmatmul.mubr.bf16.gmra.mrb[0].mxu0 %v833
      %v986 = vpop.f32.mrb[0].mxu0
      %v987 = vadd.f32 %v791, %v986
      %v988 = vpop.f32.mrb[0].mxu0
      %v989 = vpop.f32.mrb[0].mxu0
      %v990 = vadd.f32 %v794, %v989
      %v991 = vpop.f32.mrb[0].mxu0
      %992 = vmatprep.mubr.bf16.mxu0 0
      %993 = vmatmul.mubr.bf16.gmra.mrb[0].mxu0 %v835
      %v994 = vpop.f32.mrb[0].mxu0
      %v995 = vadd.f32 %v799, %v994
      %v996 = vpop.f32.mrb[0].mxu0
      %v997 = vpop.f32.mrb[0].mxu0
      %v998 = vadd.f32 %v802, %v997
      %v999 = vpop.f32.mrb[0].mxu0
      %1000 = vdwg.mxu0
      %s1001 = scalar_lea.vmem %s2, 8
      %v1002 = vld [vmem:[%s1001] sm:$0xf]
      %vm1003 = vcmask 1046528
      %v1004 = vrot.slane %v359, 1
      %v1005 = vrot.slane %v360, 1
      %v1006 = vsel %vm1003, %v1004, %v1005
      %v1007 = vrot.slane %v361, 1
      %v1008 = vsel %vm1003, %v1005, %v1007
      %v1009 = vrot.slane %v362, 1
      %v1010 = vsel %vm1003, %v1007, %v1009
      %v1011 = vrot.slane %v363, 1
      %v1012 = vsel %vm1003, %v1009, %v1011
      %v1013 = vrot.slane %v364, 1
      %v1014 = vsel %vm1003, %v1011, %v1013
      %v1015 = vrot.slane %v365, 1
      %v1016 = vsel %vm1003, %v1013, %v1015
      %v1017 = vrot.slane %v366, 1
      %v1018 = vsel %vm1003, %v1015, %v1017
      %v1019 = vrot.slane %v367, 1
      %v1020 = vsel %vm1003, %v1017, %v1019
      %v1021 = vrot.slane %v368, 1
      %v1022 = vsel %vm1003, %v1019, %v1021
      %v1023 = vrot.slane %v369, 1
      %v1024 = vsel %vm1003, %v1021, %v1023
      %v1025 = vrot.slane %v370, 1
      %v1026 = vsel %vm1003, %v1023, %v1025
      %v1027 = vrot.slane %v371, 1
      %v1028 = vsel %vm1003, %v1025, %v1027
      %v1029 = vrot.slane %v372, 1
      %v1030 = vsel %vm1003, %v1027, %v1029
      %v1031 = vrot.slane %v373, 1
      %v1032 = vsel %vm1003, %v1029, %v1031
      %v1033 = vrot.slane %v374, 1
      %v1034 = vsel %vm1003, %v1031, %v1033
      %v1035 = vrot.slane %v439, 1
      %v1036 = vsel %vm1003, %v1033, %v1035
      %v1038 = vsel %vm591, %v1006, 0
      %v1041 = vsel %vm591, %v1008, 0
      %v1044 = vsel %vm591, %v1010, 0
      %v1047 = vsel %vm591, %v1012, 0
      %v1050 = vsel %vm591, %v1014, 0
      %v1053 = vsel %vm591, %v1016, 0
      %v1056 = vsel %vm591, %v1018, 0
      %v1059 = vsel %vm591, %v1020, 0
      %v1062 = vsel %vm591, %v1022, 0
      %v1065 = vsel %vm591, %v1024, 0
      %v1068 = vsel %vm591, %v1026, 0
      %v1071 = vsel %vm591, %v1028, 0
      %v1074 = vsel %vm591, %v1030, 0
      %v1077 = vsel %vm591, %v1032, 0
      %v1080 = vsel %vm591, %v1034, 0
      %v1083 = vsel %vm591, %v1036, 0
      %v1086 = vsel %vm640, %v1002, 0
      %1088 = vmatprep.subr.bf16.mxu0 0
      %1089 = vmatpush1.bf16.msra.mxu0 %v1086
      %1090 = vmatprep.subr.bf16.mxu0 0
      %1091 = vmatpush1.bf16.msra.mxu0 0
      %1092 = vmatprep.subr.bf16.mxu0 0
      %1093 = vmatpush1.bf16.msra.mxu0 0
      %1094 = vmatprep.subr.bf16.mxu0 0
      %1095 = vmatpush1.bf16.msra.mxu0 0
      %1096 = vmatprep.subr.bf16.mxu0 0
      %1097 = vmatpush1.bf16.msra.mxu0 0
      %1098 = vmatprep.subr.bf16.mxu0 0
      %1099 = vmatpush1.bf16.msra.mxu0 0
      %1100 = vmatprep.subr.bf16.mxu0 0
      %1101 = vmatpush1.bf16.msra.mxu0 0
      %1102 = vmatprep.subr.bf16.mxu0 0
      %1103 = vmatpush1.bf16.msra.mxu0 0
      %1104 = vmatprep.subr.bf16.mxu0 0
      %1105 = vmatpush1.bf16.msra.mxu0 0
      %1106 = vmatprep.subr.bf16.mxu0 0
      %1107 = vmatpush1.bf16.msra.mxu0 0
      %1108 = vmatprep.subr.bf16.mxu0 0
      %1109 = vmatpush1.bf16.msra.mxu0 0
      %1110 = vmatprep.subr.bf16.mxu0 0
      %1111 = vmatpush1.bf16.msra.mxu0 0
      %1112 = vmatprep.subr.bf16.mxu0 0
      %1113 = vmatpush1.bf16.msra.mxu0 0
      %1114 = vmatprep.subr.bf16.mxu0 0
      %1115 = vmatpush1.bf16.msra.mxu0 0
      %1116 = vmatprep.subr.bf16.mxu0 0
      %1117 = vmatpush1.bf16.msra.mxu0 0
      %1118 = vmatprep.subr.bf16.mxu0 0
      %1119 = vmatpush1.bf16.msra.mxu0 0
      %1120 = vmatprep.mubr.bf16.mxu0 0
      %1121 = vmatmul.mubr.bf16.gmra.mrb[0].mxu0 %v1038
      %v1122 = vpop.f32.mrb[0].mxu0
      %v1123 = vadd.f32 0.0, %v1122
      %v1124 = vpop.f32.mrb[0].mxu0
      %v1125 = vpop.f32.mrb[0].mxu0
      %v1126 = vadd.f32 0.0, %v1125
      %v1127 = vpop.f32.mrb[0].mxu0
      %1128 = vmatprep.mubr.bf16.mxu0 0
      %1129 = vmatmul.mubr.bf16.gmra.mrb[0].mxu0 %v1041
      %v1130 = vpop.f32.mrb[0].mxu0
      %v1131 = vadd.f32 0.0, %v1130
      %v1132 = vpop.f32.mrb[0].mxu0
      %v1133 = vpop.f32.mrb[0].mxu0
      %v1134 = vadd.f32 0.0, %v1133
      %v1135 = vpop.f32.mrb[0].mxu0
      %1136 = vmatprep.mubr.bf16.mxu0 0
      %1137 = vmatmul.mubr.bf16.gmra.mrb[0].mxu0 %v1044
      %v1138 = vpop.f32.mrb[0].mxu0
      %v1139 = vadd.f32 0.0, %v1138
      %v1140 = vpop.f32.mrb[0].mxu0
      %v1141 = vpop.f32.mrb[0].mxu0
      %v1142 = vadd.f32 0.0, %v1141
      %v1143 = vpop.f32.mrb[0].mxu0
      %1144 = vmatprep.mubr.bf16.mxu0 0
      %1145 = vmatmul.mubr.bf16.gmra.mrb[0].mxu0 %v1047
      %v1146 = vpop.f32.mrb[0].mxu0
      %v1147 = vadd.f32 0.0, %v1146
      %v1148 = vpop.f32.mrb[0].mxu0
      %v1149 = vpop.f32.mrb[0].mxu0
      %v1150 = vadd.f32 0.0, %v1149
      %v1151 = vpop.f32.mrb[0].mxu0
      %1152 = vmatprep.mubr.bf16.mxu0 0
      %1153 = vmatmul.mubr.bf16.gmra.mrb[0].mxu0 %v1050
      %v1154 = vpop.f32.mrb[0].mxu0
      %v1155 = vadd.f32 0.0, %v1154
      %v1156 = vpop.f32.mrb[0].mxu0
      %v1157 = vpop.f32.mrb[0].mxu0
      %v1158 = vadd.f32 0.0, %v1157
      %v1159 = vpop.f32.mrb[0].mxu0
      %1160 = vmatprep.mubr.bf16.mxu0 0
      %1161 = vmatmul.mubr.bf16.gmra.mrb[0].mxu0 %v1053
      %v1162 = vpop.f32.mrb[0].mxu0
      %v1163 = vadd.f32 0.0, %v1162
      %v1164 = vpop.f32.mrb[0].mxu0
      %v1165 = vpop.f32.mrb[0].mxu0
      %v1166 = vadd.f32 0.0, %v1165
      %v1167 = vpop.f32.mrb[0].mxu0
      %1168 = vmatprep.mubr.bf16.mxu0 0
      %1169 = vmatmul.mubr.bf16.gmra.mrb[0].mxu0 %v1056
      %v1170 = vpop.f32.mrb[0].mxu0
      %v1171 = vadd.f32 0.0, %v1170
      %v1172 = vpop.f32.mrb[0].mxu0
      %v1173 = vpop.f32.mrb[0].mxu0
      %v1174 = vadd.f32 0.0, %v1173
      %v1175 = vpop.f32.mrb[0].mxu0
      %1176 = vmatprep.mubr.bf16.mxu0 0
      %1177 = vmatmul.mubr.bf16.gmra.mrb[0].mxu0 %v1059
      %v1178 = vpop.f32.mrb[0].mxu0
      %v1179 = vadd.f32 0.0, %v1178
      %v1180 = vpop.f32.mrb[0].mxu0
      %v1181 = vpop.f32.mrb[0].mxu0
      %v1182 = vadd.f32 0.0, %v1181
      %v1183 = vpop.f32.mrb[0].mxu0
      %1184 = vmatprep.mubr.bf16.mxu0 0
      %1185 = vmatmul.mubr.bf16.gmra.mrb[0].mxu0 %v1062
      %v1186 = vpop.f32.mrb[0].mxu0
      %v1187 = vadd.f32 0.0, %v1186
      %v1188 = vpop.f32.mrb[0].mxu0
      %v1189 = vpop.f32.mrb[0].mxu0
      %v1190 = vadd.f32 0.0, %v1189
      %v1191 = vpop.f32.mrb[0].mxu0
      %1192 = vmatprep.mubr.bf16.mxu0 0
      %1193 = vmatmul.mubr.bf16.gmra.mrb[0].mxu0 %v1065
      %v1194 = vpop.f32.mrb[0].mxu0
      %v1195 = vadd.f32 0.0, %v1194
      %v1196 = vpop.f32.mrb[0].mxu0
      %v1197 = vpop.f32.mrb[0].mxu0
      %v1198 = vadd.f32 0.0, %v1197
      %v1199 = vpop.f32.mrb[0].mxu0
      %1200 = vmatprep.mubr.bf16.mxu0 0
      %1201 = vmatmul.mubr.bf16.gmra.mrb[0].mxu0 %v1068
      %v1202 = vpop.f32.mrb[0].mxu0
      %v1203 = vadd.f32 0.0, %v1202
      %v1204 = vpop.f32.mrb[0].mxu0
      %v1205 = vpop.f32.mrb[0].mxu0
      %v1206 = vadd.f32 0.0, %v1205
      %v1207 = vpop.f32.mrb[0].mxu0
      %1208 = vmatprep.mubr.bf16.mxu0 0
      %1209 = vmatmul.mubr.bf16.gmra.mrb[0].mxu0 %v1071
      %v1210 = vpop.f32.mrb[0].mxu0
      %v1211 = vadd.f32 0.0, %v1210
      %v1212 = vpop.f32.mrb[0].mxu0
      %v1213 = vpop.f32.mrb[0].mxu0
      %v1214 = vadd.f32 0.0, %v1213
      %v1215 = vpop.f32.mrb[0].mxu0
      %1216 = vmatprep.mubr.bf16.mxu0 0
      %1217 = vmatmul.mubr.bf16.gmra.mrb[0].mxu0 %v1074
      %v1218 = vpop.f32.mrb[0].mxu0
      %v1219 = vadd.f32 0.0, %v1218
      %v1220 = vpop.f32.mrb[0].mxu0
      %v1221 = vpop.f32.mrb[0].mxu0
      %v1222 = vadd.f32 0.0, %v1221
      %v1223 = vpop.f32.mrb[0].mxu0
      %1224 = vmatprep.mubr.bf16.mxu0 0
      %1225 = vmatmul.mubr.bf16.gmra.mrb[0].mxu0 %v1077
      %v1226 = vpop.f32.mrb[0].mxu0
      %v1227 = vadd.f32 0.0, %v1226
      %v1228 = vpop.f32.mrb[0].mxu0
      %v1229 = vpop.f32.mrb[0].mxu0
      %v1230 = vadd.f32 0.0, %v1229
      %v1231 = vpop.f32.mrb[0].mxu0
      %1232 = vmatprep.mubr.bf16.mxu0 0
      %1233 = vmatmul.mubr.bf16.gmra.mrb[0].mxu0 %v1080
      %v1234 = vpop.f32.mrb[0].mxu0
      %v1235 = vadd.f32 0.0, %v1234
      %v1236 = vpop.f32.mrb[0].mxu0
      %v1237 = vpop.f32.mrb[0].mxu0
      %v1238 = vadd.f32 0.0, %v1237
      %v1239 = vpop.f32.mrb[0].mxu0
      %1240 = vmatprep.mubr.bf16.mxu0 0
      %1241 = vmatmul.mubr.bf16.gmra.mrb[0].mxu0 %v1083
      %v1242 = vpop.f32.mrb[0].mxu0
      %v1243 = vadd.f32 0.0, %v1242
      %v1244 = vpop.f32.mrb[0].mxu0
      %v1245 = vpop.f32.mrb[0].mxu0
      %v1246 = vadd.f32 0.0, %v1245
      %v1247 = vpop.f32.mrb[0].mxu0
      %1248 = vdwg.mxu0
      %v1249 = vadd.f32 %v875, %v1123
      %v1250 = vadd.f32 %v878, %v1126
      %v1251 = vadd.f32 %v883, %v1131
      %v1252 = vadd.f32 %v886, %v1134
      %v1253 = vadd.f32 %v891, %v1139
      %v1254 = vadd.f32 %v894, %v1142
      %v1255 = vadd.f32 %v899, %v1147
      %v1256 = vadd.f32 %v902, %v1150
      %v1257 = vadd.f32 %v907, %v1155
      %v1258 = vadd.f32 %v910, %v1158
      %v1259 = vadd.f32 %v915, %v1163
      %v1260 = vadd.f32 %v918, %v1166
      %v1261 = vadd.f32 %v923, %v1171
      %v1262 = vadd.f32 %v926, %v1174
      %v1263 = vadd.f32 %v931, %v1179
      %v1264 = vadd.f32 %v934, %v1182
      %v1265 = vadd.f32 %v939, %v1187
      %v1266 = vadd.f32 %v942, %v1190
      %v1267 = vadd.f32 %v947, %v1195
      %v1268 = vadd.f32 %v950, %v1198
      %v1269 = vadd.f32 %v955, %v1203
      %v1270 = vadd.f32 %v958, %v1206
      %v1271 = vadd.f32 %v963, %v1211
      %v1272 = vadd.f32 %v966, %v1214
      %v1273 = vadd.f32 %v971, %v1219
      %v1274 = vadd.f32 %v974, %v1222
      %v1275 = vadd.f32 %v979, %v1227
      %v1276 = vadd.f32 %v982, %v1230
      %v1277 = vadd.f32 %v987, %v1235
      %v1278 = vadd.f32 %v990, %v1238
      %v1279 = vadd.f32 %v995, %v1243
      %v1280 = vadd.f32 %v998, %v1246
      %s1281 = scalar_lea.vmem %s2, 12
      %v1282 = vld [vmem:[%s1281] sm:$0xf]
      %vm1283 = vsmask.f32 2304
      %v1284 = vrot.slane %v519, 5
      %v1285 = vrot.slane %v515, 6
      %v1286 = vor.u32 %v1284, %v1285
      %v1287 = vrot.slane %v527, 5
      %v1288 = vrot.slane %v523, 6
      %v1289 = vor.u32 %v1287, %v1288
      %v1290 = vsel %vm1283, %v1286, %v1289
      %v1291 = vrot.slane %v535, 5
      %v1292 = vrot.slane %v531, 6
      %v1293 = vor.u32 %v1291, %v1292
      %v1294 = vsel %vm1283, %v1289, %v1293
      %v1295 = vrot.slane %v543, 5
      %v1296 = vrot.slane %v539, 6
      %v1297 = vor.u32 %v1295, %v1296
      %v1298 = vsel %vm1283, %v1293, %v1297
      %v1299 = vrot.slane %v551, 5
      %v1300 = vrot.slane %v547, 6
      %v1301 = vor.u32 %v1299, %v1300
      %v1302 = vsel %vm1283, %v1297, %v1301
      %v1303 = vrot.slane %v559, 5
      %v1304 = vrot.slane %v555, 6
      %v1305 = vor.u32 %v1303, %v1304
      %v1306 = vsel %vm1283, %v1301, %v1305
      %v1307 = vrot.slane %v567, 5
      %v1308 = vrot.slane %v563, 6
      %v1309 = vor.u32 %v1307, %v1308
      %v1310 = vsel %vm1283, %v1305, %v1309
      %v1311 = vrot.slane %v575, 5
      %v1312 = vrot.slane %v571, 6
      %v1313 = vor.u32 %v1311, %v1312
      %v1314 = vsel %vm1283, %v1309, %v1313
      %v1315 = vrot.slane %v583, 5
      %v1316 = vrot.slane %v579, 6
      %v1317 = vor.u32 %v1315, %v1316
      %v1318 = vsel %vm1283, %v1313, %v1317
      %v1319 = vshrl.u32 %v439, 16
      %v1321 = vrot.slane %v1319, 5
      %v1322 = vrot.slane %v587, 6
      %v1323 = vor.u32 %v1321, %v1322
      %v1324 = vsel %vm1283, %v1317, %v1323
      %v1326 = vshrl.u32 %v440, 16
      %v1328 = vrot.slane %v1326, 5
      %v1329 = vshll.u32 %v440, 16
      %v1331 = vrot.slane %v1329, 6
      %v1332 = vor.u32 %v1328, %v1331
      %v1333 = vsel %vm1283, %v1323, %v1332
      %v1335 = vshrl.u32 %v441, 16
      %v1337 = vrot.slane %v1335, 5
      %v1338 = vshll.u32 %v441, 16
      %v1340 = vrot.slane %v1338, 6
      %v1341 = vor.u32 %v1337, %v1340
      %v1342 = vsel %vm1283, %v1332, %v1341
      %v1344 = vshrl.u32 %v442, 16
      %v1346 = vrot.slane %v1344, 5
      %v1347 = vshll.u32 %v442, 16
      %v1349 = vrot.slane %v1347, 6
      %v1350 = vor.u32 %v1346, %v1349
      %v1351 = vsel %vm1283, %v1341, %v1350
      %v1353 = vshrl.u32 %v443, 16
      %v1355 = vrot.slane %v1353, 5
      %v1356 = vshll.u32 %v443, 16
      %v1358 = vrot.slane %v1356, 6
      %v1359 = vor.u32 %v1355, %v1358
      %v1360 = vsel %vm1283, %v1350, %v1359
      %v1362 = vshrl.u32 %v444, 16
      %v1364 = vrot.slane %v1362, 5
      %v1365 = vshll.u32 %v444, 16
      %v1367 = vrot.slane %v1365, 6
      %v1368 = vor.u32 %v1364, %v1367
      %v1369 = vsel %vm1283, %v1359, %v1368
      %v1371 = vshrl.u32 %v445, 16
      %v1373 = vrot.slane %v1371, 5
      %v1374 = vshll.u32 %v445, 16
      %v1376 = vrot.slane %v1374, 6
      %v1377 = vor.u32 %v1373, %v1376
      %v1378 = vsel %vm1283, %v1368, %v1377
      %v1380 = vshrl.u32 %v446, 16
      %v1382 = vrot.slane %v1380, 5
      %v1383 = vshll.u32 %v446, 16
      %v1385 = vrot.slane %v1383, 6
      %v1386 = vor.u32 %v1382, %v1385
      %v1387 = vsel %vm1283, %v1377, %v1386
      %v1389 = vsel %vm591, %v1290, 0
      %v1392 = vsel %vm591, %v1294, 0
      %v1395 = vsel %vm591, %v1298, 0
      %v1398 = vsel %vm591, %v1302, 0
      %v1401 = vsel %vm591, %v1306, 0
      %v1404 = vsel %vm591, %v1310, 0
      %v1407 = vsel %vm591, %v1314, 0
      %v1410 = vsel %vm591, %v1318, 0
      %v1413 = vsel %vm591, %v1324, 0
      %v1416 = vsel %vm591, %v1333, 0
      %v1419 = vsel %vm591, %v1342, 0
      %v1422 = vsel %vm591, %v1351, 0
      %v1425 = vsel %vm591, %v1360, 0
      %v1428 = vsel %vm591, %v1369, 0
      %v1431 = vsel %vm591, %v1378, 0
      %v1434 = vsel %vm591, %v1387, 0
      %v1437 = vsel %vm640, %v1282, 0
      %1439 = vmatprep.subr.bf16.mxu0 0
      %1440 = vmatpush1.bf16.msra.mxu0 %v1437
      %1441 = vmatprep.subr.bf16.mxu0 0
      %1442 = vmatpush1.bf16.msra.mxu0 0
      %1443 = vmatprep.subr.bf16.mxu0 0
      %1444 = vmatpush1.bf16.msra.mxu0 0
      %1445 = vmatprep.subr.bf16.mxu0 0
      %1446 = vmatpush1.bf16.msra.mxu0 0
      %1447 = vmatprep.subr.bf16.mxu0 0
      %1448 = vmatpush1.bf16.msra.mxu0 0
      %1449 = vmatprep.subr.bf16.mxu0 0
      %1450 = vmatpush1.bf16.msra.mxu0 0
      %1451 = vmatprep.subr.bf16.mxu0 0
      %1452 = vmatpush1.bf16.msra.mxu0 0
      %1453 = vmatprep.subr.bf16.mxu0 0
      %1454 = vmatpush1.bf16.msra.mxu0 0
      %1455 = vmatprep.subr.bf16.mxu0 0
      %1456 = vmatpush1.bf16.msra.mxu0 0
      %1457 = vmatprep.subr.bf16.mxu0 0
      %1458 = vmatpush1.bf16.msra.mxu0 0
      %1459 = vmatprep.subr.bf16.mxu0 0
      %1460 = vmatpush1.bf16.msra.mxu0 0
      %1461 = vmatprep.subr.bf16.mxu0 0
      %1462 = vmatpush1.bf16.msra.mxu0 0
      %1463 = vmatprep.subr.bf16.mxu0 0
      %1464 = vmatpush1.bf16.msra.mxu0 0
      %1465 = vmatprep.subr.bf16.mxu0 0
      %1466 = vmatpush1.bf16.msra.mxu0 0
      %1467 = vmatprep.subr.bf16.mxu0 0
      %1468 = vmatpush1.bf16.msra.mxu0 0
      %1469 = vmatprep.subr.bf16.mxu0 0
      %1470 = vmatpush1.bf16.msra.mxu0 0
      %1471 = vmatprep.mubr.bf16.mxu0 0
      %1472 = vmatmul.mubr.bf16.gmra.mrb[0].mxu0 %v1389
      %v1473 = vpop.f32.mrb[0].mxu0
      %v1474 = vadd.f32 0.0, %v1473
      %v1475 = vpop.f32.mrb[0].mxu0
      %v1476 = vpop.f32.mrb[0].mxu0
      %v1477 = vadd.f32 0.0, %v1476
      %v1478 = vpop.f32.mrb[0].mxu0
      %1479 = vmatprep.mubr.bf16.mxu0 0
      %1480 = vmatmul.mubr.bf16.gmra.mrb[0].mxu0 %v1392
      %v1481 = vpop.f32.mrb[0].mxu0
      %v1482 = vadd.f32 0.0, %v1481
      %v1483 = vpop.f32.mrb[0].mxu0
      %v1484 = vpop.f32.mrb[0].mxu0
      %v1485 = vadd.f32 0.0, %v1484
      %v1486 = vpop.f32.mrb[0].mxu0
      %1487 = vmatprep.mubr.bf16.mxu0 0
      %1488 = vmatmul.mubr.bf16.gmra.mrb[0].mxu0 %v1395
      %v1489 = vpop.f32.mrb[0].mxu0
      %v1490 = vadd.f32 0.0, %v1489
      %v1491 = vpop.f32.mrb[0].mxu0
      %v1492 = vpop.f32.mrb[0].mxu0
      %v1493 = vadd.f32 0.0, %v1492
      %v1494 = vpop.f32.mrb[0].mxu0
      %1495 = vmatprep.mubr.bf16.mxu0 0
      %1496 = vmatmul.mubr.bf16.gmra.mrb[0].mxu0 %v1398
      %v1497 = vpop.f32.mrb[0].mxu0
      %v1498 = vadd.f32 0.0, %v1497
      %v1499 = vpop.f32.mrb[0].mxu0
      %v1500 = vpop.f32.mrb[0].mxu0
      %v1501 = vadd.f32 0.0, %v1500
      %v1502 = vpop.f32.mrb[0].mxu0
      %1503 = vmatprep.mubr.bf16.mxu0 0
      %1504 = vmatmul.mubr.bf16.gmra.mrb[0].mxu0 %v1401
      %v1505 = vpop.f32.mrb[0].mxu0
      %v1506 = vadd.f32 0.0, %v1505
      %v1507 = vpop.f32.mrb[0].mxu0
      %v1508 = vpop.f32.mrb[0].mxu0
      %v1509 = vadd.f32 0.0, %v1508
      %v1510 = vpop.f32.mrb[0].mxu0
      %1511 = vmatprep.mubr.bf16.mxu0 0
      %1512 = vmatmul.mubr.bf16.gmra.mrb[0].mxu0 %v1404
      %v1513 = vpop.f32.mrb[0].mxu0
      %v1514 = vadd.f32 0.0, %v1513
      %v1515 = vpop.f32.mrb[0].mxu0
      %v1516 = vpop.f32.mrb[0].mxu0
      %v1517 = vadd.f32 0.0, %v1516
      %v1518 = vpop.f32.mrb[0].mxu0
      %1519 = vmatprep.mubr.bf16.mxu0 0
      %1520 = vmatmul.mubr.bf16.gmra.mrb[0].mxu0 %v1407
      %v1521 = vpop.f32.mrb[0].mxu0
      %v1522 = vadd.f32 0.0, %v1521
      %v1523 = vpop.f32.mrb[0].mxu0
      %v1524 = vpop.f32.mrb[0].mxu0
      %v1525 = vadd.f32 0.0, %v1524
      %v1526 = vpop.f32.mrb[0].mxu0
      %1527 = vmatprep.mubr.bf16.mxu0 0
      %1528 = vmatmul.mubr.bf16.gmra.mrb[0].mxu0 %v1410
      %v1529 = vpop.f32.mrb[0].mxu0
      %v1530 = vadd.f32 0.0, %v1529
      %v1531 = vpop.f32.mrb[0].mxu0
      %v1532 = vpop.f32.mrb[0].mxu0
      %v1533 = vadd.f32 0.0, %v1532
      %v1534 = vpop.f32.mrb[0].mxu0
      %1535 = vmatprep.mubr.bf16.mxu0 0
      %1536 = vmatmul.mubr.bf16.gmra.mrb[0].mxu0 %v1413
      %v1537 = vpop.f32.mrb[0].mxu0
      %v1538 = vadd.f32 0.0, %v1537
      %v1539 = vpop.f32.mrb[0].mxu0
      %v1540 = vpop.f32.mrb[0].mxu0
      %v1541 = vadd.f32 0.0, %v1540
      %v1542 = vpop.f32.mrb[0].mxu0
      %1543 = vmatprep.mubr.bf16.mxu0 0
      %1544 = vmatmul.mubr.bf16.gmra.mrb[0].mxu0 %v1416
      %v1545 = vpop.f32.mrb[0].mxu0
      %v1546 = vadd.f32 0.0, %v1545
      %v1547 = vpop.f32.mrb[0].mxu0
      %v1548 = vpop.f32.mrb[0].mxu0
      %v1549 = vadd.f32 0.0, %v1548
      %v1550 = vpop.f32.mrb[0].mxu0
      %1551 = vmatprep.mubr.bf16.mxu0 0
      %1552 = vmatmul.mubr.bf16.gmra.mrb[0].mxu0 %v1419
      %v1553 = vpop.f32.mrb[0].mxu0
      %v1554 = vadd.f32 0.0, %v1553
      %v1555 = vpop.f32.mrb[0].mxu0
      %v1556 = vpop.f32.mrb[0].mxu0
      %v1557 = vadd.f32 0.0, %v1556
      %v1558 = vpop.f32.mrb[0].mxu0
      %1559 = vmatprep.mubr.bf16.mxu0 0
      %1560 = vmatmul.mubr.bf16.gmra.mrb[0].mxu0 %v1422
      %v1561 = vpop.f32.mrb[0].mxu0
      %v1562 = vadd.f32 0.0, %v1561
      %v1563 = vpop.f32.mrb[0].mxu0
      %v1564 = vpop.f32.mrb[0].mxu0
      %v1565 = vadd.f32 0.0, %v1564
      %v1566 = vpop.f32.mrb[0].mxu0
      %1567 = vmatprep.mubr.bf16.mxu0 0
      %1568 = vmatmul.mubr.bf16.gmra.mrb[0].mxu0 %v1425
      %v1569 = vpop.f32.mrb[0].mxu0
      %v1570 = vadd.f32 0.0, %v1569
      %v1571 = vpop.f32.mrb[0].mxu0
      %v1572 = vpop.f32.mrb[0].mxu0
      %v1573 = vadd.f32 0.0, %v1572
      %v1574 = vpop.f32.mrb[0].mxu0
      %1575 = vmatprep.mubr.bf16.mxu0 0
      %1576 = vmatmul.mubr.bf16.gmra.mrb[0].mxu0 %v1428
      %v1577 = vpop.f32.mrb[0].mxu0
      %v1578 = vadd.f32 0.0, %v1577
      %v1579 = vpop.f32.mrb[0].mxu0
      %v1580 = vpop.f32.mrb[0].mxu0
      %v1581 = vadd.f32 0.0, %v1580
      %v1582 = vpop.f32.mrb[0].mxu0
      %1583 = vmatprep.mubr.bf16.mxu0 0
      %1584 = vmatmul.mubr.bf16.gmra.mrb[0].mxu0 %v1431
      %v1585 = vpop.f32.mrb[0].mxu0
      %v1586 = vadd.f32 0.0, %v1585
      %v1587 = vpop.f32.mrb[0].mxu0
      %v1588 = vpop.f32.mrb[0].mxu0
      %v1589 = vadd.f32 0.0, %v1588
      %v1590 = vpop.f32.mrb[0].mxu0
      %1591 = vmatprep.mubr.bf16.mxu0 0
      %1592 = vmatmul.mubr.bf16.gmra.mrb[0].mxu0 %v1434
      %v1593 = vpop.f32.mrb[0].mxu0
      %v1594 = vadd.f32 0.0, %v1593
      %v1595 = vpop.f32.mrb[0].mxu0
      %v1596 = vpop.f32.mrb[0].mxu0
      %v1597 = vadd.f32 0.0, %v1596
      %v1598 = vpop.f32.mrb[0].mxu0
      %1599 = vdwg.mxu0
      %v1600 = vadd.f32 %v1249, %v1474
      %v1601 = vadd.f32 %v1250, %v1477
      %v1602 = vadd.f32 %v1251, %v1482
      %v1603 = vadd.f32 %v1252, %v1485
      %v1604 = vadd.f32 %v1253, %v1490
      %v1605 = vadd.f32 %v1254, %v1493
      %v1606 = vadd.f32 %v1255, %v1498
      %v1607 = vadd.f32 %v1256, %v1501
      %v1608 = vadd.f32 %v1257, %v1506
      %v1609 = vadd.f32 %v1258, %v1509
      %v1610 = vadd.f32 %v1259, %v1514
      %v1611 = vadd.f32 %v1260, %v1517
      %v1612 = vadd.f32 %v1261, %v1522
      %v1613 = vadd.f32 %v1262, %v1525
      %v1614 = vadd.f32 %v1263, %v1530
      %v1615 = vadd.f32 %v1264, %v1533
      %v1616 = vadd.f32 %v1265, %v1538
      %v1617 = vadd.f32 %v1266, %v1541
      %v1618 = vadd.f32 %v1267, %v1546
      %v1619 = vadd.f32 %v1268, %v1549
      %v1620 = vadd.f32 %v1269, %v1554
      %v1621 = vadd.f32 %v1270, %v1557
      %v1622 = vadd.f32 %v1271, %v1562
      %v1623 = vadd.f32 %v1272, %v1565
      %v1624 = vadd.f32 %v1273, %v1570
      %v1625 = vadd.f32 %v1274, %v1573
      %v1626 = vadd.f32 %v1275, %v1578
      %v1627 = vadd.f32 %v1276, %v1581
      %v1628 = vadd.f32 %v1277, %v1586
      %v1629 = vadd.f32 %v1278, %v1589
      %v1630 = vadd.f32 %v1279, %v1594
      %v1631 = vadd.f32 %v1280, %v1597
      %s1632 = scalar_lea.vmem %s2, 16
      %v1633 = vld [vmem:[%s1632] sm:$0xf]
      %vm1634 = vcmask 1041408
      %v1635 = vrot.slane %v366, 6
      %v1636 = vrot.slane %v367, 6
      %v1637 = vsel %vm1634, %v1635, %v1636
      %v1638 = vrot.slane %v368, 6
      %v1639 = vsel %vm1634, %v1636, %v1638
      %v1640 = vrot.slane %v369, 6
      %v1641 = vsel %vm1634, %v1638, %v1640
      %v1642 = vrot.slane %v370, 6
      %v1643 = vsel %vm1634, %v1640, %v1642
      %v1644 = vrot.slane %v371, 6
      %v1645 = vsel %vm1634, %v1642, %v1644
      %v1646 = vrot.slane %v372, 6
      %v1647 = vsel %vm1634, %v1644, %v1646
      %v1648 = vrot.slane %v373, 6
      %v1649 = vsel %vm1634, %v1646, %v1648
      %v1650 = vrot.slane %v374, 6
      %v1651 = vsel %vm1634, %v1648, %v1650
      %v1652 = vrot.slane %v439, 6
      %v1653 = vsel %vm1634, %v1650, %v1652
      %v1654 = vrot.slane %v440, 6
      %v1655 = vsel %vm1634, %v1652, %v1654
      %v1656 = vrot.slane %v441, 6
      %v1657 = vsel %vm1634, %v1654, %v1656
      %v1658 = vrot.slane %v442, 6
      %v1659 = vsel %vm1634, %v1656, %v1658
      %v1660 = vrot.slane %v443, 6
      %v1661 = vsel %vm1634, %v1658, %v1660
      %v1662 = vrot.slane %v444, 6
      %v1663 = vsel %vm1634, %v1660, %v1662
      %v1664 = vrot.slane %v445, 6
      %v1665 = vsel %vm1634, %v1662, %v1664
      %v1666 = vrot.slane %v446, 6
      %v1667 = vsel %vm1634, %v1664, %v1666
      %v1669 = vsel %vm591, %v1637, 0
      %v1672 = vsel %vm591, %v1639, 0
      %v1675 = vsel %vm591, %v1641, 0
      %v1678 = vsel %vm591, %v1643, 0
      %v1681 = vsel %vm591, %v1645, 0
      %v1684 = vsel %vm591, %v1647, 0
      %v1687 = vsel %vm591, %v1649, 0
      %v1690 = vsel %vm591, %v1651, 0
      %v1693 = vsel %vm591, %v1653, 0
      %v1696 = vsel %vm591, %v1655, 0
      %v1699 = vsel %vm591, %v1657, 0
      %v1702 = vsel %vm591, %v1659, 0
      %v1705 = vsel %vm591, %v1661, 0
      %v1708 = vsel %vm591, %v1663, 0
      %v1711 = vsel %vm591, %v1665, 0
      %v1714 = vsel %vm591, %v1667, 0
      %v1717 = vsel %vm640, %v1633, 0
      %1719 = vmatprep.subr.bf16.mxu0 0
      %1720 = vmatpush1.bf16.msra.mxu0 %v1717
      %1721 = vmatprep.subr.bf16.mxu0 0
      %1722 = vmatpush1.bf16.msra.mxu0 0
      %1723 = vmatprep.subr.bf16.mxu0 0
      %1724 = vmatpush1.bf16.msra.mxu0 0
      %1725 = vmatprep.subr.bf16.mxu0 0
      %1726 = vmatpush1.bf16.msra.mxu0 0
      %1727 = vmatprep.subr.bf16.mxu0 0
      %1728 = vmatpush1.bf16.msra.mxu0 0
      %1729 = vmatprep.subr.bf16.mxu0 0
      %1730 = vmatpush1.bf16.msra.mxu0 0
      %1731 = vmatprep.subr.bf16.mxu0 0
      %1732 = vmatpush1.bf16.msra.mxu0 0
      %1733 = vmatprep.subr.bf16.mxu0 0
      %1734 = vmatpush1.bf16.msra.mxu0 0
      %1735 = vmatprep.subr.bf16.mxu0 0
      %1736 = vmatpush1.bf16.msra.mxu0 0
      %1737 = vmatprep.subr.bf16.mxu0 0
      %1738 = vmatpush1.bf16.msra.mxu0 0
      %1739 = vmatprep.subr.bf16.mxu0 0
      %1740 = vmatpush1.bf16.msra.mxu0 0
      %1741 = vmatprep.subr.bf16.mxu0 0
      %1742 = vmatpush1.bf16.msra.mxu0 0
      %1743 = vmatprep.subr.bf16.mxu0 0
      %1744 = vmatpush1.bf16.msra.mxu0 0
      %1745 = vmatprep.subr.bf16.mxu0 0
      %1746 = vmatpush1.bf16.msra.mxu0 0
      %1747 = vmatprep.subr.bf16.mxu0 0
      %1748 = vmatpush1.bf16.msra.mxu0 0
      %1749 = vmatprep.subr.bf16.mxu0 0
      %1750 = vmatpush1.bf16.msra.mxu0 0
      %1751 = vmatprep.mubr.bf16.mxu0 0
      %1752 = vmatmul.mubr.bf16.gmra.mrb[0].mxu0 %v1669
      %v1753 = vpop.f32.mrb[0].mxu0
      %v1754 = vadd.f32 0.0, %v1753
      %v1755 = vpop.f32.mrb[0].mxu0
      %v1756 = vpop.f32.mrb[0].mxu0
      %v1757 = vadd.f32 0.0, %v1756
      %v1758 = vpop.f32.mrb[0].mxu0
      %1759 = vmatprep.mubr.bf16.mxu0 0
      %1760 = vmatmul.mubr.bf16.gmra.mrb[0].mxu0 %v1672
      %v1761 = vpop.f32.mrb[0].mxu0
      %v1762 = vadd.f32 0.0, %v1761
      %v1763 = vpop.f32.mrb[0].mxu0
      %v1764 = vpop.f32.mrb[0].mxu0
      %v1765 = vadd.f32 0.0, %v1764
      %v1766 = vpop.f32.mrb[0].mxu0
      %1767 = vmatprep.mubr.bf16.mxu0 0
      %1768 = vmatmul.mubr.bf16.gmra.mrb[0].mxu0 %v1675
      %v1769 = vpop.f32.mrb[0].mxu0
      %v1770 = vadd.f32 0.0, %v1769
      %v1771 = vpop.f32.mrb[0].mxu0
      %v1772 = vpop.f32.mrb[0].mxu0
      %v1773 = vadd.f32 0.0, %v1772
      %v1774 = vpop.f32.mrb[0].mxu0
      %1775 = vmatprep.mubr.bf16.mxu0 0
      %1776 = vmatmul.mubr.bf16.gmra.mrb[0].mxu0 %v1678
      %v1777 = vpop.f32.mrb[0].mxu0
      %v1778 = vadd.f32 0.0, %v1777
      %v1779 = vpop.f32.mrb[0].mxu0
      %v1780 = vpop.f32.mrb[0].mxu0
      %v1781 = vadd.f32 0.0, %v1780
      %v1782 = vpop.f32.mrb[0].mxu0
      %1783 = vmatprep.mubr.bf16.mxu0 0
      %1784 = vmatmul.mubr.bf16.gmra.mrb[0].mxu0 %v1681
      %v1785 = vpop.f32.mrb[0].mxu0
      %v1786 = vadd.f32 0.0, %v1785
      %v1787 = vpop.f32.mrb[0].mxu0
      %v1788 = vpop.f32.mrb[0].mxu0
      %v1789 = vadd.f32 0.0, %v1788
      %v1790 = vpop.f32.mrb[0].mxu0
      %1791 = vmatprep.mubr.bf16.mxu0 0
      %1792 = vmatmul.mubr.bf16.gmra.mrb[0].mxu0 %v1684
      %v1793 = vpop.f32.mrb[0].mxu0
      %v1794 = vadd.f32 0.0, %v1793
      %v1795 = vpop.f32.mrb[0].mxu0
      %v1796 = vpop.f32.mrb[0].mxu0
      %v1797 = vadd.f32 0.0, %v1796
      %v1798 = vpop.f32.mrb[0].mxu0
      %1799 = vmatprep.mubr.bf16.mxu0 0
      %1800 = vmatmul.mubr.bf16.gmra.mrb[0].mxu0 %v1687
      %v1801 = vpop.f32.mrb[0].mxu0
      %v1802 = vadd.f32 0.0, %v1801
      %v1803 = vpop.f32.mrb[0].mxu0
      %v1804 = vpop.f32.mrb[0].mxu0
      %v1805 = vadd.f32 0.0, %v1804
      %v1806 = vpop.f32.mrb[0].mxu0
      %1807 = vmatprep.mubr.bf16.mxu0 0
      %1808 = vmatmul.mubr.bf16.gmra.mrb[0].mxu0 %v1690
      %v1809 = vpop.f32.mrb[0].mxu0
      %v1810 = vadd.f32 0.0, %v1809
      %v1811 = vpop.f32.mrb[0].mxu0
      %v1812 = vpop.f32.mrb[0].mxu0
      %v1813 = vadd.f32 0.0, %v1812
      %v1814 = vpop.f32.mrb[0].mxu0
      %1815 = vmatprep.mubr.bf16.mxu0 0
      %1816 = vmatmul.mubr.bf16.gmra.mrb[0].mxu0 %v1693
      %v1817 = vpop.f32.mrb[0].mxu0
      %v1818 = vadd.f32 0.0, %v1817
      %v1819 = vpop.f32.mrb[0].mxu0
      %v1820 = vpop.f32.mrb[0].mxu0
      %v1821 = vadd.f32 0.0, %v1820
      %v1822 = vpop.f32.mrb[0].mxu0
      %1823 = vmatprep.mubr.bf16.mxu0 0
      %1824 = vmatmul.mubr.bf16.gmra.mrb[0].mxu0 %v1696
      %v1825 = vpop.f32.mrb[0].mxu0
      %v1826 = vadd.f32 0.0, %v1825
      %v1827 = vpop.f32.mrb[0].mxu0
      %v1828 = vpop.f32.mrb[0].mxu0
      %v1829 = vadd.f32 0.0, %v1828
      %v1830 = vpop.f32.mrb[0].mxu0
      %1831 = vmatprep.mubr.bf16.mxu0 0
      %1832 = vmatmul.mubr.bf16.gmra.mrb[0].mxu0 %v1699
      %v1833 = vpop.f32.mrb[0].mxu0
      %v1834 = vadd.f32 0.0, %v1833
      %v1835 = vpop.f32.mrb[0].mxu0
      %v1836 = vpop.f32.mrb[0].mxu0
      %v1837 = vadd.f32 0.0, %v1836
      %v1838 = vpop.f32.mrb[0].mxu0
      %1839 = vmatprep.mubr.bf16.mxu0 0
      %1840 = vmatmul.mubr.bf16.gmra.mrb[0].mxu0 %v1702
      %v1841 = vpop.f32.mrb[0].mxu0
      %v1842 = vadd.f32 0.0, %v1841
      %v1843 = vpop.f32.mrb[0].mxu0
      %v1844 = vpop.f32.mrb[0].mxu0
      %v1845 = vadd.f32 0.0, %v1844
      %v1846 = vpop.f32.mrb[0].mxu0
      %1847 = vmatprep.mubr.bf16.mxu0 0
      %1848 = vmatmul.mubr.bf16.gmra.mrb[0].mxu0 %v1705
      %v1849 = vpop.f32.mrb[0].mxu0
      %v1850 = vadd.f32 0.0, %v1849
      %v1851 = vpop.f32.mrb[0].mxu0
      %v1852 = vpop.f32.mrb[0].mxu0
      %v1853 = vadd.f32 0.0, %v1852
      %v1854 = vpop.f32.mrb[0].mxu0
      %1855 = vmatprep.mubr.bf16.mxu0 0
      %1856 = vmatmul.mubr.bf16.gmra.mrb[0].mxu0 %v1708
      %v1857 = vpop.f32.mrb[0].mxu0
      %v1858 = vadd.f32 0.0, %v1857
      %v1859 = vpop.f32.mrb[0].mxu0
      %v1860 = vpop.f32.mrb[0].mxu0
      %v1861 = vadd.f32 0.0, %v1860
      %v1862 = vpop.f32.mrb[0].mxu0
      %1863 = vmatprep.mubr.bf16.mxu0 0
      %1864 = vmatmul.mubr.bf16.gmra.mrb[0].mxu0 %v1711
      %v1865 = vpop.f32.mrb[0].mxu0
      %v1866 = vadd.f32 0.0, %v1865
      %v1867 = vpop.f32.mrb[0].mxu0
      %v1868 = vpop.f32.mrb[0].mxu0
      %v1869 = vadd.f32 0.0, %v1868
      %v1870 = vpop.f32.mrb[0].mxu0
      %1871 = vmatprep.mubr.bf16.mxu0 0
      %1872 = vmatmul.mubr.bf16.gmra.mrb[0].mxu0 %v1714
      %v1873 = vpop.f32.mrb[0].mxu0
      %v1874 = vadd.f32 0.0, %v1873
      %v1875 = vpop.f32.mrb[0].mxu0
      %v1876 = vpop.f32.mrb[0].mxu0
      %v1877 = vadd.f32 0.0, %v1876
      %v1878 = vpop.f32.mrb[0].mxu0
      %1879 = vdwg.mxu0
      %v1880 = vadd.f32 %v1600, %v1754
      %v1881 = vadd.f32 %v1601, %v1757
      %v1882 = vadd.f32 %v1602, %v1762
      %v1883 = vadd.f32 %v1603, %v1765
      %v1884 = vadd.f32 %v1604, %v1770
      %v1885 = vadd.f32 %v1605, %v1773
      %v1886 = vadd.f32 %v1606, %v1778
      %v1887 = vadd.f32 %v1607, %v1781
      %v1888 = vadd.f32 %v1608, %v1786
      %v1889 = vadd.f32 %v1609, %v1789
      %v1890 = vadd.f32 %v1610, %v1794
      %v1891 = vadd.f32 %v1611, %v1797
      %v1892 = vadd.f32 %v1612, %v1802
      %v1893 = vadd.f32 %v1613, %v1805
      %v1894 = vadd.f32 %v1614, %v1810
      %v1895 = vadd.f32 %v1615, %v1813
      %v1896 = vadd.f32 %v1616, %v1818
      %v1897 = vadd.f32 %v1617, %v1821
      %v1898 = vadd.f32 %v1618, %v1826
      %v1899 = vadd.f32 %v1619, %v1829
      %v1900 = vadd.f32 %v1620, %v1834
      %v1901 = vadd.f32 %v1621, %v1837
      %v1902 = vadd.f32 %v1622, %v1842
      %v1903 = vadd.f32 %v1623, %v1845
      %v1904 = vadd.f32 %v1624, %v1850
      %v1905 = vadd.f32 %v1625, %v1853
      %v1906 = vadd.f32 %v1626, %v1858
      %v1907 = vadd.f32 %v1627, %v1861
      %v1908 = vadd.f32 %v1628, %v1866
      %v1909 = vadd.f32 %v1629, %v1869
      %v1910 = vadd.f32 %v1630, %v1874
      %v1911 = vadd.f32 %v1631, %v1877
      %s1912 = scalar_lea.vmem %s2, 20
      %v1913 = vld [vmem:[%s1912] sm:$0xf]
      %vm1914 = vsmask.f32 1280
      %v1915 = vrot.slane %v519, 6
      %v1916 = vrot.slane %v515, 7
      %v1917 = vor.u32 %v1915, %v1916
      %v1918 = vrot.slane %v527, 6
      %v1919 = vrot.slane %v523, 7
      %v1920 = vor.u32 %v1918, %v1919
      %v1921 = vsel %vm1914, %v1917, %v1920
      %v1922 = vrot.slane %v535, 6
      %v1923 = vrot.slane %v531, 7
      %v1924 = vor.u32 %v1922, %v1923
      %v1925 = vsel %vm1914, %v1920, %v1924
      %v1926 = vrot.slane %v543, 6
      %v1927 = vrot.slane %v539, 7
      %v1928 = vor.u32 %v1926, %v1927
      %v1929 = vsel %vm1914, %v1924, %v1928
      %v1930 = vrot.slane %v551, 6
      %v1931 = vrot.slane %v547, 7
      %v1932 = vor.u32 %v1930, %v1931
      %v1933 = vsel %vm1914, %v1928, %v1932
      %v1934 = vrot.slane %v559, 6
      %v1935 = vrot.slane %v555, 7
      %v1936 = vor.u32 %v1934, %v1935
      %v1937 = vsel %vm1914, %v1932, %v1936
      %v1938 = vrot.slane %v567, 6
      %v1939 = vrot.slane %v563, 7
      %v1940 = vor.u32 %v1938, %v1939
      %v1941 = vsel %vm1914, %v1936, %v1940
      %v1942 = vrot.slane %v575, 6
      %v1943 = vrot.slane %v571, 7
      %v1944 = vor.u32 %v1942, %v1943
      %v1945 = vsel %vm1914, %v1940, %v1944
      %v1946 = vrot.slane %v583, 6
      %v1947 = vrot.slane %v579, 7
      %v1948 = vor.u32 %v1946, %v1947
      %v1949 = vsel %vm1914, %v1944, %v1948
      %v1950 = vrot.slane %v1319, 6
      %v1951 = vrot.slane %v587, 7
      %v1952 = vor.u32 %v1950, %v1951
      %v1953 = vsel %vm1914, %v1948, %v1952
      %v1954 = vrot.slane %v1326, 6
      %v1955 = vrot.slane %v1329, 7
      %v1956 = vor.u32 %v1954, %v1955
      %v1957 = vsel %vm1914, %v1952, %v1956
      %v1958 = vrot.slane %v1335, 6
      %v1959 = vrot.slane %v1338, 7
      %v1960 = vor.u32 %v1958, %v1959
      %v1961 = vsel %vm1914, %v1956, %v1960
      %v1962 = vrot.slane %v1344, 6
      %v1963 = vrot.slane %v1347, 7
      %v1964 = vor.u32 %v1962, %v1963
      %v1965 = vsel %vm1914, %v1960, %v1964
      %v1966 = vrot.slane %v1353, 6
      %v1967 = vrot.slane %v1356, 7
      %v1968 = vor.u32 %v1966, %v1967
      %v1969 = vsel %vm1914, %v1964, %v1968
      %v1970 = vrot.slane %v1362, 6
      %v1971 = vrot.slane %v1365, 7
      %v1972 = vor.u32 %v1970, %v1971
      %v1973 = vsel %vm1914, %v1968, %v1972
      %v1974 = vrot.slane %v1371, 6
      %v1975 = vrot.slane %v1374, 7
      %v1976 = vor.u32 %v1974, %v1975
      %v1977 = vsel %vm1914, %v1972, %v1976
      %v1978 = vrot.slane %v1380, 6
      %v1979 = vrot.slane %v1383, 7
      %v1980 = vor.u32 %v1978, %v1979
      %v1981 = vsel %vm1914, %v1976, %v1980
      %v1983 = vsel %vm591, %v1921, 0
      %v1986 = vsel %vm591, %v1925, 0
      %v1989 = vsel %vm591, %v1929, 0
      %v1992 = vsel %vm591, %v1933, 0
      %v1995 = vsel %vm591, %v1937, 0
      %v1998 = vsel %vm591, %v1941, 0
      %v2001 = vsel %vm591, %v1945, 0
      %v2004 = vsel %vm591, %v1949, 0
      %v2007 = vsel %vm591, %v1953, 0
      %v2010 = vsel %vm591, %v1957, 0
      %v2013 = vsel %vm591, %v1961, 0
      %v2016 = vsel %vm591, %v1965, 0
      %v2019 = vsel %vm591, %v1969, 0
      %v2022 = vsel %vm591, %v1973, 0
      %v2025 = vsel %vm591, %v1977, 0
      %v2028 = vsel %vm591, %v1981, 0
      %v2031 = vsel %vm640, %v1913, 0
      %2033 = vmatprep.subr.bf16.mxu0 0
      %2034 = vmatpush1.bf16.msra.mxu0 %v2031
      %2035 = vmatprep.subr.bf16.mxu0 0
      %2036 = vmatpush1.bf16.msra.mxu0 0
      %2037 = vmatprep.subr.bf16.mxu0 0
      %2038 = vmatpush1.bf16.msra.mxu0 0
      %2039 = vmatprep.subr.bf16.mxu0 0
      %2040 = vmatpush1.bf16.msra.mxu0 0
      %2041 = vmatprep.subr.bf16.mxu0 0
      %2042 = vmatpush1.bf16.msra.mxu0 0
      %2043 = vmatprep.subr.bf16.mxu0 0
      %2044 = vmatpush1.bf16.msra.mxu0 0
      %2045 = vmatprep.subr.bf16.mxu0 0
      %2046 = vmatpush1.bf16.msra.mxu0 0
      %2047 = vmatprep.subr.bf16.mxu0 0
      %2048 = vmatpush1.bf16.msra.mxu0 0
      %2049 = vmatprep.subr.bf16.mxu0 0
      %2050 = vmatpush1.bf16.msra.mxu0 0
      %2051 = vmatprep.subr.bf16.mxu0 0
      %2052 = vmatpush1.bf16.msra.mxu0 0
      %2053 = vmatprep.subr.bf16.mxu0 0
      %2054 = vmatpush1.bf16.msra.mxu0 0
      %2055 = vmatprep.subr.bf16.mxu0 0
      %2056 = vmatpush1.bf16.msra.mxu0 0
      %2057 = vmatprep.subr.bf16.mxu0 0
      %2058 = vmatpush1.bf16.msra.mxu0 0
      %2059 = vmatprep.subr.bf16.mxu0 0
      %2060 = vmatpush1.bf16.msra.mxu0 0
      %2061 = vmatprep.subr.bf16.mxu0 0
      %2062 = vmatpush1.bf16.msra.mxu0 0
      %2063 = vmatprep.subr.bf16.mxu0 0
      %2064 = vmatpush1.bf16.msra.mxu0 0
      %2065 = vmatprep.mubr.bf16.mxu0 0
      %2066 = vmatmul.mubr.bf16.gmra.mrb[0].mxu0 %v1983
      %v2067 = vpop.f32.mrb[0].mxu0
      %v2068 = vadd.f32 0.0, %v2067
      %v2069 = vpop.f32.mrb[0].mxu0
      %v2070 = vpop.f32.mrb[0].mxu0
      %v2071 = vadd.f32 0.0, %v2070
      %v2072 = vpop.f32.mrb[0].mxu0
      %2073 = vmatprep.mubr.bf16.mxu0 0
      %2074 = vmatmul.mubr.bf16.gmra.mrb[0].mxu0 %v1986
      %v2075 = vpop.f32.mrb[0].mxu0
      %v2076 = vadd.f32 0.0, %v2075
      %v2077 = vpop.f32.mrb[0].mxu0
      %v2078 = vpop.f32.mrb[0].mxu0
      %v2079 = vadd.f32 0.0, %v2078
      %v2080 = vpop.f32.mrb[0].mxu0
      %2081 = vmatprep.mubr.bf16.mxu0 0
      %2082 = vmatmul.mubr.bf16.gmra.mrb[0].mxu0 %v1989
      %v2083 = vpop.f32.mrb[0].mxu0
      %v2084 = vadd.f32 0.0, %v2083
      %v2085 = vpop.f32.mrb[0].mxu0
      %v2086 = vpop.f32.mrb[0].mxu0
      %v2087 = vadd.f32 0.0, %v2086
      %v2088 = vpop.f32.mrb[0].mxu0
      %2089 = vmatprep.mubr.bf16.mxu0 0
      %2090 = vmatmul.mubr.bf16.gmra.mrb[0].mxu0 %v1992
      %v2091 = vpop.f32.mrb[0].mxu0
      %v2092 = vadd.f32 0.0, %v2091
      %v2093 = vpop.f32.mrb[0].mxu0
      %v2094 = vpop.f32.mrb[0].mxu0
      %v2095 = vadd.f32 0.0, %v2094
      %v2096 = vpop.f32.mrb[0].mxu0
      %2097 = vmatprep.mubr.bf16.mxu0 0
      %2098 = vmatmul.mubr.bf16.gmra.mrb[0].mxu0 %v1995
      %v2099 = vpop.f32.mrb[0].mxu0
      %v2100 = vadd.f32 0.0, %v2099
      %v2101 = vpop.f32.mrb[0].mxu0
      %v2102 = vpop.f32.mrb[0].mxu0
      %v2103 = vadd.f32 0.0, %v2102
      %v2104 = vpop.f32.mrb[0].mxu0
      %2105 = vmatprep.mubr.bf16.mxu0 0
      %2106 = vmatmul.mubr.bf16.gmra.mrb[0].mxu0 %v1998
      %v2107 = vpop.f32.mrb[0].mxu0
      %v2108 = vadd.f32 0.0, %v2107
      %v2109 = vpop.f32.mrb[0].mxu0
      %v2110 = vpop.f32.mrb[0].mxu0
      %v2111 = vadd.f32 0.0, %v2110
      %v2112 = vpop.f32.mrb[0].mxu0
      %2113 = vmatprep.mubr.bf16.mxu0 0
      %2114 = vmatmul.mubr.bf16.gmra.mrb[0].mxu0 %v2001
      %v2115 = vpop.f32.mrb[0].mxu0
      %v2116 = vadd.f32 0.0, %v2115
      %v2117 = vpop.f32.mrb[0].mxu0
      %v2118 = vpop.f32.mrb[0].mxu0
      %v2119 = vadd.f32 0.0, %v2118
      %v2120 = vpop.f32.mrb[0].mxu0
      %2121 = vmatprep.mubr.bf16.mxu0 0
      %2122 = vmatmul.mubr.bf16.gmra.mrb[0].mxu0 %v2004
      %v2123 = vpop.f32.mrb[0].mxu0
      %v2124 = vadd.f32 0.0, %v2123
      %v2125 = vpop.f32.mrb[0].mxu0
      %v2126 = vpop.f32.mrb[0].mxu0
      %v2127 = vadd.f32 0.0, %v2126
      %v2128 = vpop.f32.mrb[0].mxu0
      %2129 = vmatprep.mubr.bf16.mxu0 0
      %2130 = vmatmul.mubr.bf16.gmra.mrb[0].mxu0 %v2007
      %v2131 = vpop.f32.mrb[0].mxu0
      %v2132 = vadd.f32 0.0, %v2131
      %v2133 = vpop.f32.mrb[0].mxu0
      %v2134 = vpop.f32.mrb[0].mxu0
      %v2135 = vadd.f32 0.0, %v2134
      %v2136 = vpop.f32.mrb[0].mxu0
      %2137 = vmatprep.mubr.bf16.mxu0 0
      %2138 = vmatmul.mubr.bf16.gmra.mrb[0].mxu0 %v2010
      %v2139 = vpop.f32.mrb[0].mxu0
      %v2140 = vadd.f32 0.0, %v2139
      %v2141 = vpop.f32.mrb[0].mxu0
      %v2142 = vpop.f32.mrb[0].mxu0
      %v2143 = vadd.f32 0.0, %v2142
      %v2144 = vpop.f32.mrb[0].mxu0
      %2145 = vmatprep.mubr.bf16.mxu0 0
      %2146 = vmatmul.mubr.bf16.gmra.mrb[0].mxu0 %v2013
      %v2147 = vpop.f32.mrb[0].mxu0
      %v2148 = vadd.f32 0.0, %v2147
      %v2149 = vpop.f32.mrb[0].mxu0
      %v2150 = vpop.f32.mrb[0].mxu0
      %v2151 = vadd.f32 0.0, %v2150
      %v2152 = vpop.f32.mrb[0].mxu0
      %2153 = vmatprep.mubr.bf16.mxu0 0
      %2154 = vmatmul.mubr.bf16.gmra.mrb[0].mxu0 %v2016
      %v2155 = vpop.f32.mrb[0].mxu0
      %v2156 = vadd.f32 0.0, %v2155
      %v2157 = vpop.f32.mrb[0].mxu0
      %v2158 = vpop.f32.mrb[0].mxu0
      %v2159 = vadd.f32 0.0, %v2158
      %v2160 = vpop.f32.mrb[0].mxu0
      %2161 = vmatprep.mubr.bf16.mxu0 0
      %2162 = vmatmul.mubr.bf16.gmra.mrb[0].mxu0 %v2019
      %v2163 = vpop.f32.mrb[0].mxu0
      %v2164 = vadd.f32 0.0, %v2163
      %v2165 = vpop.f32.mrb[0].mxu0
      %v2166 = vpop.f32.mrb[0].mxu0
      %v2167 = vadd.f32 0.0, %v2166
      %v2168 = vpop.f32.mrb[0].mxu0
      %2169 = vmatprep.mubr.bf16.mxu0 0
      %2170 = vmatmul.mubr.bf16.gmra.mrb[0].mxu0 %v2022
      %v2171 = vpop.f32.mrb[0].mxu0
      %v2172 = vadd.f32 0.0, %v2171
      %v2173 = vpop.f32.mrb[0].mxu0
      %v2174 = vpop.f32.mrb[0].mxu0
      %v2175 = vadd.f32 0.0, %v2174
      %v2176 = vpop.f32.mrb[0].mxu0
      %2177 = vmatprep.mubr.bf16.mxu0 0
      %2178 = vmatmul.mubr.bf16.gmra.mrb[0].mxu0 %v2025
      %v2179 = vpop.f32.mrb[0].mxu0
      %v2180 = vadd.f32 0.0, %v2179
      %v2181 = vpop.f32.mrb[0].mxu0
      %v2182 = vpop.f32.mrb[0].mxu0
      %v2183 = vadd.f32 0.0, %v2182
      %v2184 = vpop.f32.mrb[0].mxu0
      %2185 = vmatprep.mubr.bf16.mxu0 0
      %2186 = vmatmul.mubr.bf16.gmra.mrb[0].mxu0 %v2028
      %v2187 = vpop.f32.mrb[0].mxu0
      %v2188 = vadd.f32 0.0, %v2187
      %v2189 = vpop.f32.mrb[0].mxu0
      %v2190 = vpop.f32.mrb[0].mxu0
      %v2191 = vadd.f32 0.0, %v2190
      %v2192 = vpop.f32.mrb[0].mxu0
      %2193 = vdwg.mxu0
      %v2194 = vadd.f32 %v1880, %v2068
      %v2195 = vadd.f32 %v1881, %v2071
      %v2196 = vadd.f32 %v1882, %v2076
      %v2197 = vadd.f32 %v1883, %v2079
      %v2198 = vadd.f32 %v1884, %v2084
      %v2199 = vadd.f32 %v1885, %v2087
      %v2200 = vadd.f32 %v1886, %v2092
      %v2201 = vadd.f32 %v1887, %v2095
      %v2202 = vadd.f32 %v1888, %v2100
      %v2203 = vadd.f32 %v1889, %v2103
      %v2204 = vadd.f32 %v1890, %v2108
      %v2205 = vadd.f32 %v1891, %v2111
      %v2206 = vadd.f32 %v1892, %v2116
      %v2207 = vadd.f32 %v1893, %v2119
      %v2208 = vadd.f32 %v1894, %v2124
      %v2209 = vadd.f32 %v1895, %v2127
      %v2210 = vadd.f32 %v1896, %v2132
      %v2211 = vadd.f32 %v1897, %v2135
      %v2212 = vadd.f32 %v1898, %v2140
      %v2213 = vadd.f32 %v1899, %v2143
      %v2214 = vadd.f32 %v1900, %v2148
      %v2215 = vadd.f32 %v1901, %v2151
      %v2216 = vadd.f32 %v1902, %v2156
      %v2217 = vadd.f32 %v1903, %v2159
      %v2218 = vadd.f32 %v1904, %v2164
      %v2219 = vadd.f32 %v1905, %v2167
      %v2220 = vadd.f32 %v1906, %v2172
      %v2221 = vadd.f32 %v1907, %v2175
      %v2222 = vadd.f32 %v1908, %v2180
      %v2223 = vadd.f32 %v1909, %v2183
      %v2224 = vadd.f32 %v1910, %v2188
      %v2225 = vadd.f32 %v1911, %v2191
      %s2226 = scalar_lea.vmem %s2, 24
      %v2227 = vld [vmem:[%s2226] sm:$0xf]
      %vm2228 = vcmask 1044480
      %v2229 = vrot.slane %v374, 3
      %v2230 = vrot.slane %v439, 3
      %v2231 = vsel %vm2228, %v2229, %v2230
      %v2232 = vrot.slane %v440, 3
      %v2233 = vsel %vm2228, %v2230, %v2232
      %v2234 = vrot.slane %v441, 3
      %v2235 = vsel %vm2228, %v2232, %v2234
      %v2236 = vrot.slane %v442, 3
      %v2237 = vsel %vm2228, %v2234, %v2236
      %v2238 = vrot.slane %v443, 3
      %v2239 = vsel %vm2228, %v2236, %v2238
      %v2240 = vrot.slane %v444, 3
      %v2241 = vsel %vm2228, %v2238, %v2240
      %v2242 = vrot.slane %v445, 3
      %v2243 = vsel %vm2228, %v2240, %v2242
      %v2244 = vrot.slane %v446, 3
      %v2245 = vsel %vm2228, %v2242, %v2244
      %v2246 = vrot.slane %v447, 3
      %v2247 = vsel %vm2228, %v2244, %v2246
      %v2248 = vrot.slane %v448, 3
      %v2249 = vsel %vm2228, %v2246, %v2248
      %v2250 = vrot.slane %v449, 3
      %v2251 = vsel %vm2228, %v2248, %v2250
      %v2252 = vrot.slane %v450, 3
      %v2253 = vsel %vm2228, %v2250, %v2252
      %v2254 = vrot.slane %v451, 3
      %v2255 = vsel %vm2228, %v2252, %v2254
      %v2256 = vrot.slane %v452, 3
      %v2257 = vsel %vm2228, %v2254, %v2256
      %v2258 = vrot.slane %v453, 3
      %v2259 = vsel %vm2228, %v2256, %v2258
      %v2260 = vrot.slane %v454, 3
      %v2261 = vsel %vm2228, %v2258, %v2260
      %v2263 = vsel %vm591, %v2231, 0
      %v2266 = vsel %vm591, %v2233, 0
      %v2269 = vsel %vm591, %v2235, 0
      %v2272 = vsel %vm591, %v2237, 0
      %v2275 = vsel %vm591, %v2239, 0
      %v2278 = vsel %vm591, %v2241, 0
      %v2281 = vsel %vm591, %v2243, 0
      %v2284 = vsel %vm591, %v2245, 0
      %v2287 = vsel %vm591, %v2247, 0
      %v2290 = vsel %vm591, %v2249, 0
      %v2293 = vsel %vm591, %v2251, 0
      %v2296 = vsel %vm591, %v2253, 0
      %v2299 = vsel %vm591, %v2255, 0
      %v2302 = vsel %vm591, %v2257, 0
      %v2305 = vsel %vm591, %v2259, 0
      %v2308 = vsel %vm591, %v2261, 0
      %v2311 = vsel %vm640, %v2227, 0
      %2313 = vmatprep.subr.bf16.mxu0 0
      %2314 = vmatpush1.bf16.msra.mxu0 %v2311
      %2315 = vmatprep.subr.bf16.mxu0 0
      %2316 = vmatpush1.bf16.msra.mxu0 0
      %2317 = vmatprep.subr.bf16.mxu0 0
      %2318 = vmatpush1.bf16.msra.mxu0 0
      %2319 = vmatprep.subr.bf16.mxu0 0
      %2320 = vmatpush1.bf16.msra.mxu0 0
      %2321 = vmatprep.subr.bf16.mxu0 0
      %2322 = vmatpush1.bf16.msra.mxu0 0
      %2323 = vmatprep.subr.bf16.mxu0 0
      %2324 = vmatpush1.bf16.msra.mxu0 0
      %2325 = vmatprep.subr.bf16.mxu0 0
      %2326 = vmatpush1.bf16.msra.mxu0 0
      %2327 = vmatprep.subr.bf16.mxu0 0
      %2328 = vmatpush1.bf16.msra.mxu0 0
      %2329 = vmatprep.subr.bf16.mxu0 0
      %2330 = vmatpush1.bf16.msra.mxu0 0
      %2331 = vmatprep.subr.bf16.mxu0 0
      %2332 = vmatpush1.bf16.msra.mxu0 0
      %2333 = vmatprep.subr.bf16.mxu0 0
      %2334 = vmatpush1.bf16.msra.mxu0 0
      %2335 = vmatprep.subr.bf16.mxu0 0
      %2336 = vmatpush1.bf16.msra.mxu0 0
      %2337 = vmatprep.subr.bf16.mxu0 0
      %2338 = vmatpush1.bf16.msra.mxu0 0
      %2339 = vmatprep.subr.bf16.mxu0 0
      %2340 = vmatpush1.bf16.msra.mxu0 0
      %2341 = vmatprep.subr.bf16.mxu0 0
      %2342 = vmatpush1.bf16.msra.mxu0 0
      %2343 = vmatprep.subr.bf16.mxu0 0
      %2344 = vmatpush1.bf16.msra.mxu0 0
      %2345 = vmatprep.mubr.bf16.mxu0 0
      %2346 = vmatmul.mubr.bf16.gmra.mrb[0].mxu0 %v2263
      %v2347 = vpop.f32.mrb[0].mxu0
      %v2348 = vadd.f32 0.0, %v2347
      %v2349 = vpop.f32.mrb[0].mxu0
      %v2350 = vpop.f32.mrb[0].mxu0
      %v2351 = vadd.f32 0.0, %v2350
      %v2352 = vpop.f32.mrb[0].mxu0
      %2353 = vmatprep.mubr.bf16.mxu0 0
      %2354 = vmatmul.mubr.bf16.gmra.mrb[0].mxu0 %v2266
      %v2355 = vpop.f32.mrb[0].mxu0
      %v2356 = vadd.f32 0.0, %v2355
      %v2357 = vpop.f32.mrb[0].mxu0
      %v2358 = vpop.f32.mrb[0].mxu0
      %v2359 = vadd.f32 0.0, %v2358
      %v2360 = vpop.f32.mrb[0].mxu0
      %2361 = vmatprep.mubr.bf16.mxu0 0
      %2362 = vmatmul.mubr.bf16.gmra.mrb[0].mxu0 %v2269
      %v2363 = vpop.f32.mrb[0].mxu0
      %v2364 = vadd.f32 0.0, %v2363
      %v2365 = vpop.f32.mrb[0].mxu0
      %v2366 = vpop.f32.mrb[0].mxu0
      %v2367 = vadd.f32 0.0, %v2366
      %v2368 = vpop.f32.mrb[0].mxu0
      %2369 = vmatprep.mubr.bf16.mxu0 0
      %2370 = vmatmul.mubr.bf16.gmra.mrb[0].mxu0 %v2272
      %v2371 = vpop.f32.mrb[0].mxu0
      %v2372 = vadd.f32 0.0, %v2371
      %v2373 = vpop.f32.mrb[0].mxu0
      %v2374 = vpop.f32.mrb[0].mxu0
      %v2375 = vadd.f32 0.0, %v2374
      %v2376 = vpop.f32.mrb[0].mxu0
      %2377 = vmatprep.mubr.bf16.mxu0 0
      %2378 = vmatmul.mubr.bf16.gmra.mrb[0].mxu0 %v2275
      %v2379 = vpop.f32.mrb[0].mxu0
      %v2380 = vadd.f32 0.0, %v2379
      %v2381 = vpop.f32.mrb[0].mxu0
      %v2382 = vpop.f32.mrb[0].mxu0
      %v2383 = vadd.f32 0.0, %v2382
      %v2384 = vpop.f32.mrb[0].mxu0
      %2385 = vmatprep.mubr.bf16.mxu0 0
      %2386 = vmatmul.mubr.bf16.gmra.mrb[0].mxu0 %v2278
      %v2387 = vpop.f32.mrb[0].mxu0
      %v2388 = vadd.f32 0.0, %v2387
      %v2389 = vpop.f32.mrb[0].mxu0
      %v2390 = vpop.f32.mrb[0].mxu0
      %v2391 = vadd.f32 0.0, %v2390
      %v2392 = vpop.f32.mrb[0].mxu0
      %2393 = vmatprep.mubr.bf16.mxu0 0
      %2394 = vmatmul.mubr.bf16.gmra.mrb[0].mxu0 %v2281
      %v2395 = vpop.f32.mrb[0].mxu0
      %v2396 = vadd.f32 0.0, %v2395
      %v2397 = vpop.f32.mrb[0].mxu0
      %v2398 = vpop.f32.mrb[0].mxu0
      %v2399 = vadd.f32 0.0, %v2398
      %v2400 = vpop.f32.mrb[0].mxu0
      %2401 = vmatprep.mubr.bf16.mxu0 0
      %2402 = vmatmul.mubr.bf16.gmra.mrb[0].mxu0 %v2284
      %v2403 = vpop.f32.mrb[0].mxu0
      %v2404 = vadd.f32 0.0, %v2403
      %v2405 = vpop.f32.mrb[0].mxu0
      %v2406 = vpop.f32.mrb[0].mxu0
      %v2407 = vadd.f32 0.0, %v2406
      %v2408 = vpop.f32.mrb[0].mxu0
      %2409 = vmatprep.mubr.bf16.mxu0 0
      %2410 = vmatmul.mubr.bf16.gmra.mrb[0].mxu0 %v2287
      %v2411 = vpop.f32.mrb[0].mxu0
      %v2412 = vadd.f32 0.0, %v2411
      %v2413 = vpop.f32.mrb[0].mxu0
      %v2414 = vpop.f32.mrb[0].mxu0
      %v2415 = vadd.f32 0.0, %v2414
      %v2416 = vpop.f32.mrb[0].mxu0
      %2417 = vmatprep.mubr.bf16.mxu0 0
      %2418 = vmatmul.mubr.bf16.gmra.mrb[0].mxu0 %v2290
      %v2419 = vpop.f32.mrb[0].mxu0
      %v2420 = vadd.f32 0.0, %v2419
      %v2421 = vpop.f32.mrb[0].mxu0
      %v2422 = vpop.f32.mrb[0].mxu0
      %v2423 = vadd.f32 0.0, %v2422
      %v2424 = vpop.f32.mrb[0].mxu0
      %2425 = vmatprep.mubr.bf16.mxu0 0
      %2426 = vmatmul.mubr.bf16.gmra.mrb[0].mxu0 %v2293
      %v2427 = vpop.f32.mrb[0].mxu0
      %v2428 = vadd.f32 0.0, %v2427
      %v2429 = vpop.f32.mrb[0].mxu0
      %v2430 = vpop.f32.mrb[0].mxu0
      %v2431 = vadd.f32 0.0, %v2430
      %v2432 = vpop.f32.mrb[0].mxu0
      %2433 = vmatprep.mubr.bf16.mxu0 0
      %2434 = vmatmul.mubr.bf16.gmra.mrb[0].mxu0 %v2296
      %v2435 = vpop.f32.mrb[0].mxu0
      %v2436 = vadd.f32 0.0, %v2435
      %v2437 = vpop.f32.mrb[0].mxu0
      %v2438 = vpop.f32.mrb[0].mxu0
      %v2439 = vadd.f32 0.0, %v2438
      %v2440 = vpop.f32.mrb[0].mxu0
      %2441 = vmatprep.mubr.bf16.mxu0 0
      %2442 = vmatmul.mubr.bf16.gmra.mrb[0].mxu0 %v2299
      %v2443 = vpop.f32.mrb[0].mxu0
      %v2444 = vadd.f32 0.0, %v2443
      %v2445 = vpop.f32.mrb[0].mxu0
      %v2446 = vpop.f32.mrb[0].mxu0
      %v2447 = vadd.f32 0.0, %v2446
      %v2448 = vpop.f32.mrb[0].mxu0
      %2449 = vmatprep.mubr.bf16.mxu0 0
      %2450 = vmatmul.mubr.bf16.gmra.mrb[0].mxu0 %v2302
      %v2451 = vpop.f32.mrb[0].mxu0
      %v2452 = vadd.f32 0.0, %v2451
      %v2453 = vpop.f32.mrb[0].mxu0
      %v2454 = vpop.f32.mrb[0].mxu0
      %v2455 = vadd.f32 0.0, %v2454
      %v2456 = vpop.f32.mrb[0].mxu0
      %2457 = vmatprep.mubr.bf16.mxu0 0
      %2458 = vmatmul.mubr.bf16.gmra.mrb[0].mxu0 %v2305
      %v2459 = vpop.f32.mrb[0].mxu0
      %v2460 = vadd.f32 0.0, %v2459
      %v2461 = vpop.f32.mrb[0].mxu0
      %v2462 = vpop.f32.mrb[0].mxu0
      %v2463 = vadd.f32 0.0, %v2462
      %v2464 = vpop.f32.mrb[0].mxu0
      %2465 = vmatprep.mubr.bf16.mxu0 0
      %2466 = vmatmul.mubr.bf16.gmra.mrb[0].mxu0 %v2308
      %v2467 = vpop.f32.mrb[0].mxu0
      %v2468 = vadd.f32 0.0, %v2467
      %v2469 = vpop.f32.mrb[0].mxu0
      %v2470 = vpop.f32.mrb[0].mxu0
      %v2471 = vadd.f32 0.0, %v2470
      %v2472 = vpop.f32.mrb[0].mxu0
      %2473 = vdwg.mxu0
      %v2474 = vadd.f32 %v2194, %v2348
      %v2475 = vadd.f32 %v2195, %v2351
      %v2476 = vadd.f32 %v2196, %v2356
      %v2477 = vadd.f32 %v2197, %v2359
      %v2478 = vadd.f32 %v2198, %v2364
      %v2479 = vadd.f32 %v2199, %v2367
      %v2480 = vadd.f32 %v2200, %v2372
      %v2481 = vadd.f32 %v2201, %v2375
      %v2482 = vadd.f32 %v2202, %v2380
      %v2483 = vadd.f32 %v2203, %v2383
      %v2484 = vadd.f32 %v2204, %v2388
      %v2485 = vadd.f32 %v2205, %v2391
      %v2486 = vadd.f32 %v2206, %v2396
      %v2487 = vadd.f32 %v2207, %v2399
      %v2488 = vadd.f32 %v2208, %v2404
      %v2489 = vadd.f32 %v2209, %v2407
      %v2490 = vadd.f32 %v2210, %v2412
      %v2491 = vadd.f32 %v2211, %v2415
      %v2492 = vadd.f32 %v2212, %v2420
      %v2493 = vadd.f32 %v2213, %v2423
      %v2494 = vadd.f32 %v2214, %v2428
      %v2495 = vadd.f32 %v2215, %v2431
      %v2496 = vadd.f32 %v2216, %v2436
      %v2497 = vadd.f32 %v2217, %v2439
      %v2498 = vadd.f32 %v2218, %v2444
      %v2499 = vadd.f32 %v2219, %v2447
      %v2500 = vadd.f32 %v2220, %v2452
      %v2501 = vadd.f32 %v2221, %v2455
      %v2502 = vadd.f32 %v2222, %v2460
      %v2503 = vadd.f32 %v2223, %v2463
      %v2504 = vadd.f32 %v2224, %v2468
      %v2505 = vadd.f32 %v2225, %v2471
      %s2506 = scalar_lea.vmem %s2, 28
      %v2507 = vld [vmem:[%s2506] sm:$0xf]
      %vm2508 = vsmask.f32 4352
      %v2509 = vrot.slane %v583, 3
      %v2510 = vrot.slane %v579, 4
      %v2511 = vor.u32 %v2509, %v2510
      %v2512 = vrot.slane %v1319, 3
      %v2513 = vrot.slane %v587, 4
      %v2514 = vor.u32 %v2512, %v2513
      %v2515 = vsel %vm2508, %v2511, %v2514
      %v2516 = vrot.slane %v1326, 3
      %v2517 = vrot.slane %v1329, 4
      %v2518 = vor.u32 %v2516, %v2517
      %v2519 = vsel %vm2508, %v2514, %v2518
      %v2520 = vrot.slane %v1335, 3
      %v2521 = vrot.slane %v1338, 4
      %v2522 = vor.u32 %v2520, %v2521
      %v2523 = vsel %vm2508, %v2518, %v2522
      %v2524 = vrot.slane %v1344, 3
      %v2525 = vrot.slane %v1347, 4
      %v2526 = vor.u32 %v2524, %v2525
      %v2527 = vsel %vm2508, %v2522, %v2526
      %v2528 = vrot.slane %v1353, 3
      %v2529 = vrot.slane %v1356, 4
      %v2530 = vor.u32 %v2528, %v2529
      %v2531 = vsel %vm2508, %v2526, %v2530
      %v2532 = vrot.slane %v1362, 3
      %v2533 = vrot.slane %v1365, 4
      %v2534 = vor.u32 %v2532, %v2533
      %v2535 = vsel %vm2508, %v2530, %v2534
      %v2536 = vrot.slane %v1371, 3
      %v2537 = vrot.slane %v1374, 4
      %v2538 = vor.u32 %v2536, %v2537
      %v2539 = vsel %vm2508, %v2534, %v2538
      %v2540 = vrot.slane %v1380, 3
      %v2541 = vrot.slane %v1383, 4
      %v2542 = vor.u32 %v2540, %v2541
      %v2543 = vsel %vm2508, %v2538, %v2542
      %v2545 = vshrl.u32 %v447, 16
      %v2547 = vrot.slane %v2545, 3
      %v2548 = vshll.u32 %v447, 16
      %v2550 = vrot.slane %v2548, 4
      %v2551 = vor.u32 %v2547, %v2550
      %v2552 = vsel %vm2508, %v2542, %v2551
      %v2554 = vshrl.u32 %v448, 16
      %v2556 = vrot.slane %v2554, 3
      %v2557 = vshll.u32 %v448, 16
      %v2559 = vrot.slane %v2557, 4
      %v2560 = vor.u32 %v2556, %v2559
      %v2561 = vsel %vm2508, %v2551, %v2560
      %v2563 = vshrl.u32 %v449, 16
      %v2565 = vrot.slane %v2563, 3
      %v2566 = vshll.u32 %v449, 16
      %v2568 = vrot.slane %v2566, 4
      %v2569 = vor.u32 %v2565, %v2568
      %v2570 = vsel %vm2508, %v2560, %v2569
      %v2572 = vshrl.u32 %v450, 16
      %v2574 = vrot.slane %v2572, 3
      %v2575 = vshll.u32 %v450, 16
      %v2577 = vrot.slane %v2575, 4
      %v2578 = vor.u32 %v2574, %v2577
      %v2579 = vsel %vm2508, %v2569, %v2578
      %v2581 = vshrl.u32 %v451, 16
      %v2583 = vrot.slane %v2581, 3
      %v2584 = vshll.u32 %v451, 16
      %v2586 = vrot.slane %v2584, 4
      %v2587 = vor.u32 %v2583, %v2586
      %v2588 = vsel %vm2508, %v2578, %v2587
      %v2590 = vshrl.u32 %v452, 16
      %v2592 = vrot.slane %v2590, 3
      %v2593 = vshll.u32 %v452, 16
      %v2595 = vrot.slane %v2593, 4
      %v2596 = vor.u32 %v2592, %v2595
      %v2597 = vsel %vm2508, %v2587, %v2596
      %v2599 = vshrl.u32 %v453, 16
      %v2601 = vrot.slane %v2599, 3
      %v2602 = vshll.u32 %v453, 16
      %v2604 = vrot.slane %v2602, 4
      %v2605 = vor.u32 %v2601, %v2604
      %v2606 = vsel %vm2508, %v2596, %v2605
      %v2608 = vshrl.u32 %v454, 16
      %v2610 = vrot.slane %v2608, 3
      %v2611 = vshll.u32 %v454, 16
      %v2613 = vrot.slane %v2611, 4
      %v2614 = vor.u32 %v2610, %v2613
      %v2615 = vsel %vm2508, %v2605, %v2614
      %v2617 = vsel %vm591, %v2515, 0
      %v2620 = vsel %vm591, %v2519, 0
      %v2623 = vsel %vm591, %v2523, 0
      %v2626 = vsel %vm591, %v2527, 0
      %v2629 = vsel %vm591, %v2531, 0
      %v2632 = vsel %vm591, %v2535, 0
      %v2635 = vsel %vm591, %v2539, 0
      %v2638 = vsel %vm591, %v2543, 0
      %v2641 = vsel %vm591, %v2552, 0
      %v2644 = vsel %vm591, %v2561, 0
      %v2647 = vsel %vm591, %v2570, 0
      %v2650 = vsel %vm591, %v2579, 0
      %v2653 = vsel %vm591, %v2588, 0
      %v2656 = vsel %vm591, %v2597, 0
      %v2659 = vsel %vm591, %v2606, 0
      %v2662 = vsel %vm591, %v2615, 0
      %v2665 = vsel %vm640, %v2507, 0
      %2667 = vmatprep.subr.bf16.mxu0 0
      %2668 = vmatpush1.bf16.msra.mxu0 %v2665
      %2669 = vmatprep.subr.bf16.mxu0 0
      %2670 = vmatpush1.bf16.msra.mxu0 0
      %2671 = vmatprep.subr.bf16.mxu0 0
      %2672 = vmatpush1.bf16.msra.mxu0 0
      %2673 = vmatprep.subr.bf16.mxu0 0
      %2674 = vmatpush1.bf16.msra.mxu0 0
      %2675 = vmatprep.subr.bf16.mxu0 0
      %2676 = vmatpush1.bf16.msra.mxu0 0
      %2677 = vmatprep.subr.bf16.mxu0 0
      %2678 = vmatpush1.bf16.msra.mxu0 0
      %2679 = vmatprep.subr.bf16.mxu0 0
      %2680 = vmatpush1.bf16.msra.mxu0 0
      %2681 = vmatprep.subr.bf16.mxu0 0
      %2682 = vmatpush1.bf16.msra.mxu0 0
      %2683 = vmatprep.subr.bf16.mxu0 0
      %2684 = vmatpush1.bf16.msra.mxu0 0
      %2685 = vmatprep.subr.bf16.mxu0 0
      %2686 = vmatpush1.bf16.msra.mxu0 0
      %2687 = vmatprep.subr.bf16.mxu0 0
      %2688 = vmatpush1.bf16.msra.mxu0 0
      %2689 = vmatprep.subr.bf16.mxu0 0
      %2690 = vmatpush1.bf16.msra.mxu0 0
      %2691 = vmatprep.subr.bf16.mxu0 0
      %2692 = vmatpush1.bf16.msra.mxu0 0
      %2693 = vmatprep.subr.bf16.mxu0 0
      %2694 = vmatpush1.bf16.msra.mxu0 0
      %2695 = vmatprep.subr.bf16.mxu0 0
      %2696 = vmatpush1.bf16.msra.mxu0 0
      %2697 = vmatprep.subr.bf16.mxu0 0
      %2698 = vmatpush1.bf16.msra.mxu0 0
      %2699 = vmatprep.mubr.bf16.mxu0 0
      %2700 = vmatmul.mubr.bf16.gmra.mrb[0].mxu0 %v2617
      %v2701 = vpop.f32.mrb[0].mxu0
      %v2702 = vadd.f32 0.0, %v2701
      %v2703 = vpop.f32.mrb[0].mxu0
      %v2704 = vpop.f32.mrb[0].mxu0
      %v2705 = vadd.f32 0.0, %v2704
      %v2706 = vpop.f32.mrb[0].mxu0
      %2707 = vmatprep.mubr.bf16.mxu0 0
      %2708 = vmatmul.mubr.bf16.gmra.mrb[0].mxu0 %v2620
      %v2709 = vpop.f32.mrb[0].mxu0
      %v2710 = vadd.f32 0.0, %v2709
      %v2711 = vpop.f32.mrb[0].mxu0
      %v2712 = vpop.f32.mrb[0].mxu0
      %v2713 = vadd.f32 0.0, %v2712
      %v2714 = vpop.f32.mrb[0].mxu0
      %2715 = vmatprep.mubr.bf16.mxu0 0
      %2716 = vmatmul.mubr.bf16.gmra.mrb[0].mxu0 %v2623
      %v2717 = vpop.f32.mrb[0].mxu0
      %v2718 = vadd.f32 0.0, %v2717
      %v2719 = vpop.f32.mrb[0].mxu0
      %v2720 = vpop.f32.mrb[0].mxu0
      %v2721 = vadd.f32 0.0, %v2720
      %v2722 = vpop.f32.mrb[0].mxu0
      %2723 = vmatprep.mubr.bf16.mxu0 0
      %2724 = vmatmul.mubr.bf16.gmra.mrb[0].mxu0 %v2626
      %v2725 = vpop.f32.mrb[0].mxu0
      %v2726 = vadd.f32 0.0, %v2725
      %v2727 = vpop.f32.mrb[0].mxu0
      %v2728 = vpop.f32.mrb[0].mxu0
      %v2729 = vadd.f32 0.0, %v2728
      %v2730 = vpop.f32.mrb[0].mxu0
      %2731 = vmatprep.mubr.bf16.mxu0 0
      %2732 = vmatmul.mubr.bf16.gmra.mrb[0].mxu0 %v2629
      %v2733 = vpop.f32.mrb[0].mxu0
      %v2734 = vadd.f32 0.0, %v2733
      %v2735 = vpop.f32.mrb[0].mxu0
      %v2736 = vpop.f32.mrb[0].mxu0
      %v2737 = vadd.f32 0.0, %v2736
      %v2738 = vpop.f32.mrb[0].mxu0
      %2739 = vmatprep.mubr.bf16.mxu0 0
      %2740 = vmatmul.mubr.bf16.gmra.mrb[0].mxu0 %v2632
      %v2741 = vpop.f32.mrb[0].mxu0
      %v2742 = vadd.f32 0.0, %v2741
      %v2743 = vpop.f32.mrb[0].mxu0
      %v2744 = vpop.f32.mrb[0].mxu0
      %v2745 = vadd.f32 0.0, %v2744
      %v2746 = vpop.f32.mrb[0].mxu0
      %2747 = vmatprep.mubr.bf16.mxu0 0
      %2748 = vmatmul.mubr.bf16.gmra.mrb[0].mxu0 %v2635
      %v2749 = vpop.f32.mrb[0].mxu0
      %v2750 = vadd.f32 0.0, %v2749
      %v2751 = vpop.f32.mrb[0].mxu0
      %v2752 = vpop.f32.mrb[0].mxu0
      %v2753 = vadd.f32 0.0, %v2752
      %v2754 = vpop.f32.mrb[0].mxu0
      %2755 = vmatprep.mubr.bf16.mxu0 0
      %2756 = vmatmul.mubr.bf16.gmra.mrb[0].mxu0 %v2638
      %v2757 = vpop.f32.mrb[0].mxu0
      %v2758 = vadd.f32 0.0, %v2757
      %v2759 = vpop.f32.mrb[0].mxu0
      %v2760 = vpop.f32.mrb[0].mxu0
      %v2761 = vadd.f32 0.0, %v2760
      %v2762 = vpop.f32.mrb[0].mxu0
      %2763 = vmatprep.mubr.bf16.mxu0 0
      %2764 = vmatmul.mubr.bf16.gmra.mrb[0].mxu0 %v2641
      %v2765 = vpop.f32.mrb[0].mxu0
      %v2766 = vadd.f32 0.0, %v2765
      %v2767 = vpop.f32.mrb[0].mxu0
      %v2768 = vpop.f32.mrb[0].mxu0
      %v2769 = vadd.f32 0.0, %v2768
      %v2770 = vpop.f32.mrb[0].mxu0
      %2771 = vmatprep.mubr.bf16.mxu0 0
      %2772 = vmatmul.mubr.bf16.gmra.mrb[0].mxu0 %v2644
      %v2773 = vpop.f32.mrb[0].mxu0
      %v2774 = vadd.f32 0.0, %v2773
      %v2775 = vpop.f32.mrb[0].mxu0
      %v2776 = vpop.f32.mrb[0].mxu0
      %v2777 = vadd.f32 0.0, %v2776
      %v2778 = vpop.f32.mrb[0].mxu0
      %2779 = vmatprep.mubr.bf16.mxu0 0
      %2780 = vmatmul.mubr.bf16.gmra.mrb[0].mxu0 %v2647
      %v2781 = vpop.f32.mrb[0].mxu0
      %v2782 = vadd.f32 0.0, %v2781
      %v2783 = vpop.f32.mrb[0].mxu0
      %v2784 = vpop.f32.mrb[0].mxu0
      %v2785 = vadd.f32 0.0, %v2784
      %v2786 = vpop.f32.mrb[0].mxu0
      %2787 = vmatprep.mubr.bf16.mxu0 0
      %2788 = vmatmul.mubr.bf16.gmra.mrb[0].mxu0 %v2650
      %v2789 = vpop.f32.mrb[0].mxu0
      %v2790 = vadd.f32 0.0, %v2789
      %v2791 = vpop.f32.mrb[0].mxu0
      %v2792 = vpop.f32.mrb[0].mxu0
      %v2793 = vadd.f32 0.0, %v2792
      %v2794 = vpop.f32.mrb[0].mxu0
      %2795 = vmatprep.mubr.bf16.mxu0 0
      %2796 = vmatmul.mubr.bf16.gmra.mrb[0].mxu0 %v2653
      %v2797 = vpop.f32.mrb[0].mxu0
      %v2798 = vadd.f32 0.0, %v2797
      %v2799 = vpop.f32.mrb[0].mxu0
      %v2800 = vpop.f32.mrb[0].mxu0
      %v2801 = vadd.f32 0.0, %v2800
      %v2802 = vpop.f32.mrb[0].mxu0
      %2803 = vmatprep.mubr.bf16.mxu0 0
      %2804 = vmatmul.mubr.bf16.gmra.mrb[0].mxu0 %v2656
      %v2805 = vpop.f32.mrb[0].mxu0
      %v2806 = vadd.f32 0.0, %v2805
      %v2807 = vpop.f32.mrb[0].mxu0
      %v2808 = vpop.f32.mrb[0].mxu0
      %v2809 = vadd.f32 0.0, %v2808
      %v2810 = vpop.f32.mrb[0].mxu0
      %2811 = vmatprep.mubr.bf16.mxu0 0
      %2812 = vmatmul.mubr.bf16.gmra.mrb[0].mxu0 %v2659
      %v2813 = vpop.f32.mrb[0].mxu0
      %v2814 = vadd.f32 0.0, %v2813
      %v2815 = vpop.f32.mrb[0].mxu0
      %v2816 = vpop.f32.mrb[0].mxu0
      %v2817 = vadd.f32 0.0, %v2816
      %v2818 = vpop.f32.mrb[0].mxu0
      %2819 = vmatprep.mubr.bf16.mxu0 0
      %2820 = vmatmul.mubr.bf16.gmra.mrb[0].mxu0 %v2662
      %v2821 = vpop.f32.mrb[0].mxu0
      %v2822 = vadd.f32 0.0, %v2821
      %v2823 = vpop.f32.mrb[0].mxu0
      %v2824 = vpop.f32.mrb[0].mxu0
      %v2825 = vadd.f32 0.0, %v2824
      %v2826 = vpop.f32.mrb[0].mxu0
      %2827 = vdwg.mxu0
      %v2828 = vadd.f32 %v2474, %v2702
      %v2829 = vadd.f32 %v2475, %v2705
      %v2830 = vadd.f32 %v2476, %v2710
      %v2831 = vadd.f32 %v2477, %v2713
      %v2832 = vadd.f32 %v2478, %v2718
      %v2833 = vadd.f32 %v2479, %v2721
      %v2834 = vadd.f32 %v2480, %v2726
      %v2835 = vadd.f32 %v2481, %v2729
      %v2836 = vadd.f32 %v2482, %v2734
      %v2837 = vadd.f32 %v2483, %v2737
      %v2838 = vadd.f32 %v2484, %v2742
      %v2839 = vadd.f32 %v2485, %v2745
      %v2840 = vadd.f32 %v2486, %v2750
      %v2841 = vadd.f32 %v2487, %v2753
      %v2842 = vadd.f32 %v2488, %v2758
      %v2843 = vadd.f32 %v2489, %v2761
      %v2844 = vadd.f32 %v2490, %v2766
      %v2845 = vadd.f32 %v2491, %v2769
      %v2846 = vadd.f32 %v2492, %v2774
      %v2847 = vadd.f32 %v2493, %v2777
      %v2848 = vadd.f32 %v2494, %v2782
      %v2849 = vadd.f32 %v2495, %v2785
      %v2850 = vadd.f32 %v2496, %v2790
      %v2851 = vadd.f32 %v2497, %v2793
      %v2852 = vadd.f32 %v2498, %v2798
      %v2853 = vadd.f32 %v2499, %v2801
      %v2854 = vadd.f32 %v2500, %v2806
      %v2855 = vadd.f32 %v2501, %v2809
      %v2856 = vadd.f32 %v2502, %v2814
      %v2857 = vadd.f32 %v2503, %v2817
      %v2858 = vadd.f32 %v2504, %v2822
      %v2859 = vadd.f32 %v2505, %v2825
      %s2860 = scalar_lea.vmem %s2, 32
      %v2861 = vld [vmem:[%s2860] sm:$0xf]
      %vm2862 = vcmask 1043456
      %v2863 = vrot.slane %v374, 4
      %v2864 = vrot.slane %v439, 4
      %v2865 = vsel %vm2862, %v2863, %v2864
      %v2866 = vrot.slane %v440, 4
      %v2867 = vsel %vm2862, %v2864, %v2866
      %v2868 = vrot.slane %v441, 4
      %v2869 = vsel %vm2862, %v2866, %v2868
      %v2870 = vrot.slane %v442, 4
      %v2871 = vsel %vm2862, %v2868, %v2870
      %v2872 = vrot.slane %v443, 4
      %v2873 = vsel %vm2862, %v2870, %v2872
      %v2874 = vrot.slane %v444, 4
      %v2875 = vsel %vm2862, %v2872, %v2874
      %v2876 = vrot.slane %v445, 4
      %v2877 = vsel %vm2862, %v2874, %v2876
      %v2878 = vrot.slane %v446, 4
      %v2879 = vsel %vm2862, %v2876, %v2878
      %v2880 = vrot.slane %v447, 4
      %v2881 = vsel %vm2862, %v2878, %v2880
      %v2882 = vrot.slane %v448, 4
      %v2883 = vsel %vm2862, %v2880, %v2882
      %v2884 = vrot.slane %v449, 4
      %v2885 = vsel %vm2862, %v2882, %v2884
      %v2886 = vrot.slane %v450, 4
      %v2887 = vsel %vm2862, %v2884, %v2886
      %v2888 = vrot.slane %v451, 4
      %v2889 = vsel %vm2862, %v2886, %v2888
      %v2890 = vrot.slane %v452, 4
      %v2891 = vsel %vm2862, %v2888, %v2890
      %v2892 = vrot.slane %v453, 4
      %v2893 = vsel %vm2862, %v2890, %v2892
      %v2894 = vrot.slane %v454, 4
      %v2895 = vsel %vm2862, %v2892, %v2894
      %v2897 = vsel %vm591, %v2865, 0
      %v2900 = vsel %vm591, %v2867, 0
      %v2903 = vsel %vm591, %v2869, 0
      %v2906 = vsel %vm591, %v2871, 0
      %v2909 = vsel %vm591, %v2873, 0
      %v2912 = vsel %vm591, %v2875, 0
      %v2915 = vsel %vm591, %v2877, 0
      %v2918 = vsel %vm591, %v2879, 0
      %v2921 = vsel %vm591, %v2881, 0
      %v2924 = vsel %vm591, %v2883, 0
      %v2927 = vsel %vm591, %v2885, 0
      %v2930 = vsel %vm591, %v2887, 0
      %v2933 = vsel %vm591, %v2889, 0
      %v2936 = vsel %vm591, %v2891, 0
      %v2939 = vsel %vm591, %v2893, 0
      %v2942 = vsel %vm591, %v2895, 0
      %v2945 = vsel %vm640, %v2861, 0
      %2947 = vmatprep.subr.bf16.mxu0 0
      %2948 = vmatpush1.bf16.msra.mxu0 %v2945
      %2949 = vmatprep.subr.bf16.mxu0 0
      %2950 = vmatpush1.bf16.msra.mxu0 0
      %2951 = vmatprep.subr.bf16.mxu0 0
      %2952 = vmatpush1.bf16.msra.mxu0 0
      %2953 = vmatprep.subr.bf16.mxu0 0
      %2954 = vmatpush1.bf16.msra.mxu0 0
      %2955 = vmatprep.subr.bf16.mxu0 0
      %2956 = vmatpush1.bf16.msra.mxu0 0
      %2957 = vmatprep.subr.bf16.mxu0 0
      %2958 = vmatpush1.bf16.msra.mxu0 0
      %2959 = vmatprep.subr.bf16.mxu0 0
      %2960 = vmatpush1.bf16.msra.mxu0 0
      %2961 = vmatprep.subr.bf16.mxu0 0
      %2962 = vmatpush1.bf16.msra.mxu0 0
      %2963 = vmatprep.subr.bf16.mxu0 0
      %2964 = vmatpush1.bf16.msra.mxu0 0
      %2965 = vmatprep.subr.bf16.mxu0 0
      %2966 = vmatpush1.bf16.msra.mxu0 0
      %2967 = vmatprep.subr.bf16.mxu0 0
      %2968 = vmatpush1.bf16.msra.mxu0 0
      %2969 = vmatprep.subr.bf16.mxu0 0
      %2970 = vmatpush1.bf16.msra.mxu0 0
      %2971 = vmatprep.subr.bf16.mxu0 0
      %2972 = vmatpush1.bf16.msra.mxu0 0
      %2973 = vmatprep.subr.bf16.mxu0 0
      %2974 = vmatpush1.bf16.msra.mxu0 0
      %2975 = vmatprep.subr.bf16.mxu0 0
      %2976 = vmatpush1.bf16.msra.mxu0 0
      %2977 = vmatprep.subr.bf16.mxu0 0
      %2978 = vmatpush1.bf16.msra.mxu0 0
      %2979 = vmatprep.mubr.bf16.mxu0 0
      %2980 = vmatmul.mubr.bf16.gmra.mrb[0].mxu0 %v2897
      %v2981 = vpop.f32.mrb[0].mxu0
      %v2982 = vadd.f32 0.0, %v2981
      %v2983 = vpop.f32.mrb[0].mxu0
      %v2984 = vpop.f32.mrb[0].mxu0
      %v2985 = vadd.f32 0.0, %v2984
      %v2986 = vpop.f32.mrb[0].mxu0
      %2987 = vmatprep.mubr.bf16.mxu0 0
      %2988 = vmatmul.mubr.bf16.gmra.mrb[0].mxu0 %v2900
      %v2989 = vpop.f32.mrb[0].mxu0
      %v2990 = vadd.f32 0.0, %v2989
      %v2991 = vpop.f32.mrb[0].mxu0
      %v2992 = vpop.f32.mrb[0].mxu0
      %v2993 = vadd.f32 0.0, %v2992
      %v2994 = vpop.f32.mrb[0].mxu0
      %2995 = vmatprep.mubr.bf16.mxu0 0
      %2996 = vmatmul.mubr.bf16.gmra.mrb[0].mxu0 %v2903
      %v2997 = vpop.f32.mrb[0].mxu0
      %v2998 = vadd.f32 0.0, %v2997
      %v2999 = vpop.f32.mrb[0].mxu0
      %v3000 = vpop.f32.mrb[0].mxu0
      %v3001 = vadd.f32 0.0, %v3000
      %v3002 = vpop.f32.mrb[0].mxu0
      %3003 = vmatprep.mubr.bf16.mxu0 0
      %3004 = vmatmul.mubr.bf16.gmra.mrb[0].mxu0 %v2906
      %v3005 = vpop.f32.mrb[0].mxu0
      %v3006 = vadd.f32 0.0, %v3005
      %v3007 = vpop.f32.mrb[0].mxu0
      %v3008 = vpop.f32.mrb[0].mxu0
      %v3009 = vadd.f32 0.0, %v3008
      %v3010 = vpop.f32.mrb[0].mxu0
      %3011 = vmatprep.mubr.bf16.mxu0 0
      %3012 = vmatmul.mubr.bf16.gmra.mrb[0].mxu0 %v2909
      %v3013 = vpop.f32.mrb[0].mxu0
      %v3014 = vadd.f32 0.0, %v3013
      %v3015 = vpop.f32.mrb[0].mxu0
      %v3016 = vpop.f32.mrb[0].mxu0
      %v3017 = vadd.f32 0.0, %v3016
      %v3018 = vpop.f32.mrb[0].mxu0
      %3019 = vmatprep.mubr.bf16.mxu0 0
      %3020 = vmatmul.mubr.bf16.gmra.mrb[0].mxu0 %v2912
      %v3021 = vpop.f32.mrb[0].mxu0
      %v3022 = vadd.f32 0.0, %v3021
      %v3023 = vpop.f32.mrb[0].mxu0
      %v3024 = vpop.f32.mrb[0].mxu0
      %v3025 = vadd.f32 0.0, %v3024
      %v3026 = vpop.f32.mrb[0].mxu0
      %3027 = vmatprep.mubr.bf16.mxu0 0
      %3028 = vmatmul.mubr.bf16.gmra.mrb[0].mxu0 %v2915
      %v3029 = vpop.f32.mrb[0].mxu0
      %v3030 = vadd.f32 0.0, %v3029
      %v3031 = vpop.f32.mrb[0].mxu0
      %v3032 = vpop.f32.mrb[0].mxu0
      %v3033 = vadd.f32 0.0, %v3032
      %v3034 = vpop.f32.mrb[0].mxu0
      %3035 = vmatprep.mubr.bf16.mxu0 0
      %3036 = vmatmul.mubr.bf16.gmra.mrb[0].mxu0 %v2918
      %v3037 = vpop.f32.mrb[0].mxu0
      %v3038 = vadd.f32 0.0, %v3037
      %v3039 = vpop.f32.mrb[0].mxu0
      %v3040 = vpop.f32.mrb[0].mxu0
      %v3041 = vadd.f32 0.0, %v3040
      %v3042 = vpop.f32.mrb[0].mxu0
      %3043 = vmatprep.mubr.bf16.mxu0 0
      %3044 = vmatmul.mubr.bf16.gmra.mrb[0].mxu0 %v2921
      %v3045 = vpop.f32.mrb[0].mxu0
      %v3046 = vadd.f32 0.0, %v3045
      %v3047 = vpop.f32.mrb[0].mxu0
      %v3048 = vpop.f32.mrb[0].mxu0
      %v3049 = vadd.f32 0.0, %v3048
      %v3050 = vpop.f32.mrb[0].mxu0
      %3051 = vmatprep.mubr.bf16.mxu0 0
      %3052 = vmatmul.mubr.bf16.gmra.mrb[0].mxu0 %v2924
      %v3053 = vpop.f32.mrb[0].mxu0
      %v3054 = vadd.f32 0.0, %v3053
      %v3055 = vpop.f32.mrb[0].mxu0
      %v3056 = vpop.f32.mrb[0].mxu0
      %v3057 = vadd.f32 0.0, %v3056
      %v3058 = vpop.f32.mrb[0].mxu0
      %3059 = vmatprep.mubr.bf16.mxu0 0
      %3060 = vmatmul.mubr.bf16.gmra.mrb[0].mxu0 %v2927
      %v3061 = vpop.f32.mrb[0].mxu0
      %v3062 = vadd.f32 0.0, %v3061
      %v3063 = vpop.f32.mrb[0].mxu0
      %v3064 = vpop.f32.mrb[0].mxu0
      %v3065 = vadd.f32 0.0, %v3064
      %v3066 = vpop.f32.mrb[0].mxu0
      %3067 = vmatprep.mubr.bf16.mxu0 0
      %3068 = vmatmul.mubr.bf16.gmra.mrb[0].mxu0 %v2930
      %v3069 = vpop.f32.mrb[0].mxu0
      %v3070 = vadd.f32 0.0, %v3069
      %v3071 = vpop.f32.mrb[0].mxu0
      %v3072 = vpop.f32.mrb[0].mxu0
      %v3073 = vadd.f32 0.0, %v3072
      %v3074 = vpop.f32.mrb[0].mxu0
      %3075 = vmatprep.mubr.bf16.mxu0 0
      %3076 = vmatmul.mubr.bf16.gmra.mrb[0].mxu0 %v2933
      %v3077 = vpop.f32.mrb[0].mxu0
      %v3078 = vadd.f32 0.0, %v3077
      %v3079 = vpop.f32.mrb[0].mxu0
      %v3080 = vpop.f32.mrb[0].mxu0
      %v3081 = vadd.f32 0.0, %v3080
      %v3082 = vpop.f32.mrb[0].mxu0
      %3083 = vmatprep.mubr.bf16.mxu0 0
      %3084 = vmatmul.mubr.bf16.gmra.mrb[0].mxu0 %v2936
      %v3085 = vpop.f32.mrb[0].mxu0
      %v3086 = vadd.f32 0.0, %v3085
      %v3087 = vpop.f32.mrb[0].mxu0
      %v3088 = vpop.f32.mrb[0].mxu0
      %v3089 = vadd.f32 0.0, %v3088
      %v3090 = vpop.f32.mrb[0].mxu0
      %3091 = vmatprep.mubr.bf16.mxu0 0
      %3092 = vmatmul.mubr.bf16.gmra.mrb[0].mxu0 %v2939
      %v3093 = vpop.f32.mrb[0].mxu0
      %v3094 = vadd.f32 0.0, %v3093
      %v3095 = vpop.f32.mrb[0].mxu0
      %v3096 = vpop.f32.mrb[0].mxu0
      %v3097 = vadd.f32 0.0, %v3096
      %v3098 = vpop.f32.mrb[0].mxu0
      %3099 = vmatprep.mubr.bf16.mxu0 0
      %3100 = vmatmul.mubr.bf16.gmra.mrb[0].mxu0 %v2942
      %v3101 = vpop.f32.mrb[0].mxu0
      %v3102 = vadd.f32 0.0, %v3101
      %v3103 = vpop.f32.mrb[0].mxu0
      %v3104 = vpop.f32.mrb[0].mxu0
      %v3105 = vadd.f32 0.0, %v3104
      %v3106 = vpop.f32.mrb[0].mxu0
      %3107 = vdwg.mxu0
      %v3108 = vadd.f32 %v2828, %v2982
      %v3109 = vadd.f32 %v2829, %v2985
      %v3110 = vadd.f32 %v2830, %v2990
      %v3111 = vadd.f32 %v2831, %v2993
      %v3112 = vadd.f32 %v2832, %v2998
      %v3113 = vadd.f32 %v2833, %v3001
      %v3114 = vadd.f32 %v2834, %v3006
      %v3115 = vadd.f32 %v2835, %v3009
      %v3116 = vadd.f32 %v2836, %v3014
      %v3117 = vadd.f32 %v2837, %v3017
      %v3118 = vadd.f32 %v2838, %v3022
      %v3119 = vadd.f32 %v2839, %v3025
      %v3120 = vadd.f32 %v2840, %v3030
      %v3121 = vadd.f32 %v2841, %v3033
      %v3122 = vadd.f32 %v2842, %v3038
      %v3123 = vadd.f32 %v2843, %v3041
      %v3124 = vadd.f32 %v2844, %v3046
      %v3125 = vadd.f32 %v2845, %v3049
      %v3126 = vadd.f32 %v2846, %v3054
      %v3127 = vadd.f32 %v2847, %v3057
      %v3128 = vadd.f32 %v2848, %v3062
      %v3129 = vadd.f32 %v2849, %v3065
      %v3130 = vadd.f32 %v2850, %v3070
      %v3131 = vadd.f32 %v2851, %v3073
      %v3132 = vadd.f32 %v2852, %v3078
      %v3133 = vadd.f32 %v2853, %v3081
      %v3134 = vadd.f32 %v2854, %v3086
      %v3135 = vadd.f32 %v2855, %v3089
      %v3136 = vadd.f32 %v2856, %v3094
      %v3137 = vadd.f32 %v2857, %v3097
      %v3138 = vadd.f32 %v2858, %v3102
      %v3139 = vadd.f32 %v2859, %v3105
      %v3140 = vld [vmem:[%s3] sm:$0x1]
      %v3142 = vlaneseq
      %v3143 = vshrl.u32 %v3142, 7
      %v3144 = vsub.s32 0, %v3143
      %v3145 = vrot.slane %v3140, %v3144
      %v3147 = vadd.f32 %v3108, %v3145
      %v3148 = vadd.f32 %v3109, %v3145
      %v3149 = vadd.f32 %v3110, %v3145
      %v3150 = vadd.f32 %v3111, %v3145
      %v3151 = vadd.f32 %v3112, %v3145
      %v3152 = vadd.f32 %v3113, %v3145
      %v3153 = vadd.f32 %v3114, %v3145
      %v3154 = vadd.f32 %v3115, %v3145
      %v3155 = vadd.f32 %v3116, %v3145
      %v3156 = vadd.f32 %v3117, %v3145
      %v3157 = vadd.f32 %v3118, %v3145
      %v3158 = vadd.f32 %v3119, %v3145
      %v3159 = vadd.f32 %v3120, %v3145
      %v3160 = vadd.f32 %v3121, %v3145
      %v3161 = vadd.f32 %v3122, %v3145
      %v3162 = vadd.f32 %v3123, %v3145
      %v3163 = vadd.f32 %v3124, %v3145
      %v3164 = vadd.f32 %v3125, %v3145
      %v3165 = vadd.f32 %v3126, %v3145
      %v3166 = vadd.f32 %v3127, %v3145
      %v3167 = vadd.f32 %v3128, %v3145
      %v3168 = vadd.f32 %v3129, %v3145
      %v3169 = vadd.f32 %v3130, %v3145
      %v3170 = vadd.f32 %v3131, %v3145
      %v3171 = vadd.f32 %v3132, %v3145
      %v3172 = vadd.f32 %v3133, %v3145
      %v3173 = vadd.f32 %v3134, %v3145
      %v3174 = vadd.f32 %v3135, %v3145
      %v3175 = vadd.f32 %v3136, %v3145
      %v3176 = vadd.f32 %v3137, %v3145
      %v3177 = vadd.f32 %v3138, %v3145
      %v3178 = vadd.f32 %v3139, %v3145
      %v3179 = vmul.f32 %v3147, %v3147
      %v3180 = vmul.f32 %v3148, %v3148
      %v3181 = vmul.f32 %v3149, %v3149
      %v3182 = vmul.f32 %v3150, %v3150
      %v3183 = vmul.f32 %v3151, %v3151
      %v3184 = vmul.f32 %v3152, %v3152
      %v3185 = vmul.f32 %v3153, %v3153
      %v3186 = vmul.f32 %v3154, %v3154
      %v3187 = vmul.f32 %v3155, %v3155
      %v3188 = vmul.f32 %v3156, %v3156
      %v3189 = vmul.f32 %v3157, %v3157
      %v3190 = vmul.f32 %v3158, %v3158
      %v3191 = vmul.f32 %v3159, %v3159
      %v3192 = vmul.f32 %v3160, %v3160
      %v3193 = vmul.f32 %v3161, %v3161
      %v3194 = vmul.f32 %v3162, %v3162
      %v3195 = vmul.f32 %v3163, %v3163
      %v3196 = vmul.f32 %v3164, %v3164
      %v3197 = vmul.f32 %v3165, %v3165
      %v3198 = vmul.f32 %v3166, %v3166
      %v3199 = vmul.f32 %v3167, %v3167
      %v3200 = vmul.f32 %v3168, %v3168
      %v3201 = vmul.f32 %v3169, %v3169
      %v3202 = vmul.f32 %v3170, %v3170
      %v3203 = vmul.f32 %v3171, %v3171
      %v3204 = vmul.f32 %v3172, %v3172
      %v3205 = vmul.f32 %v3173, %v3173
      %v3206 = vmul.f32 %v3174, %v3174
      %v3207 = vmul.f32 %v3175, %v3175
      %v3208 = vmul.f32 %v3176, %v3176
      %v3209 = vmul.f32 %v3177, %v3177
      %v3210 = vmul.f32 %v3178, %v3178
      %3243 = vrot.lane.b32.xlu0 %v3179, 127
      %v3244 = vpop.permute.xlu0 %3243
      %3245 = vrot.lane.b32.xlu0 %v3180, 127
      %v3246 = vpop.permute.xlu0 %3245
      %3247 = vrot.lane.b32.xlu0 %v3181, 127
      %v3248 = vpop.permute.xlu0 %3247
      %3249 = vrot.lane.b32.xlu0 %v3182, 127
      %v3250 = vpop.permute.xlu0 %3249
      %3251 = vrot.lane.b32.xlu0 %v3183, 127
      %v3252 = vpop.permute.xlu0 %3251
      %3253 = vrot.lane.b32.xlu0 %v3184, 127
      %v3254 = vpop.permute.xlu0 %3253
      %3255 = vrot.lane.b32.xlu0 %v3185, 127
      %v3256 = vpop.permute.xlu0 %3255
      %3257 = vrot.lane.b32.xlu0 %v3186, 127
      %v3258 = vpop.permute.xlu0 %3257
      %3259 = vrot.lane.b32.xlu0 %v3187, 127
      %v3260 = vpop.permute.xlu0 %3259
      %3261 = vrot.lane.b32.xlu0 %v3188, 127
      %v3262 = vpop.permute.xlu0 %3261
      %3263 = vrot.lane.b32.xlu0 %v3189, 127
      %v3264 = vpop.permute.xlu0 %3263
      %3265 = vrot.lane.b32.xlu0 %v3190, 127
      %v3266 = vpop.permute.xlu0 %3265
      %3267 = vrot.lane.b32.xlu0 %v3191, 127
      %v3268 = vpop.permute.xlu0 %3267
      %3269 = vrot.lane.b32.xlu0 %v3192, 127
      %v3270 = vpop.permute.xlu0 %3269
      %3271 = vrot.lane.b32.xlu0 %v3193, 127
      %v3272 = vpop.permute.xlu0 %3271
      %3273 = vrot.lane.b32.xlu0 %v3194, 127
      %v3274 = vpop.permute.xlu0 %3273
      %3275 = vrot.lane.b32.xlu0 %v3195, 127
      %v3276 = vpop.permute.xlu0 %3275
      %3277 = vrot.lane.b32.xlu0 %v3196, 127
      %v3278 = vpop.permute.xlu0 %3277
      %3279 = vrot.lane.b32.xlu0 %v3197, 127
      %v3280 = vpop.permute.xlu0 %3279
      %3281 = vrot.lane.b32.xlu0 %v3198, 127
      %v3282 = vpop.permute.xlu0 %3281
      %3283 = vrot.lane.b32.xlu0 %v3199, 127
      %v3284 = vpop.permute.xlu0 %3283
      %3285 = vrot.lane.b32.xlu0 %v3200, 127
      %v3286 = vpop.permute.xlu0 %3285
      %3287 = vrot.lane.b32.xlu0 %v3201, 127
      %v3288 = vpop.permute.xlu0 %3287
      %3289 = vrot.lane.b32.xlu0 %v3202, 127
      %v3290 = vpop.permute.xlu0 %3289
      %3291 = vrot.lane.b32.xlu0 %v3203, 127
      %v3292 = vpop.permute.xlu0 %3291
      %3293 = vrot.lane.b32.xlu0 %v3204, 127
      %v3294 = vpop.permute.xlu0 %3293
      %3295 = vrot.lane.b32.xlu0 %v3205, 127
      %v3296 = vpop.permute.xlu0 %3295
      %3297 = vrot.lane.b32.xlu0 %v3206, 127
      %v3298 = vpop.permute.xlu0 %3297
      %3299 = vrot.lane.b32.xlu0 %v3207, 127
      %v3300 = vpop.permute.xlu0 %3299
      %3301 = vrot.lane.b32.xlu0 %v3208, 127
      %v3302 = vpop.permute.xlu0 %3301
      %3303 = vrot.lane.b32.xlu0 %v3209, 127
      %v3304 = vpop.permute.xlu0 %3303
      %3305 = vrot.lane.b32.xlu0 %v3210, 127
      %v3306 = vpop.permute.xlu0 %3305
      %v3339 = vadd.f32 %v3179, %v3244
      %v3340 = vadd.f32 %v3180, %v3246
      %v3341 = vadd.f32 %v3181, %v3248
      %v3342 = vadd.f32 %v3182, %v3250
      %v3343 = vadd.f32 %v3183, %v3252
      %v3344 = vadd.f32 %v3184, %v3254
      %v3345 = vadd.f32 %v3185, %v3256
      %v3346 = vadd.f32 %v3186, %v3258
      %v3347 = vadd.f32 %v3187, %v3260
      %v3348 = vadd.f32 %v3188, %v3262
      %v3349 = vadd.f32 %v3189, %v3264
      %v3350 = vadd.f32 %v3190, %v3266
      %v3351 = vadd.f32 %v3191, %v3268
      %v3352 = vadd.f32 %v3192, %v3270
      %v3353 = vadd.f32 %v3193, %v3272
      %v3354 = vadd.f32 %v3194, %v3274
      %v3355 = vadd.f32 %v3195, %v3276
      %v3356 = vadd.f32 %v3196, %v3278
      %v3357 = vadd.f32 %v3197, %v3280
      %v3358 = vadd.f32 %v3198, %v3282
      %v3359 = vadd.f32 %v3199, %v3284
      %v3360 = vadd.f32 %v3200, %v3286
      %v3361 = vadd.f32 %v3201, %v3288
      %v3362 = vadd.f32 %v3202, %v3290
      %v3363 = vadd.f32 %v3203, %v3292
      %v3364 = vadd.f32 %v3204, %v3294
      %v3365 = vadd.f32 %v3205, %v3296
      %v3366 = vadd.f32 %v3206, %v3298
      %v3367 = vadd.f32 %v3207, %v3300
      %v3368 = vadd.f32 %v3208, %v3302
      %v3369 = vadd.f32 %v3209, %v3304
      %v3370 = vadd.f32 %v3210, %v3306
      %3371 = vrot.lane.b32.xlu0 %v3179, 126
      %v3372 = vpop.permute.xlu0 %3371
      %3373 = vrot.lane.b32.xlu0 %v3180, 126
      %v3374 = vpop.permute.xlu0 %3373
      %3375 = vrot.lane.b32.xlu0 %v3181, 126
      %v3376 = vpop.permute.xlu0 %3375
      %3377 = vrot.lane.b32.xlu0 %v3182, 126
      %v3378 = vpop.permute.xlu0 %3377
      %3379 = vrot.lane.b32.xlu0 %v3183, 126
      %v3380 = vpop.permute.xlu0 %3379
      %3381 = vrot.lane.b32.xlu0 %v3184, 126
      %v3382 = vpop.permute.xlu0 %3381
      %3383 = vrot.lane.b32.xlu0 %v3185, 126
      %v3384 = vpop.permute.xlu0 %3383
      %3385 = vrot.lane.b32.xlu0 %v3186, 126
      %v3386 = vpop.permute.xlu0 %3385
      %3387 = vrot.lane.b32.xlu0 %v3187, 126
      %v3388 = vpop.permute.xlu0 %3387
      %3389 = vrot.lane.b32.xlu0 %v3188, 126
      %v3390 = vpop.permute.xlu0 %3389
      %3391 = vrot.lane.b32.xlu0 %v3189, 126
      %v3392 = vpop.permute.xlu0 %3391
      %3393 = vrot.lane.b32.xlu0 %v3190, 126
      %v3394 = vpop.permute.xlu0 %3393
      %3395 = vrot.lane.b32.xlu0 %v3191, 126
      %v3396 = vpop.permute.xlu0 %3395
      %3397 = vrot.lane.b32.xlu0 %v3192, 126
      %v3398 = vpop.permute.xlu0 %3397
      %3399 = vrot.lane.b32.xlu0 %v3193, 126
      %v3400 = vpop.permute.xlu0 %3399
      %3401 = vrot.lane.b32.xlu0 %v3194, 126
      %v3402 = vpop.permute.xlu0 %3401
      %3403 = vrot.lane.b32.xlu0 %v3195, 126
      %v3404 = vpop.permute.xlu0 %3403
      %3405 = vrot.lane.b32.xlu0 %v3196, 126
      %v3406 = vpop.permute.xlu0 %3405
      %3407 = vrot.lane.b32.xlu0 %v3197, 126
      %v3408 = vpop.permute.xlu0 %3407
      %3409 = vrot.lane.b32.xlu0 %v3198, 126
      %v3410 = vpop.permute.xlu0 %3409
      %3411 = vrot.lane.b32.xlu0 %v3199, 126
      %v3412 = vpop.permute.xlu0 %3411
      %3413 = vrot.lane.b32.xlu0 %v3200, 126
      %v3414 = vpop.permute.xlu0 %3413
      %3415 = vrot.lane.b32.xlu0 %v3201, 126
      %v3416 = vpop.permute.xlu0 %3415
      %3417 = vrot.lane.b32.xlu0 %v3202, 126
      %v3418 = vpop.permute.xlu0 %3417
      %3419 = vrot.lane.b32.xlu0 %v3203, 126
      %v3420 = vpop.permute.xlu0 %3419
      %3421 = vrot.lane.b32.xlu0 %v3204, 126
      %v3422 = vpop.permute.xlu0 %3421
      %3423 = vrot.lane.b32.xlu0 %v3205, 126
      %v3424 = vpop.permute.xlu0 %3423
      %3425 = vrot.lane.b32.xlu0 %v3206, 126
      %v3426 = vpop.permute.xlu0 %3425
      %3427 = vrot.lane.b32.xlu0 %v3207, 126
      %v3428 = vpop.permute.xlu0 %3427
      %3429 = vrot.lane.b32.xlu0 %v3208, 126
      %v3430 = vpop.permute.xlu0 %3429
      %3431 = vrot.lane.b32.xlu0 %v3209, 126
      %v3432 = vpop.permute.xlu0 %3431
      %3433 = vrot.lane.b32.xlu0 %v3210, 126
      %v3434 = vpop.permute.xlu0 %3433
      %v3467 = vadd.f32 %v3339, %v3372
      %v3468 = vadd.f32 %v3340, %v3374
      %v3469 = vadd.f32 %v3341, %v3376
      %v3470 = vadd.f32 %v3342, %v3378
      %v3471 = vadd.f32 %v3343, %v3380
      %v3472 = vadd.f32 %v3344, %v3382
      %v3473 = vadd.f32 %v3345, %v3384
      %v3474 = vadd.f32 %v3346, %v3386
      %v3475 = vadd.f32 %v3347, %v3388
      %v3476 = vadd.f32 %v3348, %v3390
      %v3477 = vadd.f32 %v3349, %v3392
      %v3478 = vadd.f32 %v3350, %v3394
      %v3479 = vadd.f32 %v3351, %v3396
      %v3480 = vadd.f32 %v3352, %v3398
      %v3481 = vadd.f32 %v3353, %v3400
      %v3482 = vadd.f32 %v3354, %v3402
      %v3483 = vadd.f32 %v3355, %v3404
      %v3484 = vadd.f32 %v3356, %v3406
      %v3485 = vadd.f32 %v3357, %v3408
      %v3486 = vadd.f32 %v3358, %v3410
      %v3487 = vadd.f32 %v3359, %v3412
      %v3488 = vadd.f32 %v3360, %v3414
      %v3489 = vadd.f32 %v3361, %v3416
      %v3490 = vadd.f32 %v3362, %v3418
      %v3491 = vadd.f32 %v3363, %v3420
      %v3492 = vadd.f32 %v3364, %v3422
      %v3493 = vadd.f32 %v3365, %v3424
      %v3494 = vadd.f32 %v3366, %v3426
      %v3495 = vadd.f32 %v3367, %v3428
      %v3496 = vadd.f32 %v3368, %v3430
      %v3497 = vadd.f32 %v3369, %v3432
      %v3498 = vadd.f32 %v3370, %v3434
      %3499 = vrot.lane.b32.xlu0 %v3179, 125
      %v3500 = vpop.permute.xlu0 %3499
      %3501 = vrot.lane.b32.xlu0 %v3180, 125
      %v3502 = vpop.permute.xlu0 %3501
      %3503 = vrot.lane.b32.xlu0 %v3181, 125
      %v3504 = vpop.permute.xlu0 %3503
      %3505 = vrot.lane.b32.xlu0 %v3182, 125
      %v3506 = vpop.permute.xlu0 %3505
      %3507 = vrot.lane.b32.xlu0 %v3183, 125
      %v3508 = vpop.permute.xlu0 %3507
      %3509 = vrot.lane.b32.xlu0 %v3184, 125
      %v3510 = vpop.permute.xlu0 %3509
      %3511 = vrot.lane.b32.xlu0 %v3185, 125
      %v3512 = vpop.permute.xlu0 %3511
      %3513 = vrot.lane.b32.xlu0 %v3186, 125
      %v3514 = vpop.permute.xlu0 %3513
      %3515 = vrot.lane.b32.xlu0 %v3187, 125
      %v3516 = vpop.permute.xlu0 %3515
      %3517 = vrot.lane.b32.xlu0 %v3188, 125
      %v3518 = vpop.permute.xlu0 %3517
      %3519 = vrot.lane.b32.xlu0 %v3189, 125
      %v3520 = vpop.permute.xlu0 %3519
      %3521 = vrot.lane.b32.xlu0 %v3190, 125
      %v3522 = vpop.permute.xlu0 %3521
      %3523 = vrot.lane.b32.xlu0 %v3191, 125
      %v3524 = vpop.permute.xlu0 %3523
      %3525 = vrot.lane.b32.xlu0 %v3192, 125
      %v3526 = vpop.permute.xlu0 %3525
      %3527 = vrot.lane.b32.xlu0 %v3193, 125
      %v3528 = vpop.permute.xlu0 %3527
      %3529 = vrot.lane.b32.xlu0 %v3194, 125
      %v3530 = vpop.permute.xlu0 %3529
      %3531 = vrot.lane.b32.xlu0 %v3195, 125
      %v3532 = vpop.permute.xlu0 %3531
      %3533 = vrot.lane.b32.xlu0 %v3196, 125
      %v3534 = vpop.permute.xlu0 %3533
      %3535 = vrot.lane.b32.xlu0 %v3197, 125
      %v3536 = vpop.permute.xlu0 %3535
      %3537 = vrot.lane.b32.xlu0 %v3198, 125
      %v3538 = vpop.permute.xlu0 %3537
      %3539 = vrot.lane.b32.xlu0 %v3199, 125
      %v3540 = vpop.permute.xlu0 %3539
      %3541 = vrot.lane.b32.xlu0 %v3200, 125
      %v3542 = vpop.permute.xlu0 %3541
      %3543 = vrot.lane.b32.xlu0 %v3201, 125
      %v3544 = vpop.permute.xlu0 %3543
      %3545 = vrot.lane.b32.xlu0 %v3202, 125
      %v3546 = vpop.permute.xlu0 %3545
      %3547 = vrot.lane.b32.xlu0 %v3203, 125
      %v3548 = vpop.permute.xlu0 %3547
      %3549 = vrot.lane.b32.xlu0 %v3204, 125
      %v3550 = vpop.permute.xlu0 %3549
      %3551 = vrot.lane.b32.xlu0 %v3205, 125
      %v3552 = vpop.permute.xlu0 %3551
      %3553 = vrot.lane.b32.xlu0 %v3206, 125
      %v3554 = vpop.permute.xlu0 %3553
      %3555 = vrot.lane.b32.xlu0 %v3207, 125
      %v3556 = vpop.permute.xlu0 %3555
      %3557 = vrot.lane.b32.xlu0 %v3208, 125
      %v3558 = vpop.permute.xlu0 %3557
      %3559 = vrot.lane.b32.xlu0 %v3209, 125
      %v3560 = vpop.permute.xlu0 %3559
      %3561 = vrot.lane.b32.xlu0 %v3210, 125
      %v3562 = vpop.permute.xlu0 %3561
      %v3595 = vadd.f32 %v3467, %v3500
      %v3596 = vadd.f32 %v3468, %v3502
      %v3597 = vadd.f32 %v3469, %v3504
      %v3598 = vadd.f32 %v3470, %v3506
      %v3599 = vadd.f32 %v3471, %v3508
      %v3600 = vadd.f32 %v3472, %v3510
      %v3601 = vadd.f32 %v3473, %v3512
      %v3602 = vadd.f32 %v3474, %v3514
      %v3603 = vadd.f32 %v3475, %v3516
      %v3604 = vadd.f32 %v3476, %v3518
      %v3605 = vadd.f32 %v3477, %v3520
      %v3606 = vadd.f32 %v3478, %v3522
      %v3607 = vadd.f32 %v3479, %v3524
      %v3608 = vadd.f32 %v3480, %v3526
      %v3609 = vadd.f32 %v3481, %v3528
      %v3610 = vadd.f32 %v3482, %v3530
      %v3611 = vadd.f32 %v3483, %v3532
      %v3612 = vadd.f32 %v3484, %v3534
      %v3613 = vadd.f32 %v3485, %v3536
      %v3614 = vadd.f32 %v3486, %v3538
      %v3615 = vadd.f32 %v3487, %v3540
      %v3616 = vadd.f32 %v3488, %v3542
      %v3617 = vadd.f32 %v3489, %v3544
      %v3618 = vadd.f32 %v3490, %v3546
      %v3619 = vadd.f32 %v3491, %v3548
      %v3620 = vadd.f32 %v3492, %v3550
      %v3621 = vadd.f32 %v3493, %v3552
      %v3622 = vadd.f32 %v3494, %v3554
      %v3623 = vadd.f32 %v3495, %v3556
      %v3624 = vadd.f32 %v3496, %v3558
      %v3625 = vadd.f32 %v3497, %v3560
      %v3626 = vadd.f32 %v3498, %v3562
      %3627 = vrot.lane.b32.xlu0 %v3179, 124
      %v3628 = vpop.permute.xlu0 %3627
      %3629 = vrot.lane.b32.xlu0 %v3180, 124
      %v3630 = vpop.permute.xlu0 %3629
      %3631 = vrot.lane.b32.xlu0 %v3181, 124
      %v3632 = vpop.permute.xlu0 %3631
      %3633 = vrot.lane.b32.xlu0 %v3182, 124
      %v3634 = vpop.permute.xlu0 %3633
      %3635 = vrot.lane.b32.xlu0 %v3183, 124
      %v3636 = vpop.permute.xlu0 %3635
      %3637 = vrot.lane.b32.xlu0 %v3184, 124
      %v3638 = vpop.permute.xlu0 %3637
      %3639 = vrot.lane.b32.xlu0 %v3185, 124
      %v3640 = vpop.permute.xlu0 %3639
      %3641 = vrot.lane.b32.xlu0 %v3186, 124
      %v3642 = vpop.permute.xlu0 %3641
      %3643 = vrot.lane.b32.xlu0 %v3187, 124
      %v3644 = vpop.permute.xlu0 %3643
      %3645 = vrot.lane.b32.xlu0 %v3188, 124
      %v3646 = vpop.permute.xlu0 %3645
      %3647 = vrot.lane.b32.xlu0 %v3189, 124
      %v3648 = vpop.permute.xlu0 %3647
      %3649 = vrot.lane.b32.xlu0 %v3190, 124
      %v3650 = vpop.permute.xlu0 %3649
      %3651 = vrot.lane.b32.xlu0 %v3191, 124
      %v3652 = vpop.permute.xlu0 %3651
      %3653 = vrot.lane.b32.xlu0 %v3192, 124
      %v3654 = vpop.permute.xlu0 %3653
      %3655 = vrot.lane.b32.xlu0 %v3193, 124
      %v3656 = vpop.permute.xlu0 %3655
      %3657 = vrot.lane.b32.xlu0 %v3194, 124
      %v3658 = vpop.permute.xlu0 %3657
      %3659 = vrot.lane.b32.xlu0 %v3195, 124
      %v3660 = vpop.permute.xlu0 %3659
      %3661 = vrot.lane.b32.xlu0 %v3196, 124
      %v3662 = vpop.permute.xlu0 %3661
      %3663 = vrot.lane.b32.xlu0 %v3197, 124
      %v3664 = vpop.permute.xlu0 %3663
      %3665 = vrot.lane.b32.xlu0 %v3198, 124
      %v3666 = vpop.permute.xlu0 %3665
      %3667 = vrot.lane.b32.xlu0 %v3199, 124
      %v3668 = vpop.permute.xlu0 %3667
      %3669 = vrot.lane.b32.xlu0 %v3200, 124
      %v3670 = vpop.permute.xlu0 %3669
      %3671 = vrot.lane.b32.xlu0 %v3201, 124
      %v3672 = vpop.permute.xlu0 %3671
      %3673 = vrot.lane.b32.xlu0 %v3202, 124
      %v3674 = vpop.permute.xlu0 %3673
      %3675 = vrot.lane.b32.xlu0 %v3203, 124
      %v3676 = vpop.permute.xlu0 %3675
      %3677 = vrot.lane.b32.xlu0 %v3204, 124
      %v3678 = vpop.permute.xlu0 %3677
      %3679 = vrot.lane.b32.xlu0 %v3205, 124
      %v3680 = vpop.permute.xlu0 %3679
      %3681 = vrot.lane.b32.xlu0 %v3206, 124
      %v3682 = vpop.permute.xlu0 %3681
      %3683 = vrot.lane.b32.xlu0 %v3207, 124
      %v3684 = vpop.permute.xlu0 %3683
      %3685 = vrot.lane.b32.xlu0 %v3208, 124
      %v3686 = vpop.permute.xlu0 %3685
      %3687 = vrot.lane.b32.xlu0 %v3209, 124
      %v3688 = vpop.permute.xlu0 %3687
      %3689 = vrot.lane.b32.xlu0 %v3210, 124
      %v3690 = vpop.permute.xlu0 %3689
      %v3723 = vadd.f32 %v3595, %v3628
      %v3724 = vadd.f32 %v3596, %v3630
      %v3725 = vadd.f32 %v3597, %v3632
      %v3726 = vadd.f32 %v3598, %v3634
      %v3727 = vadd.f32 %v3599, %v3636
      %v3728 = vadd.f32 %v3600, %v3638
      %v3729 = vadd.f32 %v3601, %v3640
      %v3730 = vadd.f32 %v3602, %v3642
      %v3731 = vadd.f32 %v3603, %v3644
      %v3732 = vadd.f32 %v3604, %v3646
      %v3733 = vadd.f32 %v3605, %v3648
      %v3734 = vadd.f32 %v3606, %v3650
      %v3735 = vadd.f32 %v3607, %v3652
      %v3736 = vadd.f32 %v3608, %v3654
      %v3737 = vadd.f32 %v3609, %v3656
      %v3738 = vadd.f32 %v3610, %v3658
      %v3739 = vadd.f32 %v3611, %v3660
      %v3740 = vadd.f32 %v3612, %v3662
      %v3741 = vadd.f32 %v3613, %v3664
      %v3742 = vadd.f32 %v3614, %v3666
      %v3743 = vadd.f32 %v3615, %v3668
      %v3744 = vadd.f32 %v3616, %v3670
      %v3745 = vadd.f32 %v3617, %v3672
      %v3746 = vadd.f32 %v3618, %v3674
      %v3747 = vadd.f32 %v3619, %v3676
      %v3748 = vadd.f32 %v3620, %v3678
      %v3749 = vadd.f32 %v3621, %v3680
      %v3750 = vadd.f32 %v3622, %v3682
      %v3751 = vadd.f32 %v3623, %v3684
      %v3752 = vadd.f32 %v3624, %v3686
      %v3753 = vadd.f32 %v3625, %v3688
      %v3754 = vadd.f32 %v3626, %v3690
      %v3755 = vmul.f32 %v3723, 2e-05
      %v3756 = vmul.f32 %v3724, 2e-05
      %v3757 = vmul.f32 %v3725, 2e-05
      %v3758 = vmul.f32 %v3726, 2e-05
      %v3759 = vmul.f32 %v3727, 2e-05
      %v3760 = vmul.f32 %v3728, 2e-05
      %v3761 = vmul.f32 %v3729, 2e-05
      %v3762 = vmul.f32 %v3730, 2e-05
      %v3763 = vmul.f32 %v3731, 2e-05
      %v3764 = vmul.f32 %v3732, 2e-05
      %v3765 = vmul.f32 %v3733, 2e-05
      %v3766 = vmul.f32 %v3734, 2e-05
      %v3767 = vmul.f32 %v3735, 2e-05
      %v3768 = vmul.f32 %v3736, 2e-05
      %v3769 = vmul.f32 %v3737, 2e-05
      %v3770 = vmul.f32 %v3738, 2e-05
      %v3771 = vmul.f32 %v3739, 2e-05
      %v3772 = vmul.f32 %v3740, 2e-05
      %v3773 = vmul.f32 %v3741, 2e-05
      %v3774 = vmul.f32 %v3742, 2e-05
      %v3775 = vmul.f32 %v3743, 2e-05
      %v3776 = vmul.f32 %v3744, 2e-05
      %v3777 = vmul.f32 %v3745, 2e-05
      %v3778 = vmul.f32 %v3746, 2e-05
      %v3779 = vmul.f32 %v3747, 2e-05
      %v3780 = vmul.f32 %v3748, 2e-05
      %v3781 = vmul.f32 %v3749, 2e-05
      %v3782 = vmul.f32 %v3750, 2e-05
      %v3783 = vmul.f32 %v3751, 2e-05
      %v3784 = vmul.f32 %v3752, 2e-05
      %v3785 = vmul.f32 %v3753, 2e-05
      %v3786 = vmul.f32 %v3754, 2e-05
      %v3787 = vadd.f32 %v3755, 1.0
      %v3788 = vadd.f32 %v3756, 1.0
      %v3789 = vadd.f32 %v3757, 1.0
      %v3790 = vadd.f32 %v3758, 1.0
      %v3791 = vadd.f32 %v3759, 1.0
      %v3792 = vadd.f32 %v3760, 1.0
      %v3793 = vadd.f32 %v3761, 1.0
      %v3794 = vadd.f32 %v3762, 1.0
      %v3795 = vadd.f32 %v3763, 1.0
      %v3796 = vadd.f32 %v3764, 1.0
      %v3797 = vadd.f32 %v3765, 1.0
      %v3798 = vadd.f32 %v3766, 1.0
      %v3799 = vadd.f32 %v3767, 1.0
      %v3800 = vadd.f32 %v3768, 1.0
      %v3801 = vadd.f32 %v3769, 1.0
      %v3802 = vadd.f32 %v3770, 1.0
      %v3803 = vadd.f32 %v3771, 1.0
      %v3804 = vadd.f32 %v3772, 1.0
      %v3805 = vadd.f32 %v3773, 1.0
      %v3806 = vadd.f32 %v3774, 1.0
      %v3807 = vadd.f32 %v3775, 1.0
      %v3808 = vadd.f32 %v3776, 1.0
      %v3809 = vadd.f32 %v3777, 1.0
      %v3810 = vadd.f32 %v3778, 1.0
      %v3811 = vadd.f32 %v3779, 1.0
      %v3812 = vadd.f32 %v3780, 1.0
      %v3813 = vadd.f32 %v3781, 1.0
      %v3814 = vadd.f32 %v3782, 1.0
      %v3815 = vadd.f32 %v3783, 1.0
      %v3816 = vadd.f32 %v3784, 1.0
      %v3817 = vadd.f32 %v3785, 1.0
      %v3818 = vadd.f32 %v3786, 1.0
      %v3819 = vlog2.pop %v3787
      %v3820 = vmul.f32 %v3819, 0.6931472
      %v3821 = vlog2.pop %v3788
      %v3822 = vmul.f32 %v3821, 0.6931472
      %v3823 = vlog2.pop %v3789
      %v3824 = vmul.f32 %v3823, 0.6931472
      %v3825 = vlog2.pop %v3790
      %v3826 = vmul.f32 %v3825, 0.6931472
      %v3827 = vlog2.pop %v3791
      %v3828 = vmul.f32 %v3827, 0.6931472
      %v3829 = vlog2.pop %v3792
      %v3830 = vmul.f32 %v3829, 0.6931472
      %v3831 = vlog2.pop %v3793
      %v3832 = vmul.f32 %v3831, 0.6931472
      %v3833 = vlog2.pop %v3794
      %v3834 = vmul.f32 %v3833, 0.6931472
      %v3835 = vlog2.pop %v3795
      %v3836 = vmul.f32 %v3835, 0.6931472
      %v3837 = vlog2.pop %v3796
      %v3838 = vmul.f32 %v3837, 0.6931472
      %v3839 = vlog2.pop %v3797
      %v3840 = vmul.f32 %v3839, 0.6931472
      %v3841 = vlog2.pop %v3798
      %v3842 = vmul.f32 %v3841, 0.6931472
      %v3843 = vlog2.pop %v3799
      %v3844 = vmul.f32 %v3843, 0.6931472
      %v3845 = vlog2.pop %v3800
      %v3846 = vmul.f32 %v3845, 0.6931472
      %v3847 = vlog2.pop %v3801
      %v3848 = vmul.f32 %v3847, 0.6931472
      %v3849 = vlog2.pop %v3802
      %v3850 = vmul.f32 %v3849, 0.6931472
      %v3851 = vlog2.pop %v3803
      %v3852 = vmul.f32 %v3851, 0.6931472
      %v3853 = vlog2.pop %v3804
      %v3854 = vmul.f32 %v3853, 0.6931472
      %v3855 = vlog2.pop %v3805
      %v3856 = vmul.f32 %v3855, 0.6931472
      %v3857 = vlog2.pop %v3806
      %v3858 = vmul.f32 %v3857, 0.6931472
      %v3859 = vlog2.pop %v3807
      %v3860 = vmul.f32 %v3859, 0.6931472
      %v3861 = vlog2.pop %v3808
      %v3862 = vmul.f32 %v3861, 0.6931472
      %v3863 = vlog2.pop %v3809
      %v3864 = vmul.f32 %v3863, 0.6931472
      %v3865 = vlog2.pop %v3810
      %v3866 = vmul.f32 %v3865, 0.6931472
      %v3867 = vlog2.pop %v3811
      %v3868 = vmul.f32 %v3867, 0.6931472
      %v3869 = vlog2.pop %v3812
      %v3870 = vmul.f32 %v3869, 0.6931472
      %v3871 = vlog2.pop %v3813
      %v3872 = vmul.f32 %v3871, 0.6931472
      %v3873 = vlog2.pop %v3814
      %v3874 = vmul.f32 %v3873, 0.6931472
      %v3875 = vlog2.pop %v3815
      %v3876 = vmul.f32 %v3875, 0.6931472
      %v3877 = vlog2.pop %v3816
      %v3878 = vmul.f32 %v3877, 0.6931472
      %v3879 = vlog2.pop %v3817
      %v3880 = vmul.f32 %v3879, 0.6931472
      %v3881 = vlog2.pop %v3818
      %v3882 = vmul.f32 %v3881, 0.6931472
      %v3883 = vmul.f32 %v3820, 0.75
      %v3884 = vmul.f32 %v3822, 0.75
      %v3885 = vmul.f32 %v3824, 0.75
      %v3886 = vmul.f32 %v3826, 0.75
      %v3887 = vmul.f32 %v3828, 0.75
      %v3888 = vmul.f32 %v3830, 0.75
      %v3889 = vmul.f32 %v3832, 0.75
      %v3890 = vmul.f32 %v3834, 0.75
      %v3891 = vmul.f32 %v3836, 0.75
      %v3892 = vmul.f32 %v3838, 0.75
      %v3893 = vmul.f32 %v3840, 0.75
      %v3894 = vmul.f32 %v3842, 0.75
      %v3895 = vmul.f32 %v3844, 0.75
      %v3896 = vmul.f32 %v3846, 0.75
      %v3897 = vmul.f32 %v3848, 0.75
      %v3898 = vmul.f32 %v3850, 0.75
      %v3899 = vmul.f32 %v3852, 0.75
      %v3900 = vmul.f32 %v3854, 0.75
      %v3901 = vmul.f32 %v3856, 0.75
      %v3902 = vmul.f32 %v3858, 0.75
      %v3903 = vmul.f32 %v3860, 0.75
      %v3904 = vmul.f32 %v3862, 0.75
      %v3905 = vmul.f32 %v3864, 0.75
      %v3906 = vmul.f32 %v3866, 0.75
      %v3907 = vmul.f32 %v3868, 0.75
      %v3908 = vmul.f32 %v3870, 0.75
      %v3909 = vmul.f32 %v3872, 0.75
      %v3910 = vmul.f32 %v3874, 0.75
      %v3911 = vmul.f32 %v3876, 0.75
      %v3912 = vmul.f32 %v3878, 0.75
      %v3913 = vmul.f32 %v3880, 0.75
      %v3914 = vmul.f32 %v3882, 0.75
      %v3915 = vmul.f32 %v3883, 1.442695
      %v3916 = vpow.pop %v3915
      %v3917 = vmul.f32 %v3884, 1.442695
      %v3918 = vpow.pop %v3917
      %v3919 = vmul.f32 %v3885, 1.442695
      %v3920 = vpow.pop %v3919
      %v3921 = vmul.f32 %v3886, 1.442695
      %v3922 = vpow.pop %v3921
      %v3923 = vmul.f32 %v3887, 1.442695
      %v3924 = vpow.pop %v3923
      %v3925 = vmul.f32 %v3888, 1.442695
      %v3926 = vpow.pop %v3925
      %v3927 = vmul.f32 %v3889, 1.442695
      %v3928 = vpow.pop %v3927
      %v3929 = vmul.f32 %v3890, 1.442695
      %v3930 = vpow.pop %v3929
      %v3931 = vmul.f32 %v3891, 1.442695
      %v3932 = vpow.pop %v3931
      %v3933 = vmul.f32 %v3892, 1.442695
      %v3934 = vpow.pop %v3933
      %v3935 = vmul.f32 %v3893, 1.442695
      %v3936 = vpow.pop %v3935
      %v3937 = vmul.f32 %v3894, 1.442695
      %v3938 = vpow.pop %v3937
      %v3939 = vmul.f32 %v3895, 1.442695
      %v3940 = vpow.pop %v3939
      %v3941 = vmul.f32 %v3896, 1.442695
      %v3942 = vpow.pop %v3941
      %v3943 = vmul.f32 %v3897, 1.442695
      %v3944 = vpow.pop %v3943
      %v3945 = vmul.f32 %v3898, 1.442695
      %v3946 = vpow.pop %v3945
      %v3947 = vmul.f32 %v3899, 1.442695
      %v3948 = vpow.pop %v3947
      %v3949 = vmul.f32 %v3900, 1.442695
      %v3950 = vpow.pop %v3949
      %v3951 = vmul.f32 %v3901, 1.442695
      %v3952 = vpow.pop %v3951
      %v3953 = vmul.f32 %v3902, 1.442695
      %v3954 = vpow.pop %v3953
      %v3955 = vmul.f32 %v3903, 1.442695
      %v3956 = vpow.pop %v3955
      %v3957 = vmul.f32 %v3904, 1.442695
      %v3958 = vpow.pop %v3957
      %v3959 = vmul.f32 %v3905, 1.442695
      %v3960 = vpow.pop %v3959
      %v3961 = vmul.f32 %v3906, 1.442695
      %v3962 = vpow.pop %v3961
      %v3963 = vmul.f32 %v3907, 1.442695
      %v3964 = vpow.pop %v3963
      %v3965 = vmul.f32 %v3908, 1.442695
      %v3966 = vpow.pop %v3965
      %v3967 = vmul.f32 %v3909, 1.442695
      %v3968 = vpow.pop %v3967
      %v3969 = vmul.f32 %v3910, 1.442695
      %v3970 = vpow.pop %v3969
      %v3971 = vmul.f32 %v3911, 1.442695
      %v3972 = vpow.pop %v3971
      %v3973 = vmul.f32 %v3912, 1.442695
      %v3974 = vpow.pop %v3973
      %v3975 = vmul.f32 %v3913, 1.442695
      %v3976 = vpow.pop %v3975
      %v3977 = vmul.f32 %v3914, 1.442695
      %v3978 = vpow.pop %v3977
      %v3979 = vrcp.pop %v3916
      %v3980 = vrcp.pop %v3918
      %v3981 = vrcp.pop %v3920
      %v3982 = vrcp.pop %v3922
      %v3983 = vrcp.pop %v3924
      %v3984 = vrcp.pop %v3926
      %v3985 = vrcp.pop %v3928
      %v3986 = vrcp.pop %v3930
      %v3987 = vrcp.pop %v3932
      %v3988 = vrcp.pop %v3934
      %v3989 = vrcp.pop %v3936
      %v3990 = vrcp.pop %v3938
      %v3991 = vrcp.pop %v3940
      %v3992 = vrcp.pop %v3942
      %v3993 = vrcp.pop %v3944
      %v3994 = vrcp.pop %v3946
      %v3995 = vrcp.pop %v3948
      %v3996 = vrcp.pop %v3950
      %v3997 = vrcp.pop %v3952
      %v3998 = vrcp.pop %v3954
      %v3999 = vrcp.pop %v3956
      %v4000 = vrcp.pop %v3958
      %v4001 = vrcp.pop %v3960
      %v4002 = vrcp.pop %v3962
      %v4003 = vrcp.pop %v3964
      %v4004 = vrcp.pop %v3966
      %v4005 = vrcp.pop %v3968
      %v4006 = vrcp.pop %v3970
      %v4007 = vrcp.pop %v3972
      %v4008 = vrcp.pop %v3974
      %v4009 = vrcp.pop %v3976
      %v4010 = vrcp.pop %v3978
      %4043 = vrot.lane.b32.xlu0 %v3979, 2
      %v4044 = vpop.permute.xlu0 %4043
      %4045 = vrot.lane.b32.xlu0 %v3980, 2
      %v4046 = vpop.permute.xlu0 %4045
      %4047 = vrot.lane.b32.xlu0 %v3981, 2
      %v4048 = vpop.permute.xlu0 %4047
      %4049 = vrot.lane.b32.xlu0 %v3982, 2
      %v4050 = vpop.permute.xlu0 %4049
      %4051 = vrot.lane.b32.xlu0 %v3983, 2
      %v4052 = vpop.permute.xlu0 %4051
      %4053 = vrot.lane.b32.xlu0 %v3984, 2
      %v4054 = vpop.permute.xlu0 %4053
      %4055 = vrot.lane.b32.xlu0 %v3985, 2
      %v4056 = vpop.permute.xlu0 %4055
      %4057 = vrot.lane.b32.xlu0 %v3986, 2
      %v4058 = vpop.permute.xlu0 %4057
      %4059 = vrot.lane.b32.xlu0 %v3987, 2
      %v4060 = vpop.permute.xlu0 %4059
      %4061 = vrot.lane.b32.xlu0 %v3988, 2
      %v4062 = vpop.permute.xlu0 %4061
      %4063 = vrot.lane.b32.xlu0 %v3989, 2
      %v4064 = vpop.permute.xlu0 %4063
      %4065 = vrot.lane.b32.xlu0 %v3990, 2
      %v4066 = vpop.permute.xlu0 %4065
      %4067 = vrot.lane.b32.xlu0 %v3991, 2
      %v4068 = vpop.permute.xlu0 %4067
      %4069 = vrot.lane.b32.xlu0 %v3992, 2
      %v4070 = vpop.permute.xlu0 %4069
      %4071 = vrot.lane.b32.xlu0 %v3993, 2
      %v4072 = vpop.permute.xlu0 %4071
      %4073 = vrot.lane.b32.xlu0 %v3994, 2
      %v4074 = vpop.permute.xlu0 %4073
      %4075 = vrot.lane.b32.xlu0 %v3995, 2
      %v4076 = vpop.permute.xlu0 %4075
      %4077 = vrot.lane.b32.xlu0 %v3996, 2
      %v4078 = vpop.permute.xlu0 %4077
      %4079 = vrot.lane.b32.xlu0 %v3997, 2
      %v4080 = vpop.permute.xlu0 %4079
      %4081 = vrot.lane.b32.xlu0 %v3998, 2
      %v4082 = vpop.permute.xlu0 %4081
      %4083 = vrot.lane.b32.xlu0 %v3999, 2
      %v4084 = vpop.permute.xlu0 %4083
      %4085 = vrot.lane.b32.xlu0 %v4000, 2
      %v4086 = vpop.permute.xlu0 %4085
      %4087 = vrot.lane.b32.xlu0 %v4001, 2
      %v4088 = vpop.permute.xlu0 %4087
      %4089 = vrot.lane.b32.xlu0 %v4002, 2
      %v4090 = vpop.permute.xlu0 %4089
      %4091 = vrot.lane.b32.xlu0 %v4003, 2
      %v4092 = vpop.permute.xlu0 %4091
      %4093 = vrot.lane.b32.xlu0 %v4004, 2
      %v4094 = vpop.permute.xlu0 %4093
      %4095 = vrot.lane.b32.xlu0 %v4005, 2
      %v4096 = vpop.permute.xlu0 %4095
      %4097 = vrot.lane.b32.xlu0 %v4006, 2
      %v4098 = vpop.permute.xlu0 %4097
      %4099 = vrot.lane.b32.xlu0 %v4007, 2
      %v4100 = vpop.permute.xlu0 %4099
      %4101 = vrot.lane.b32.xlu0 %v4008, 2
      %v4102 = vpop.permute.xlu0 %4101
      %4103 = vrot.lane.b32.xlu0 %v4009, 2
      %v4104 = vpop.permute.xlu0 %4103
      %4105 = vrot.lane.b32.xlu0 %v4010, 2
      %v4106 = vpop.permute.xlu0 %4105
      %v4139 = vmul.f32 %v3147, %v4044
      %v4140 = vmul.f32 %v3148, %v4046
      %v4141 = vmul.f32 %v3149, %v4048
      %v4142 = vmul.f32 %v3150, %v4050
      %v4143 = vmul.f32 %v3151, %v4052
      %v4144 = vmul.f32 %v3152, %v4054
      %v4145 = vmul.f32 %v3153, %v4056
      %v4146 = vmul.f32 %v3154, %v4058
      %v4147 = vmul.f32 %v3155, %v4060
      %v4148 = vmul.f32 %v3156, %v4062
      %v4149 = vmul.f32 %v3157, %v4064
      %v4150 = vmul.f32 %v3158, %v4066
      %v4151 = vmul.f32 %v3159, %v4068
      %v4152 = vmul.f32 %v3160, %v4070
      %v4153 = vmul.f32 %v3161, %v4072
      %v4154 = vmul.f32 %v3162, %v4074
      %v4155 = vmul.f32 %v3163, %v4076
      %v4156 = vmul.f32 %v3164, %v4078
      %v4157 = vmul.f32 %v3165, %v4080
      %v4158 = vmul.f32 %v3166, %v4082
      %v4159 = vmul.f32 %v3167, %v4084
      %v4160 = vmul.f32 %v3168, %v4086
      %v4161 = vmul.f32 %v3169, %v4088
      %v4162 = vmul.f32 %v3170, %v4090
      %v4163 = vmul.f32 %v3171, %v4092
      %v4164 = vmul.f32 %v3172, %v4094
      %v4165 = vmul.f32 %v3173, %v4096
      %v4166 = vmul.f32 %v3174, %v4098
      %v4167 = vmul.f32 %v3175, %v4100
      %v4168 = vmul.f32 %v3176, %v4102
      %v4169 = vmul.f32 %v3177, %v4104
      %v4170 = vmul.f32 %v3178, %v4106
      %v4171 = vmax.f32 %v4139, 0.0
      %v4172 = vmax.f32 %v4140, 0.0
      %v4173 = vmax.f32 %v4141, 0.0
      %v4174 = vmax.f32 %v4142, 0.0
      %v4175 = vmax.f32 %v4143, 0.0
      %v4176 = vmax.f32 %v4144, 0.0
      %v4177 = vmax.f32 %v4145, 0.0
      %v4178 = vmax.f32 %v4146, 0.0
      %v4179 = vmax.f32 %v4147, 0.0
      %v4180 = vmax.f32 %v4148, 0.0
      %v4181 = vmax.f32 %v4149, 0.0
      %v4182 = vmax.f32 %v4150, 0.0
      %v4183 = vmax.f32 %v4151, 0.0
      %v4184 = vmax.f32 %v4152, 0.0
      %v4185 = vmax.f32 %v4153, 0.0
      %v4186 = vmax.f32 %v4154, 0.0
      %v4187 = vmax.f32 %v4155, 0.0
      %v4188 = vmax.f32 %v4156, 0.0
      %v4189 = vmax.f32 %v4157, 0.0
      %v4190 = vmax.f32 %v4158, 0.0
      %v4191 = vmax.f32 %v4159, 0.0
      %v4192 = vmax.f32 %v4160, 0.0
      %v4193 = vmax.f32 %v4161, 0.0
      %v4194 = vmax.f32 %v4162, 0.0
      %v4195 = vmax.f32 %v4163, 0.0
      %v4196 = vmax.f32 %v4164, 0.0
      %v4197 = vmax.f32 %v4165, 0.0
      %v4198 = vmax.f32 %v4166, 0.0
      %v4199 = vmax.f32 %v4167, 0.0
      %v4200 = vmax.f32 %v4168, 0.0
      %v4201 = vmax.f32 %v4169, 0.0
      %v4202 = vmax.f32 %v4170, 0.0
      %v4203 = vpack.c.bf16 %v4172, %v4171
      %v4204 = vpack.c.bf16 %v4174, %v4173
      %v4205 = vpack.c.bf16 %v4176, %v4175
      %v4206 = vpack.c.bf16 %v4178, %v4177
      %v4207 = vpack.c.bf16 %v4180, %v4179
      %v4208 = vpack.c.bf16 %v4182, %v4181
      %v4209 = vpack.c.bf16 %v4184, %v4183
      %v4210 = vpack.c.bf16 %v4186, %v4185
      %v4211 = vpack.c.bf16 %v4188, %v4187
      %v4212 = vpack.c.bf16 %v4190, %v4189
      %v4213 = vpack.c.bf16 %v4192, %v4191
      %v4214 = vpack.c.bf16 %v4194, %v4193
      %v4215 = vpack.c.bf16 %v4196, %v4195
      %v4216 = vpack.c.bf16 %v4198, %v4197
      %v4217 = vpack.c.bf16 %v4200, %v4199
      %v4218 = vpack.c.bf16 %v4202, %v4201
      %v4235 = vunpack.c.l.b16 %v4203
      %v4236 = vunpack.c.h.b16 %v4203
      %v4237 = vunpack.c.l.b16 %v4204
      %v4238 = vunpack.c.h.b16 %v4204
      %v4239 = vunpack.c.l.b16 %v4205
      %v4240 = vunpack.c.h.b16 %v4205
      %v4241 = vunpack.c.l.b16 %v4206
      %v4242 = vunpack.c.h.b16 %v4206
      %v4243 = vunpack.c.l.b16 %v4207
      %v4244 = vunpack.c.h.b16 %v4207
      %v4245 = vunpack.c.l.b16 %v4208
      %v4246 = vunpack.c.h.b16 %v4208
      %v4247 = vunpack.c.l.b16 %v4209
      %v4248 = vunpack.c.h.b16 %v4209
      %v4249 = vunpack.c.l.b16 %v4210
      %v4250 = vunpack.c.h.b16 %v4210
      %v4251 = vunpack.c.l.b16 %v4211
      %v4252 = vunpack.c.h.b16 %v4211
      %v4253 = vunpack.c.l.b16 %v4212
      %v4254 = vunpack.c.h.b16 %v4212
      %v4255 = vunpack.c.l.b16 %v4213
      %v4256 = vunpack.c.h.b16 %v4213
      %v4257 = vunpack.c.l.b16 %v4214
      %v4258 = vunpack.c.h.b16 %v4214
      %v4259 = vunpack.c.l.b16 %v4215
      %v4260 = vunpack.c.h.b16 %v4215
      %v4261 = vunpack.c.l.b16 %v4216
      %v4262 = vunpack.c.h.b16 %v4216
      %v4263 = vunpack.c.l.b16 %v4217
      %v4264 = vunpack.c.h.b16 %v4217
      %v4265 = vunpack.c.l.b16 %v4218
      %v4266 = vunpack.c.h.b16 %v4218
      %v4267 = vpack.c.b16 %v4235, %v4235
      %v4268 = vpack.c.b16 %v4236, %v4236
      %v4269 = vpack.c.b16 %v4237, %v4237
      %v4270 = vpack.c.b16 %v4238, %v4238
      %v4271 = vpack.c.b16 %v4239, %v4239
      %v4272 = vpack.c.b16 %v4240, %v4240
      %v4273 = vpack.c.b16 %v4241, %v4241
      %v4274 = vpack.c.b16 %v4242, %v4242
      %v4275 = vpack.c.b16 %v4243, %v4243
      %v4276 = vpack.c.b16 %v4244, %v4244
      %v4277 = vpack.c.b16 %v4245, %v4245
      %v4278 = vpack.c.b16 %v4246, %v4246
      %v4279 = vpack.c.b16 %v4247, %v4247
      %v4280 = vpack.c.b16 %v4248, %v4248
      %v4281 = vpack.c.b16 %v4249, %v4249
      %v4282 = vpack.c.b16 %v4250, %v4250
      %v4283 = vpack.c.b16 %v4251, %v4251
      %v4284 = vpack.c.b16 %v4252, %v4252
      %v4285 = vpack.c.b16 %v4253, %v4253
      %v4286 = vpack.c.b16 %v4254, %v4254
      %v4287 = vpack.c.b16 %v4255, %v4255
      %v4288 = vpack.c.b16 %v4256, %v4256
      %v4289 = vpack.c.b16 %v4257, %v4257
      %v4290 = vpack.c.b16 %v4258, %v4258
      %v4291 = vpack.c.b16 %v4259, %v4259
      %v4292 = vpack.c.b16 %v4260, %v4260
      %v4293 = vpack.c.b16 %v4261, %v4261
      %v4294 = vpack.c.b16 %v4262, %v4262
      %v4295 = vpack.c.b16 %v4263, %v4263
      %v4296 = vpack.c.b16 %v4264, %v4264
      %v4297 = vpack.c.b16 %v4265, %v4265
      %v4298 = vpack.c.b16 %v4266, %v4266
      %4299 = vrot.lane.b32.xlu0 %v4267, 126
      %v4300 = vpop.permute.xlu0 %4299
      %4301 = vrot.lane.b32.xlu0 %v4268, 126
      %v4302 = vpop.permute.xlu0 %4301
      %4303 = vrot.lane.b32.xlu0 %v4269, 126
      %v4304 = vpop.permute.xlu0 %4303
      %4305 = vrot.lane.b32.xlu0 %v4270, 126
      %v4306 = vpop.permute.xlu0 %4305
      %4307 = vrot.lane.b32.xlu0 %v4271, 126
      %v4308 = vpop.permute.xlu0 %4307
      %4309 = vrot.lane.b32.xlu0 %v4272, 126
      %v4310 = vpop.permute.xlu0 %4309
      %4311 = vrot.lane.b32.xlu0 %v4273, 126
      %v4312 = vpop.permute.xlu0 %4311
      %4313 = vrot.lane.b32.xlu0 %v4274, 126
      %v4314 = vpop.permute.xlu0 %4313
      %4315 = vrot.lane.b32.xlu0 %v4275, 126
      %v4316 = vpop.permute.xlu0 %4315
      %4317 = vrot.lane.b32.xlu0 %v4276, 126
      %v4318 = vpop.permute.xlu0 %4317
      %4319 = vrot.lane.b32.xlu0 %v4277, 126
      %v4320 = vpop.permute.xlu0 %4319
      %4321 = vrot.lane.b32.xlu0 %v4278, 126
      %v4322 = vpop.permute.xlu0 %4321
      %4323 = vrot.lane.b32.xlu0 %v4279, 126
      %v4324 = vpop.permute.xlu0 %4323
      %4325 = vrot.lane.b32.xlu0 %v4280, 126
      %v4326 = vpop.permute.xlu0 %4325
      %4327 = vrot.lane.b32.xlu0 %v4281, 126
      %v4328 = vpop.permute.xlu0 %4327
      %4329 = vrot.lane.b32.xlu0 %v4282, 126
      %v4330 = vpop.permute.xlu0 %4329
      %4331 = vrot.lane.b32.xlu0 %v4283, 126
      %v4332 = vpop.permute.xlu0 %4331
      %4333 = vrot.lane.b32.xlu0 %v4284, 126
      %v4334 = vpop.permute.xlu0 %4333
      %4335 = vrot.lane.b32.xlu0 %v4285, 126
      %v4336 = vpop.permute.xlu0 %4335
      %4337 = vrot.lane.b32.xlu0 %v4286, 126
      %v4338 = vpop.permute.xlu0 %4337
      %4339 = vrot.lane.b32.xlu0 %v4287, 126
      %v4340 = vpop.permute.xlu0 %4339
      %4341 = vrot.lane.b32.xlu0 %v4288, 126
      %v4342 = vpop.permute.xlu0 %4341
      %4343 = vrot.lane.b32.xlu0 %v4289, 126
      %v4344 = vpop.permute.xlu0 %4343
      %4345 = vrot.lane.b32.xlu0 %v4290, 126
      %v4346 = vpop.permute.xlu0 %4345
      %4347 = vrot.lane.b32.xlu0 %v4291, 126
      %v4348 = vpop.permute.xlu0 %4347
      %4349 = vrot.lane.b32.xlu0 %v4292, 126
      %v4350 = vpop.permute.xlu0 %4349
      %4351 = vrot.lane.b32.xlu0 %v4293, 126
      %v4352 = vpop.permute.xlu0 %4351
      %4353 = vrot.lane.b32.xlu0 %v4294, 126
      %v4354 = vpop.permute.xlu0 %4353
      %4355 = vrot.lane.b32.xlu0 %v4295, 126
      %v4356 = vpop.permute.xlu0 %4355
      %4357 = vrot.lane.b32.xlu0 %v4296, 126
      %v4358 = vpop.permute.xlu0 %4357
      %4359 = vrot.lane.b32.xlu0 %v4297, 126
      %v4360 = vpop.permute.xlu0 %4359
      %4361 = vrot.lane.b32.xlu0 %v4298, 126
      %v4362 = vpop.permute.xlu0 %4361
      %vm4395 = vcmask 257024
      %4396 = vst.msk [vmem:[%s228] sm:$0xf] %vm4395, %v4300
      %4397 = vst.msk [vmem:[%s228 + $0x4] sm:$0xf] %vm4395, %v4302
      %4398 = vst.msk [vmem:[%s228 + $0x8] sm:$0xf] %vm4395, %v4304
      %4399 = vst.msk [vmem:[%s228 + $0xc] sm:$0xf] %vm4395, %v4306
      %4400 = vst.msk [vmem:[%s228 + $0x10] sm:$0xf] %vm4395, %v4308
      %4401 = vst.msk [vmem:[%s228 + $0x14] sm:$0xf] %vm4395, %v4310
      %4402 = vst.msk [vmem:[%s228 + $0x18] sm:$0xf] %vm4395, %v4312
      %4403 = vst.msk [vmem:[%s228 + $0x1c] sm:$0xf] %vm4395, %v4314
      %4404 = vst.msk [vmem:[%s228 + $0x20] sm:$0xf] %vm4395, %v4316
      %4405 = vst.msk [vmem:[%s228 + $0x24] sm:$0xf] %vm4395, %v4318
      %4406 = vst.msk [vmem:[%s228 + $0x28] sm:$0xf] %vm4395, %v4320
      %4407 = vst.msk [vmem:[%s228 + $0x2c] sm:$0xf] %vm4395, %v4322
      %4408 = vst.msk [vmem:[%s228 + $0x30] sm:$0xf] %vm4395, %v4324
      %4409 = vst.msk [vmem:[%s228 + $0x34] sm:$0xf] %vm4395, %v4326
      %4410 = vst.msk [vmem:[%s228 + $0x38] sm:$0xf] %vm4395, %v4328
      %4411 = vst.msk [vmem:[%s228 + $0x3c] sm:$0xf] %vm4395, %v4330
      %4412 = vst.msk [vmem:[%s228 + $0x40] sm:$0xf] %vm4395, %v4332
      %4413 = vst.msk [vmem:[%s228 + $0x44] sm:$0xf] %vm4395, %v4334
      %4414 = vst.msk [vmem:[%s228 + $0x48] sm:$0xf] %vm4395, %v4336
      %4415 = vst.msk [vmem:[%s228 + $0x4c] sm:$0xf] %vm4395, %v4338
      %4416 = vst.msk [vmem:[%s228 + $0x50] sm:$0xf] %vm4395, %v4340
      %4417 = vst.msk [vmem:[%s228 + $0x54] sm:$0xf] %vm4395, %v4342
      %4418 = vst.msk [vmem:[%s228 + $0x58] sm:$0xf] %vm4395, %v4344
      %4419 = vst.msk [vmem:[%s228 + $0x5c] sm:$0xf] %vm4395, %v4346
      %4420 = vst.msk [vmem:[%s228 + $0x60] sm:$0xf] %vm4395, %v4348
      %4421 = vst.msk [vmem:[%s228 + $0x64] sm:$0xf] %vm4395, %v4350
      %4422 = vst.msk [vmem:[%s228 + $0x68] sm:$0xf] %vm4395, %v4352
      %4423 = vst.msk [vmem:[%s228 + $0x6c] sm:$0xf] %vm4395, %v4354
      %4424 = vst.msk [vmem:[%s228 + $0x70] sm:$0xf] %vm4395, %v4356
      %4425 = vst.msk [vmem:[%s228 + $0x74] sm:$0xf] %vm4395, %v4358
      %4426 = vst.msk [vmem:[%s228 + $0x78] sm:$0xf] %vm4395, %v4360
      %4427 = vst.msk [vmem:[%s228 + $0x7c] sm:$0xf] %vm4395, %v4362
      %s4428 = smul.u32 32, %s15
      %p4429 = scmp.lt.s32.totalorder %s4428, 3807
      %s4430 = scalar_select %p4429, %s4428, 3807
      %s4431 = smul.addr %s4430, 4
      %s4432 = scalar_lea.vmem %s4, %s4431
      // Predicated region
      $region37: #{conv2d_lrn.1} parent=35 // pred_check
        %p4433 = pneg %p129
      $region38: #{conv2d_lrn.1} parent=35 // pred_check_branch
        %4435 = sbr.rel (%p4433) target = $region40
      $region39: #{conv2d_lrn.1} parent=35 // pred_region
        %s4436 = smul.u32 32, %s15
      $region40: #{conv2d_lrn.1} parent=35 // pred_fallthru
        _
    $region36: #{conv2d_lrn.1} parent=5 // pred_fallthru
      _
    %p4437 = scmp.le.s32.totalorder 2, %s10
    // Predicated region
    $region41: #{conv2d_lrn.1} parent=5 // pred_check
      %p4438 = pneg %p4437
    $region42: #{conv2d_lrn.1} parent=5 // pred_check_branch
      %4440 = sbr.rel (%p4438) target = $region44
    $region43: #{conv2d_lrn.1} parent=5 // pred_region
      %s4441 = ssub.s32 %s10, 2
      // Predicated region
      $region45: #{conv2d_lrn.1} parent=43 // pred_check
        %p4442 = pneg %p135
      $region46: #{conv2d_lrn.1} parent=43 // pred_check_branch
        %4444 = sbr.rel (%p4442) target = $region48
      $region47: #{conv2d_lrn.1} parent=43 // pred_region
        %s4445 = smul.u32 32, %s16
        %p4446 = scmp.lt.s32.totalorder %s4445, 3807
        %s4447 = scalar_select %p4446, %s4445, 3807
        %s4448 = smul.addr %s4447, 4
        %s4449 = scalar_lea.vmem %s4, %s4448
      $region48: #{conv2d_lrn.1} parent=43 // pred_fallthru
        _
    $region44: #{conv2d_lrn.1} parent=5 // pred_fallthru
      _
  $region6: #{conv2d_lrn.1} parent=0 // loop_footer
    %s14 = sadd.s32 1, %s10
  $region7: #{conv2d_lrn.1} parent=0 // loop_footer_branch
    %9 = sbr.rel target = $region3
  $region8: #{conv2d_lrn.1} parent=0 // loop_exit
    _

</llo_original>
